<compile_context>
chip_gen: v6e
topology: v6e:2x2x1
jax: 0.10.0
libtpu: 0.0.40
codegen_flags: <defaults>
</compile_context>

<pallas_src>
import jax
import jax.numpy as jnp
import numpy as np
from jax.experimental import pallas as pl
from jax.experimental.pallas import tpu as pltpu

F_XYZ = 16                       # features from encoding_xyz
F_2D = 8                         # features from each 2D encoding
N_FREQ = 4                       # sinusoidal frequency bands
D_SINE = 3 * 2 * N_FREQ          # 24
D_ENC = F_XYZ + 3 * F_2D         # 40
D_IN = D_ENC + D_SINE            # 64 = MLP input width
HIDDEN = 64
D_OUT = 16
PACK = 8                         # points packed per row (lane-dense I/O)
TILE_N = 1024                    # points per grid step (sweep 512-4096)


def compose_kernel(xp_ref, wf_ref, f_ref, ph_ref, ws_ref, b1_ref, w2_ref, b2_ref,
                   out_ref):
    xp = xp_ref[...]                                   # (T, 3*PACK) f32

    # Fused sinusoidal embed: sin(x @ F + phase) == [sin(2^k x), cos(2^k x)]_k.
    # Kept in f32 (exact argument: one nonzero power-of-two weight per column).
    arg = jnp.dot(xp, f_ref[...], preferred_element_type=jnp.float32) + ph_ref[...]
    z = jnp.sin(arg)                                   # (T, 24*PACK) f32  (EUP)

    # Encodings folded into MLP layer 1; bf16 MXU operands, f32 accumulation.
    h = jnp.dot(xp.astype(jnp.bfloat16), wf_ref[...],
                preferred_element_type=jnp.float32)
    h += jnp.dot(z.astype(jnp.bfloat16), ws_ref[...],
                 preferred_element_type=jnp.float32)
    h += b1_ref[...]
    h = jnp.maximum(h, 0.0)                            # (T, HIDDEN*PACK)

    # MLP layer 2; output tile is fully lane-dense (T, 128).
    y = jnp.dot(h.astype(jnp.bfloat16), w2_ref[...],
                preferred_element_type=jnp.float32) + b2_ref[...]
    out_ref[...] = y.astype(out_ref.dtype)


def _precompute_packed_weights(params):
    """Fold the four encodings into MLP layer 1, fuse sin/cos into one sin pass,
    and expand everything to 8-way block-diagonal ("lane packed") weights.
    Runs on the host / at trace time -- no in-kernel concats or reshapes remain."""
    wxyz, wxy, wxz, wyz, w1, b1, w2, b2 = params

    # Dense (3 -> 40) matrix equivalent to [enc_xyz | enc_xy | enc_xz | enc_yz].
    w_enc = jnp.zeros((3, D_ENC), jnp.float32)
    w_enc = w_enc.at[:, 0:F_XYZ].set(wxyz)
    o = F_XYZ
    w_enc = w_enc.at[0, o:o + F_2D].set(wxy[0])
    w_enc = w_enc.at[1, o:o + F_2D].set(wxy[1])
    o += F_2D
    w_enc = w_enc.at[0, o:o + F_2D].set(wxz[0])
    w_enc = w_enc.at[2, o:o + F_2D].set(wxz[1])
    o += F_2D
    w_enc = w_enc.at[1, o:o + F_2D].set(wyz[0])
    w_enc = w_enc.at[2, o:o + F_2D].set(wyz[1])

    w_fused = w_enc @ w1[:D_ENC, :]                    # (3, 64)
    w1_sine = w1[D_ENC:, :]                            # (24, 64)

    # sin(x @ F + phase) reproduces the original [sin(2^k x), cos(2^k x)] column order.
    f_mat = np.zeros((3, D_SINE), np.float32)
    phase = np.zeros((1, D_SINE), np.float32)
    for k in range(N_FREQ):
        for c in range(3):
            f_mat[c, 6 * k + c] = 2.0 ** k
            f_mat[c, 6 * k + 3 + c] = 2.0 ** k
            phase[0, 6 * k + 3 + c] = np.pi / 2.0
    f_mat = jnp.asarray(f_mat)
    phase = jnp.asarray(phase)

    # 8-way block-diagonal expansion: 8 points per row -> lane-dense activations.
    eye = jnp.eye(PACK, dtype=jnp.float32)

    def bd(w):
        return jnp.kron(eye, w)

    wf_blk = bd(w_fused).astype(jnp.bfloat16)          # (24, 512)
    f_blk = bd(f_mat)                                  # (24, 192) f32
    ws_blk = bd(w1_sine).astype(jnp.bfloat16)          # (192, 512)
    w2_blk = bd(w2).astype(jnp.bfloat16)               # (512, 128)
    ph_blk = jnp.tile(phase, (1, PACK))                # (1, 192)
    b1_blk = jnp.tile(b1, (1, PACK))                   # (1, 512)
    b2_blk = jnp.tile(b2, (1, PACK))                   # (1, 128)
    return wf_blk, f_blk, ph_blk, ws_blk, b1_blk, w2_blk, b2_blk


def compose_3d_2d_embed(x, params, tile_n=TILE_N):
    """x: (N, 3) float32.  Returns (N, D_OUT) float32."""
    n = x.shape[0]
    assert n % PACK == 0
    rows = n // PACK                                   # packed rows in total
    tile_n = min(tile_n, n)
    # Keep >= 2 grid steps so the "parallel" axis can shard over v7x's 2 TensorCores,
    # while keeping the row tile a multiple of 8 (sublane aligned).
    if n // tile_n < 2 and n % (2 * PACK * 8) == 0:
        tile_n = n // 2
    assert n % tile_n == 0 and tile_n % PACK == 0
    tile_t = tile_n // PACK                            # packed rows per grid step
    grid = rows // tile_t

    weights = _precompute_packed_weights(params)
    xp = x.reshape(rows, 3 * PACK)                     # free row-major repack

    def fixed(arr):                                    # full block, same every step
        return pl.BlockSpec(arr.shape, lambda i: (0, 0))

    # Advisory cost hint for XLA's scheduler around the custom call.
    flops = 2 * rows * (24 * 512 + 24 * 192 + 192 * 512 + 512 * 128)
    bytes_acc = (xp.size * 4 + rows * D_OUT * PACK * 4
                 + sum(int(np.prod(w.shape)) * w.dtype.itemsize for w in weights))
    cost = pl.CostEstimate(flops=flops, transcendentals=rows * 24 * PACK,
                           bytes_accessed=bytes_acc)

    out_packed = pl.pallas_call(
        compose_kernel,
        out_shape=jax.ShapeDtypeStruct((rows, D_OUT * PACK), jnp.float32),
        grid=(grid,),
        in_specs=[pl.BlockSpec((tile_t, 3 * PACK), lambda i: (i, 0))]
                 + [fixed(w) for w in weights],
        out_specs=pl.BlockSpec((tile_t, D_OUT * PACK), lambda i: (i, 0)),
        compiler_params=pltpu.CompilerParams(
            dimension_semantics=("parallel",)),
        cost_estimate=cost,
    )(xp, *weights)
    return out_packed.reshape(n, D_OUT)                # free row-major unpack


def reference(x, params):
    """Pure-JAX reference with the original (unfused) semantics, for validation."""
    wxyz, wxy, wxz, wyz, w1, b1, w2, b2 = params
    xx, yy, zz = x[:, 0:1], x[:, 1:2], x[:, 2:3]
    out_xyz = x @ wxyz
    out_xy = jnp.concatenate([xx, yy], -1) @ wxy
    out_xz = jnp.concatenate([xx, zz], -1) @ wxz
    out_yz = jnp.concatenate([yy, zz], -1) @ wyz
    sine = []
    for k in range(N_FREQ):
        f = 2.0 ** k
        sine += [jnp.sin(f * x), jnp.cos(f * x)]
    out_i = jnp.concatenate([out_xyz, out_xy, out_xz, out_yz] + sine, -1)
    h = jnp.maximum(out_i @ w1 + b1, 0.0)
    return h @ w2 + b2


def init_params(key):
    ks = jax.random.split(key, 8)
    scale = 0.1
    wxyz = scale * jax.random.normal(ks[0], (3, F_XYZ), jnp.float32)
    wxy = scale * jax.random.normal(ks[1], (2, F_2D), jnp.float32)
    wxz = scale * jax.random.normal(ks[2], (2, F_2D), jnp.float32)
    wyz = scale * jax.random.normal(ks[3], (2, F_2D), jnp.float32)
    w1 = scale * jax.random.normal(ks[4], (D_IN, HIDDEN), jnp.float32)
    b1 = scale * jax.random.normal(ks[5], (1, HIDDEN), jnp.float32)
    w2 = scale * jax.random.normal(ks[6], (HIDDEN, D_OUT), jnp.float32)
    b2 = scale * jax.random.normal(ks[7], (1, D_OUT), jnp.float32)
    return (wxyz, wxy, wxz, wyz, w1, b1, w2, b2)


if __name__ == "__main__":
    key = jax.random.PRNGKey(0)
    k_x, k_p = jax.random.split(key)

    N = 2048                       # 3D points -> grid of 2 tiles of 1024 points
    x = jax.random.uniform(k_x, (N, 3), jnp.float32)
    params = init_params(k_p)

    out = jax.block_until_ready(compose_3d_2d_embed(x, params))
    ref = jax.block_until_ready(reference(x, params))

    # bf16 MXU operands + algebraic re-association change rounding order slightly;
    # tolerance relaxed accordingly (real bugs would be O(0.1+) off).
    np.testing.assert_allclose(np.asarray(out), np.asarray(ref),
                               rtol=2e-2, atol=3e-2)

    print("KERNEL_OK")
</pallas_src>

<mosaic_0001>
module attributes {stable_mosaic.version = 11 : i64} {
  func.func @compose_kernel(%arg0: i32, %arg1: memref<128x24xf32, #tpu.memory_space<vmem>>, %arg2: memref<24x512xbf16, #tpu.memory_space<vmem>>, %arg3: memref<24x192xf32, #tpu.memory_space<vmem>>, %arg4: memref<1x192xf32, #tpu.memory_space<vmem>>, %arg5: memref<192x512xbf16, #tpu.memory_space<vmem>>, %arg6: memref<1x512xf32, #tpu.memory_space<vmem>>, %arg7: memref<512x128xbf16, #tpu.memory_space<vmem>>, %arg8: memref<1x128xf32, #tpu.memory_space<vmem>>, %arg9: memref<128x128xf32, #tpu.memory_space<vmem>>) attributes {dimension_semantics = [#tpu.dimension_semantics<parallel>], iteration_bounds = array<i64: 2>, scalar_prefetch = 0 : i64, scratch_operands = 0 : i64, tpu.core_type = #tpu.core_type<tc>, window_params = [{transform_indices = @transform_0, window_bounds = array<i64: 128, 24>}, {pipeline_mode = #tpu.pipeline_mode<synchronous>, transform_indices = @transform_1, window_bounds = array<i64: 24, 512>}, {pipeline_mode = #tpu.pipeline_mode<synchronous>, transform_indices = @transform_2, window_bounds = array<i64: 24, 192>}, {pipeline_mode = #tpu.pipeline_mode<synchronous>, transform_indices = @transform_3, window_bounds = array<i64: 1, 192>}, {pipeline_mode = #tpu.pipeline_mode<synchronous>, transform_indices = @transform_4, window_bounds = array<i64: 192, 512>}, {pipeline_mode = #tpu.pipeline_mode<synchronous>, transform_indices = @transform_5, window_bounds = array<i64: 1, 512>}, {pipeline_mode = #tpu.pipeline_mode<synchronous>, transform_indices = @transform_6, window_bounds = array<i64: 512, 128>}, {pipeline_mode = #tpu.pipeline_mode<synchronous>, transform_indices = @transform_7, window_bounds = array<i64: 1, 128>}, {transform_indices = @transform_8, window_bounds = array<i64: 128, 128>}]} {
    %c0 = arith.constant 0 : index
    %c0_0 = arith.constant 0 : index
    %0 = vector.load %arg1[%c0, %c0_0] : memref<128x24xf32, #tpu.memory_space<vmem>>, vector<128x24xf32>
    %c0_1 = arith.constant 0 : index
    %c0_2 = arith.constant 0 : index
    %1 = vector.load %arg3[%c0_1, %c0_2] : memref<24x192xf32, #tpu.memory_space<vmem>>, vector<24x192xf32>
    %cst = arith.constant dense<0.000000e+00> : vector<128x192xf32>
    %2 = tpu.matmul %0, %1, %cst {dimension_numbers = #tpu.dot_dimension_numbers<[1], [0], [0], [1], [0, 0, 1, 1], [], []>} : vector<128x24xf32>, vector<24x192xf32>, vector<128x192xf32> -> vector<128x192xf32>
    %c0_3 = arith.constant 0 : index
    %c0_4 = arith.constant 0 : index
    %3 = vector.load %arg4[%c0_3, %c0_4] : memref<1x192xf32, #tpu.memory_space<vmem>>, vector<1x192xf32>
    %4 = vector.broadcast %3 : vector<1x192xf32> to vector<128x192xf32>
    %5 = arith.addf %2, %4 : vector<128x192xf32>
    %6 = math.sin %5 : vector<128x192xf32>
    %7 = arith.truncf %0 : vector<128x24xf32> to vector<128x24xbf16>
    %c0_5 = arith.constant 0 : index
    %c0_6 = arith.constant 0 : index
    %8 = vector.load %arg2[%c0_5, %c0_6] : memref<24x512xbf16, #tpu.memory_space<vmem>>, vector<24x512xbf16>
    %cst_7 = arith.constant dense<0.000000e+00> : vector<128x512xf32>
    %9 = tpu.matmul %7, %8, %cst_7 {dimension_numbers = #tpu.dot_dimension_numbers<[1], [0], [0], [1], [0, 0, 1, 1], [], []>} : vector<128x24xbf16>, vector<24x512xbf16>, vector<128x512xf32> -> vector<128x512xf32>
    %10 = arith.truncf %6 : vector<128x192xf32> to vector<128x192xbf16>
    %c0_8 = arith.constant 0 : index
    %c0_9 = arith.constant 0 : index
    %11 = vector.load %arg5[%c0_8, %c0_9] : memref<192x512xbf16, #tpu.memory_space<vmem>>, vector<192x512xbf16>
    %cst_10 = arith.constant dense<0.000000e+00> : vector<128x512xf32>
    %12 = tpu.matmul %10, %11, %cst_10 {dimension_numbers = #tpu.dot_dimension_numbers<[1], [0], [0], [1], [0, 0, 1, 1], [], []>} : vector<128x192xbf16>, vector<192x512xbf16>, vector<128x512xf32> -> vector<128x512xf32>
    %13 = arith.addf %9, %12 : vector<128x512xf32>
    %c0_11 = arith.constant 0 : index
    %c0_12 = arith.constant 0 : index
    %14 = vector.load %arg6[%c0_11, %c0_12] : memref<1x512xf32, #tpu.memory_space<vmem>>, vector<1x512xf32>
    %15 = vector.broadcast %14 : vector<1x512xf32> to vector<128x512xf32>
    %16 = arith.addf %13, %15 : vector<128x512xf32>
    %cst_13 = arith.constant 0.000000e+00 : f32
    %17 = vector.broadcast %cst_13 : f32 to vector<128x512xf32>
    %18 = arith.maximumf %16, %17 : vector<128x512xf32>
    %19 = arith.truncf %18 : vector<128x512xf32> to vector<128x512xbf16>
    %c0_14 = arith.constant 0 : index
    %c0_15 = arith.constant 0 : index
    %20 = vector.load %arg7[%c0_14, %c0_15] : memref<512x128xbf16, #tpu.memory_space<vmem>>, vector<512x128xbf16>
    %cst_16 = arith.constant dense<0.000000e+00> : vector<128x128xf32>
    %21 = tpu.matmul %19, %20, %cst_16 {dimension_numbers = #tpu.dot_dimension_numbers<[1], [0], [0], [1], [0, 0, 1, 1], [], []>} : vector<128x512xbf16>, vector<512x128xbf16>, vector<128x128xf32> -> vector<128x128xf32>
    %c0_17 = arith.constant 0 : index
    %c0_18 = arith.constant 0 : index
    %22 = vector.load %arg8[%c0_17, %c0_18] : memref<1x128xf32, #tpu.memory_space<vmem>>, vector<1x128xf32>
    %23 = vector.broadcast %22 : vector<1x128xf32> to vector<128x128xf32>
    %24 = arith.addf %21, %23 : vector<128x128xf32>
    %c0_19 = arith.constant 0 : index
    %c0_20 = arith.constant 0 : index
    %25 = vector.load %arg9[%c0_19, %c0_20] : memref<128x128xf32, #tpu.memory_space<vmem>>, vector<128x128xf32>
    tpu.vector_store %arg9[%c0_19, %c0_20], %24 {strides = array<i32>} : memref<128x128xf32, #tpu.memory_space<vmem>>, vector<128x128xf32>,
    return
  }
  func.func @transform_0(%arg0: i32) -> (i32, i32) {
    %c0_i32 = arith.constant 0 : i32
    %c0_i32_0 = arith.constant 0 : i32
    return %arg0, %c0_i32 : i32, i32
  }
  func.func @transform_1(%arg0: i32) -> (i32, i32) {
    %c0_i32 = arith.constant 0 : i32
    %c0_i32_0 = arith.constant 0 : i32
    %c0_i32_1 = arith.constant 0 : i32
    return %c0_i32, %c0_i32_0 : i32, i32
  }
  func.func @transform_2(%arg0: i32) -> (i32, i32) {
    %c0_i32 = arith.constant 0 : i32
    %c0_i32_0 = arith.constant 0 : i32
    %c0_i32_1 = arith.constant 0 : i32
    return %c0_i32, %c0_i32_0 : i32, i32
  }
  func.func @transform_3(%arg0: i32) -> (i32, i32) {
    %c0_i32 = arith.constant 0 : i32
    %c0_i32_0 = arith.constant 0 : i32
    %c0_i32_1 = arith.constant 0 : i32
    return %c0_i32, %c0_i32_0 : i32, i32
  }
  func.func @transform_4(%arg0: i32) -> (i32, i32) {
    %c0_i32 = arith.constant 0 : i32
    %c0_i32_0 = arith.constant 0 : i32
    %c0_i32_1 = arith.constant 0 : i32
    return %c0_i32, %c0_i32_0 : i32, i32
  }
  func.func @transform_5(%arg0: i32) -> (i32, i32) {
    %c0_i32 = arith.constant 0 : i32
    %c0_i32_0 = arith.constant 0 : i32
    %c0_i32_1 = arith.constant 0 : i32
    return %c0_i32, %c0_i32_0 : i32, i32
  }
  func.func @transform_6(%arg0: i32) -> (i32, i32) {
    %c0_i32 = arith.constant 0 : i32
    %c0_i32_0 = arith.constant 0 : i32
    %c0_i32_1 = arith.constant 0 : i32
    return %c0_i32, %c0_i32_0 : i32, i32
  }
  func.func @transform_7(%arg0: i32) -> (i32, i32) {
    %c0_i32 = arith.constant 0 : i32
    %c0_i32_0 = arith.constant 0 : i32
    %c0_i32_1 = arith.constant 0 : i32
    return %c0_i32, %c0_i32_0 : i32, i32
  }
  func.func @transform_8(%arg0: i32) -> (i32, i32) {
    %c0_i32 = arith.constant 0 : i32
    %c0_i32_0 = arith.constant 0 : i32
    return %arg0, %c0_i32 : i32, i32
  }
}

</mosaic_0001>

<llo_original>
// kernel: tpu_custom_call.1
$region0: #{tpu_custom_call.1}
  #allocation0 [shape = 'u32[]', space=smem, size = 0x4, offset = 0x4, fixed_abs, tag = 'smem constant byte address 0x4 - core index']
  #allocation1 [shape = 'u32[144,128]{1,0:T(1,128)}', space=vmem, size = 0x12000, scoped, tag = 'internal scratch']
  %s0 = inlined_call_operand.vmem [shape: f32[256,24], index: 0, kind: input, shape index: {}]
  %s1 = inlined_call_operand.vmem [shape: bf16[24,512], index: 1, kind: input, shape index: {}]
  %s2 = inlined_call_operand.hbm [shape: f32[24,192], index: 2, kind: input, shape index: {}]
  %s3 = inlined_call_operand.vmem [shape: f32[1,192], index: 3, kind: input, shape index: {}]
  %s4 = inlined_call_operand.hbm [shape: bf16[192,512], index: 4, kind: input, shape index: {}]
  %s5 = inlined_call_operand.vmem [shape: f32[1,512], index: 5, kind: input, shape index: {}]
  %s6 = inlined_call_operand.vmem [shape: bf16[512,128], index: 6, kind: input, shape index: {}]
  %s7 = inlined_call_operand.vmem [shape: f32[1,128], index: 7, kind: input, shape index: {}]
  %s8 = inlined_call_operand.hbm [shape: f32[256,128], index: 8, kind: output, shape index: {}]
  %s9 = sld [smem:[#allocation0]]
  $region73: #{tpu_custom_call.1} parent=0
    _
  %s11 = ssub.s32 1, %s9
  %s12 = scalar_select 0, %s11, %s9
  $region1: #{tpu_custom_call.1} parent=0
    #allocation2 [shape = 'u8[24576]{0}', space=vmem, size = 0x6000, scoped, tag = 'input window, operand 2, single buffered']
    #allocation3 [shape = 's32[2]{0}', space=sflag, size = 0x8, scoped, tag = 'scoped memory for tpu_custom_call.1']
    #allocation4 [shape = 's32[2]{0}', space=sflag, size = 0x8, scoped, tag = 'scoped memory for tpu_custom_call.1']
    #allocation5 [shape = 'u8[196608]{0}', space=vmem, size = 0x30000, scoped, tag = 'input window, operand 4, single buffered']
    #allocation6 [shape = 's32[1]{0}', space=sflag, size = 0x4, scoped, tag = 'scoped memory for tpu_custom_call.1']
    #allocation7 [shape = 'u8[131072]{0}', space=vmem, size = 0x20000, scoped, tag = 'output window, operand 0']
    %13 = vsyncpa [#allocation3], 0
    %14 = vsyncpa [#allocation6], 0
    %15 = vsyncpa [#allocation4], 0
    %s16 = scalar_lea.sflag [#allocation4], 1
    %17 = vsyncpa %s16, 0
    loop: start=0, step=1, limit=4
    $region2: #{tpu_custom_call.1} parent=1 // loop_pre_header
      _
    $region3: #{tpu_custom_call.1} parent=1 // loop_header
      %s19 = sphi 0, %s23
      %p20 = scmp.ge.s32.totalorder %s19, 4
      %s29 = sphi 0, %s31
      %s32 = sphi 0, %s29
      %s33 = sphi 0, %s32
      %s49 = sphi 0, %s33
      %s53 = sphi 0, %s53
      %s55 = sphi 0, %s53
      %s56 = sphi 0, %s55
      %s70 = sphi 0, %s56
      %s74 = sphi 0, %s74
      %s76 = sphi 0, %s74
      %s77 = sphi 0, %s76
      %s91 = sphi 0, %s77
      %s95 = sphi 0, %s95
      %s97 = sphi 0, %s95
      %s98 = sphi 0, %s97
      %s112 = sphi 0, %s98
      %s116 = sphi 0, %s116
      %s118 = sphi 0, %s116
      %s119 = sphi 0, %s118
      %s133 = sphi 0, %s119
      %s137 = sphi 0, %s137
      %s139 = sphi 0, %s137
      %s140 = sphi 0, %s139
      %s154 = sphi 0, %s140
      %s158 = sphi 0, %s158
      %s160 = sphi 0, %s158
      %s161 = sphi 0, %s160
      %s175 = sphi 0, %s161
      %s179 = sphi 0, %s179
      %s181 = sphi 0, %s179
      %s182 = sphi 0, %s181
      %s196 = sphi 0, %s182
      %s202 = sphi 0, %s204
      %s205 = sphi 0, %s202
      %s206 = sphi 0, %s205
      %s222 = sphi 0, %s206
    $region4: #{tpu_custom_call.1} parent=1 // loop_header_branch
      %22 = sbr.rel (%p20) target = $region8
    $region5: #{tpu_custom_call.1} parent=1 // loop_body
      %s24 = ssub.s32 %s19, 1
      %s25 = ssub.s32 %s19, 2
      %s26 = sadd.s32 %s19, 1
      %s27 = ssub.s32 %s19, %s26
      %p28 = scmp.eq.s32.totalorder %s27, 0
      %s30 = sadd.s32 %s29, 1
      %s31 = scalar_select %p28, %s29, %s30
      %p34 = pneg %p28
      %p35 = scmp.eq.s32.totalorder %s19, 1
      %p36 = por %p34, %p35
      %p37 = scmp.ne.s32.totalorder %s29, %s32
      %p38 = scmp.eq.s32.totalorder %s19, 0
      %p39 = por %p37, %p38
      %p40 = scmp.ne.s32.totalorder %s29, %s32
      %p41 = scmp.eq.s32.totalorder %s24, 1
      %p42 = por %p40, %p41
      %p43 = scmp.ne.s32.totalorder %s32, %s33
      %p44 = scmp.eq.s32.totalorder %s24, 0
      %p45 = por %p43, %p44
      %p46 = scmp.ne.s32.totalorder %s32, %s33
      %p47 = scmp.eq.s32.totalorder %s25, 1
      %p48 = por %p46, %p47
      %p50 = scmp.ne.s32.totalorder %s33, %s49
      %p51 = scmp.eq.s32.totalorder %s25, 0
      %p52 = por %p50, %p51
      %s54 = sadd.s32 %s53, 1
      %p57 = scmp.eq.s32.totalorder %s19, 1
      %p58 = scmp.ne.s32.totalorder %s53, %s55
      %p59 = scmp.eq.s32.totalorder %s19, 0
      %p60 = por %p58, %p59
      %p61 = scmp.ne.s32.totalorder %s53, %s55
      %p62 = scmp.eq.s32.totalorder %s24, 1
      %p63 = por %p61, %p62
      %p64 = scmp.ne.s32.totalorder %s55, %s56
      %p65 = scmp.eq.s32.totalorder %s24, 0
      %p66 = por %p64, %p65
      %p67 = scmp.ne.s32.totalorder %s55, %s56
      %p68 = scmp.eq.s32.totalorder %s25, 1
      %p69 = por %p67, %p68
      %p71 = scmp.ne.s32.totalorder %s56, %s70
      %p72 = scmp.eq.s32.totalorder %s25, 0
      %p73 = por %p71, %p72
      %s75 = sadd.s32 %s74, 1
      %p78 = scmp.eq.s32.totalorder %s19, 1
      %p79 = scmp.ne.s32.totalorder %s74, %s76
      %p80 = scmp.eq.s32.totalorder %s19, 0
      %p81 = por %p79, %p80
      %p82 = scmp.ne.s32.totalorder %s74, %s76
      %p83 = scmp.eq.s32.totalorder %s24, 1
      %p84 = por %p82, %p83
      %p85 = scmp.ne.s32.totalorder %s76, %s77
      %p86 = scmp.eq.s32.totalorder %s24, 0
      %p87 = por %p85, %p86
      %p88 = scmp.ne.s32.totalorder %s76, %s77
      %p89 = scmp.eq.s32.totalorder %s25, 1
      %p90 = por %p88, %p89
      %p92 = scmp.ne.s32.totalorder %s77, %s91
      %p93 = scmp.eq.s32.totalorder %s25, 0
      %p94 = por %p92, %p93
      %s96 = sadd.s32 %s95, 1
      %p99 = scmp.eq.s32.totalorder %s19, 1
      %p100 = scmp.ne.s32.totalorder %s95, %s97
      %p101 = scmp.eq.s32.totalorder %s19, 0
      %p102 = por %p100, %p101
      %p103 = scmp.ne.s32.totalorder %s95, %s97
      %p104 = scmp.eq.s32.totalorder %s24, 1
      %p105 = por %p103, %p104
      %p106 = scmp.ne.s32.totalorder %s97, %s98
      %p107 = scmp.eq.s32.totalorder %s24, 0
      %p108 = por %p106, %p107
      %p109 = scmp.ne.s32.totalorder %s97, %s98
      %p110 = scmp.eq.s32.totalorder %s25, 1
      %p111 = por %p109, %p110
      %p113 = scmp.ne.s32.totalorder %s98, %s112
      %p114 = scmp.eq.s32.totalorder %s25, 0
      %p115 = por %p113, %p114
      %s117 = sadd.s32 %s116, 1
      %p120 = scmp.eq.s32.totalorder %s19, 1
      %p121 = scmp.ne.s32.totalorder %s116, %s118
      %p122 = scmp.eq.s32.totalorder %s19, 0
      %p123 = por %p121, %p122
      %p124 = scmp.ne.s32.totalorder %s116, %s118
      %p125 = scmp.eq.s32.totalorder %s24, 1
      %p126 = por %p124, %p125
      %p127 = scmp.ne.s32.totalorder %s118, %s119
      %p128 = scmp.eq.s32.totalorder %s24, 0
      %p129 = por %p127, %p128
      %p130 = scmp.ne.s32.totalorder %s118, %s119
      %p131 = scmp.eq.s32.totalorder %s25, 1
      %p132 = por %p130, %p131
      %p134 = scmp.ne.s32.totalorder %s119, %s133
      %p135 = scmp.eq.s32.totalorder %s25, 0
      %p136 = por %p134, %p135
      %s138 = sadd.s32 %s137, 1
      %p141 = scmp.eq.s32.totalorder %s19, 1
      %p142 = scmp.ne.s32.totalorder %s137, %s139
      %p143 = scmp.eq.s32.totalorder %s19, 0
      %p144 = por %p142, %p143
      %p145 = scmp.ne.s32.totalorder %s137, %s139
      %p146 = scmp.eq.s32.totalorder %s24, 1
      %p147 = por %p145, %p146
      %p148 = scmp.ne.s32.totalorder %s139, %s140
      %p149 = scmp.eq.s32.totalorder %s24, 0
      %p150 = por %p148, %p149
      %p151 = scmp.ne.s32.totalorder %s139, %s140
      %p152 = scmp.eq.s32.totalorder %s25, 1
      %p153 = por %p151, %p152
      %p155 = scmp.ne.s32.totalorder %s140, %s154
      %p156 = scmp.eq.s32.totalorder %s25, 0
      %p157 = por %p155, %p156
      %s159 = sadd.s32 %s158, 1
      %p162 = scmp.eq.s32.totalorder %s19, 1
      %p163 = scmp.ne.s32.totalorder %s158, %s160
      %p164 = scmp.eq.s32.totalorder %s19, 0
      %p165 = por %p163, %p164
      %p166 = scmp.ne.s32.totalorder %s158, %s160
      %p167 = scmp.eq.s32.totalorder %s24, 1
      %p168 = por %p166, %p167
      %p169 = scmp.ne.s32.totalorder %s160, %s161
      %p170 = scmp.eq.s32.totalorder %s24, 0
      %p171 = por %p169, %p170
      %p172 = scmp.ne.s32.totalorder %s160, %s161
      %p173 = scmp.eq.s32.totalorder %s25, 1
      %p174 = por %p172, %p173
      %p176 = scmp.ne.s32.totalorder %s161, %s175
      %p177 = scmp.eq.s32.totalorder %s25, 0
      %p178 = por %p176, %p177
      %s180 = sadd.s32 %s179, 1
      %p183 = scmp.eq.s32.totalorder %s19, 1
      %p184 = scmp.ne.s32.totalorder %s179, %s181
      %p185 = scmp.eq.s32.totalorder %s19, 0
      %p186 = por %p184, %p185
      %p187 = scmp.ne.s32.totalorder %s179, %s181
      %p188 = scmp.eq.s32.totalorder %s24, 1
      %p189 = por %p187, %p188
      %p190 = scmp.ne.s32.totalorder %s181, %s182
      %p191 = scmp.eq.s32.totalorder %s24, 0
      %p192 = por %p190, %p191
      %p193 = scmp.ne.s32.totalorder %s181, %s182
      %p194 = scmp.eq.s32.totalorder %s25, 1
      %p195 = por %p193, %p194
      %p197 = scmp.ne.s32.totalorder %s182, %s196
      %p198 = scmp.eq.s32.totalorder %s25, 0
      %p199 = por %p197, %p198
      %s200 = ssub.s32 %s19, %s26
      %p201 = scmp.eq.s32.totalorder %s200, 0
      %s203 = sadd.s32 %s202, 1
      %s204 = scalar_select %p201, %s202, %s203
      %p207 = pneg %p201
      %p208 = scmp.eq.s32.totalorder %s19, 1
      %p209 = por %p207, %p208
      %p210 = scmp.ne.s32.totalorder %s202, %s205
      %p211 = scmp.eq.s32.totalorder %s19, 0
      %p212 = por %p210, %p211
      %p213 = scmp.ne.s32.totalorder %s202, %s205
      %p214 = scmp.eq.s32.totalorder %s24, 1
      %p215 = por %p213, %p214
      %p216 = scmp.ne.s32.totalorder %s205, %s206
      %p217 = scmp.eq.s32.totalorder %s24, 0
      %p218 = por %p216, %p217
      %p219 = scmp.ne.s32.totalorder %s205, %s206
      %p220 = scmp.eq.s32.totalorder %s25, 1
      %p221 = por %p219, %p220
      %p223 = scmp.ne.s32.totalorder %s206, %s222
      %p224 = scmp.eq.s32.totalorder %s25, 0
      %p225 = por %p223, %p224
      %p226 = scmp.le.s32.totalorder 1, %s19
      %p227 = scmp.lt.s32.totalorder %s19, 3
      %p228 = pnand %p226, %p227
      %p229 = pneg %p228
      // Predicated region
      $region9: #{tpu_custom_call.1} parent=5 // pred_check
        _
      $region10: #{tpu_custom_call.1} parent=5 // pred_check_branch
        %231 = sbr.rel (%p228) target = $region12
      $region11: #{tpu_custom_call.1} parent=5 // pred_region
        %s232 = ssub.s32 %s19, 1
        // Predicated region
        $region13: #{tpu_custom_call.1} parent=11 // pred_check
          %p233 = pneg %p66
        $region14: #{tpu_custom_call.1} parent=11 // pred_check_branch
          %235 = sbr.rel (%p233) target = $region16
        $region15: #{tpu_custom_call.1} parent=11 // pred_region
          _
        $region16: #{tpu_custom_call.1} parent=11 // pred_fallthru
          _
        // Predicated region
        $region17: #{tpu_custom_call.1} parent=11 // pred_check
          %p236 = pneg %p87
        $region18: #{tpu_custom_call.1} parent=11 // pred_check_branch
          %238 = sbr.rel (%p236) target = $region20
        $region19: #{tpu_custom_call.1} parent=11 // pred_region
          %s240 = ssub.s32 768, 768
          %241 = vsyncadd [#allocation3], %s240
          %s242 = sshll.u32 [#allocation2], 4
          %s243 = int_to_ptr.vmem [resolvable:$true] %s242
          %248 = dma.hbm_to_vmem [thread:$0]  %s2, 768, %s243, [#allocation3], 256, 256, 16
        $region20: #{tpu_custom_call.1} parent=11 // pred_fallthru
          _
        // Predicated region
        $region21: #{tpu_custom_call.1} parent=11 // pred_check
          %p249 = pneg %p108
        $region22: #{tpu_custom_call.1} parent=11 // pred_check_branch
          %251 = sbr.rel (%p249) target = $region24
        $region23: #{tpu_custom_call.1} parent=11 // pred_region
          _
        $region24: #{tpu_custom_call.1} parent=11 // pred_fallthru
          _
        // Predicated region
        $region25: #{tpu_custom_call.1} parent=11 // pred_check
          %p252 = pneg %p129
        $region26: #{tpu_custom_call.1} parent=11 // pred_check_branch
          %254 = sbr.rel (%p252) target = $region28
        $region27: #{tpu_custom_call.1} parent=11 // pred_region
          %s256 = ssub.s32 6144, 6144
          %257 = vsyncadd [#allocation6], %s256
          %s258 = sshll.u32 [#allocation5], 4
          %s259 = int_to_ptr.vmem [resolvable:$true] %s258
          %264 = dma.hbm_to_vmem [thread:$0]  %s4, 6144, %s259, [#allocation6], 256, 256, 16
        $region28: #{tpu_custom_call.1} parent=11 // pred_fallthru
          _
        // Predicated region
        $region29: #{tpu_custom_call.1} parent=11 // pred_check
          %p265 = pneg %p150
        $region30: #{tpu_custom_call.1} parent=11 // pred_check_branch
          %267 = sbr.rel (%p265) target = $region32
        $region31: #{tpu_custom_call.1} parent=11 // pred_region
          _
        $region32: #{tpu_custom_call.1} parent=11 // pred_fallthru
          _
        // Predicated region
        $region33: #{tpu_custom_call.1} parent=11 // pred_check
          %p268 = pneg %p171
        $region34: #{tpu_custom_call.1} parent=11 // pred_check_branch
          %270 = sbr.rel (%p268) target = $region36
        $region35: #{tpu_custom_call.1} parent=11 // pred_region
          _
        $region36: #{tpu_custom_call.1} parent=11 // pred_fallthru
          _
        // Predicated region
        $region37: #{tpu_custom_call.1} parent=11 // pred_check
          %p271 = pneg %p192
        $region38: #{tpu_custom_call.1} parent=11 // pred_check_branch
          %273 = sbr.rel (%p271) target = $region40
        $region39: #{tpu_custom_call.1} parent=11 // pred_region
          _
        $region40: #{tpu_custom_call.1} parent=11 // pred_fallthru
          _
      $region12: #{tpu_custom_call.1} parent=5 // pred_fallthru
        _
      %p274 = scmp.lt.s32.totalorder %s19, 2
      // Predicated region
      $region41: #{tpu_custom_call.1} parent=5 // pred_check
        %p275 = pneg %p274
      $region42: #{tpu_custom_call.1} parent=5 // pred_check_branch
        %277 = sbr.rel (%p275) target = $region44
      $region43: #{tpu_custom_call.1} parent=5 // pred_region
        // Predicated region
        $region45: #{tpu_custom_call.1} parent=43 // pred_check
          %p278 = pneg %p39
        $region46: #{tpu_custom_call.1} parent=43 // pred_check_branch
          %280 = sbr.rel (%p278) target = $region48
        $region47: #{tpu_custom_call.1} parent=43 // pred_region
          %s281 = smul.u32 16, %s19
          %p282 = scmp.lt.s32.totalorder %s281, 31
          %s283 = scalar_select %p282, %s281, 31
          %s284 = smul.addr %s283, 8
          %s285 = scalar_lea.vmem %s0, %s284
          %s286 = smul.u32 16, %s19
        $region48: #{tpu_custom_call.1} parent=43 // pred_fallthru
          _
      $region44: #{tpu_custom_call.1} parent=5 // pred_fallthru
        _
      %p287 = scmp.le.s32.totalorder 1, %s19
      %p288 = scmp.lt.s32.totalorder %s19, 3
      %p289 = pnand %p287, %p288
      %p290 = pneg %p289
      // Predicated region
      $region49: #{tpu_custom_call.1} parent=5 // pred_check
        _
      $region50: #{tpu_custom_call.1} parent=5 // pred_check_branch
        %292 = sbr.rel (%p289) target = $region52
      $region51: #{tpu_custom_call.1} parent=5 // pred_region
        %s293 = ssub.s32 %s19, 1
        // Predicated region
        $region53: #{tpu_custom_call.1} parent=51 // pred_check
          %p294 = pneg %p87
        $region54: #{tpu_custom_call.1} parent=51 // pred_check_branch
          %296 = sbr.rel (%p294) target = $region56
        $region55: #{tpu_custom_call.1} parent=51 // pred_region
          %297 = dma.done [#allocation3], 768
        $region56: #{tpu_custom_call.1} parent=51 // pred_fallthru
          _
        // Predicated region
        $region57: #{tpu_custom_call.1} parent=51 // pred_check
          %p298 = pneg %p129
        $region58: #{tpu_custom_call.1} parent=51 // pred_check_branch
          %300 = sbr.rel (%p298) target = $region60
        $region59: #{tpu_custom_call.1} parent=51 // pred_region
          %301 = dma.done [#allocation6], 6144
        $region60: #{tpu_custom_call.1} parent=51 // pred_fallthru
          _
        %s302 = smul.u32 16, %s24
        %p303 = scmp.lt.s32.totalorder %s302, 31
        %s304 = scalar_select %p303, %s302, 31
        %s305 = smul.addr %s304, 8
        %s306 = scalar_lea.vmem %s0, %s305
        %p307 = pneg %p45
        %p308 = pneg %p42
        %p309 = pneg %p66
        %p310 = pneg %p63
        %p311 = pneg %p87
        %p312 = pneg %p84
        %p313 = pneg %p108
        %p314 = pneg %p105
        %p315 = pneg %p129
        %p316 = pneg %p126
        %p317 = pneg %p150
        %p318 = pneg %p147
        %p319 = pneg %p171
        %p320 = pneg %p168
        %p321 = pneg %p192
        %p322 = pneg %p189
        %p323 = pneg %p218
        %p324 = pneg %p215
        %s325 = sand.u32 %s205, 1
        %s326 = scalar_lea.sflag [#allocation4], %s325
        %s327 = sand.u32 %s205, 1
        %s328 = smul.addr %s327, 128
        %s329 = scalar_lea.vmem [#allocation7], %s328
        %s330 = smul.u32 16, %s24
        %p331 = scmp.lt.s32.totalorder %s330, 31
        %s332 = scalar_select %p331, %s330, 31
        %s333 = smul.addr %s332, 8
        %s334 = scalar_lea.vmem %s0, %s333
        %s335 = smul.u32 16, %s24
        %s336 = smul.u32 16, %s24
        %v338 = vld [vmem:[%s334] sm:$0xff]
        %v339 = vld [vmem:[%s334 + $0x8] sm:$0xff]
        %v340 = vld [vmem:[%s334 + $0x10] sm:$0xff]
        %v341 = vld [vmem:[%s334 + $0x18] sm:$0xff]
        %v342 = vld [vmem:[%s334 + $0x20] sm:$0xff]
        %v343 = vld [vmem:[%s334 + $0x28] sm:$0xff]
        %v344 = vld [vmem:[%s334 + $0x30] sm:$0xff]
        %v345 = vld [vmem:[%s334 + $0x38] sm:$0xff]
        %v346 = vld [vmem:[%s334 + $0x40] sm:$0xff]
        %v347 = vld [vmem:[%s334 + $0x48] sm:$0xff]
        %v348 = vld [vmem:[%s334 + $0x50] sm:$0xff]
        %v349 = vld [vmem:[%s334 + $0x58] sm:$0xff]
        %v350 = vld [vmem:[%s334 + $0x60] sm:$0xff]
        %v351 = vld [vmem:[%s334 + $0x68] sm:$0xff]
        %v352 = vld [vmem:[%s334 + $0x70] sm:$0xff]
        %v353 = vld [vmem:[%s334 + $0x78] sm:$0xff]
        %v354 = vld [vmem:[#allocation2] sm:$0xff]
        %v355 = vld [vmem:[#allocation2 + $0x8] sm:$0xff]
        %v356 = vld [vmem:[#allocation2 + $0x10] sm:$0xff]
        %v357 = vld [vmem:[#allocation2 + $0x18] sm:$0xff]
        %v358 = vld [vmem:[#allocation2 + $0x20] sm:$0xff]
        %v359 = vld [vmem:[#allocation2 + $0x28] sm:$0xff]
        %v360 = vld [vmem:[%s3] sm:$0x3]
        %v362 = vlaneseq
        %v363 = vshrl.u32 %v362, 7
        %v364 = vsub.s32 0, %v363
        %v365 = vrot.slane %v360, %v364
        %v366 = vlaneseq
        %v367 = vshrl.u32 %v366, 7
        %v368 = vsub.s32 1, %v367
        %v369 = vrot.slane %v360, %v368
        %vm372 = vcmask 195584
        %v374 = vsel %vm372, %v338, 0
        %v377 = vsel %vm372, %v339, 0
        %v380 = vsel %vm372, %v340, 0
        %v383 = vsel %vm372, %v341, 0
        %v386 = vsel %vm372, %v342, 0
        %v389 = vsel %vm372, %v343, 0
        %v392 = vsel %vm372, %v344, 0
        %v395 = vsel %vm372, %v345, 0
        %v398 = vsel %vm372, %v346, 0
        %v401 = vsel %vm372, %v347, 0
        %v404 = vsel %vm372, %v348, 0
        %v407 = vsel %vm372, %v349, 0
        %v410 = vsel %vm372, %v350, 0
        %v413 = vsel %vm372, %v351, 0
        %v416 = vsel %vm372, %v352, 0
        %v419 = vsel %vm372, %v353, 0
        %421 = vmatprep.subr.mxu0 0.0
        %422 = vmatpush1.msra.mxu0 0.0
        %423 = vmatprep.subr.mxu0 0.0
        %424 = vmatpush1.msra.mxu0 0.0
        %425 = vmatprep.subr.mxu0 0.0
        %426 = vmatpush1.msra.mxu0 0.0
        %427 = vmatprep.subr.mxu0 0.0
        %428 = vmatpush1.msra.mxu0 0.0
        %429 = vmatprep.subr.mxu0 0.0
        %430 = vmatpush1.msra.mxu0 0.0
        %431 = vmatprep.subr.mxu0 0.0
        %432 = vmatpush1.msra.mxu0 0.0
        %433 = vmatprep.subr.mxu0 0.0
        %434 = vmatpush1.msra.mxu0 0.0
        %435 = vmatprep.subr.mxu0 0.0
        %436 = vmatpush1.msra.mxu0 0.0
        %437 = vmatprep.subr.mxu0 0.0
        %438 = vmatpush1.msra.mxu0 0.0
        %439 = vmatprep.subr.mxu0 0.0
        %440 = vmatpush1.msra.mxu0 0.0
        %441 = vmatprep.subr.mxu0 0.0
        %442 = vmatpush1.msra.mxu0 0.0
        %443 = vmatprep.subr.mxu0 0.0
        %444 = vmatpush1.msra.mxu0 0.0
        %445 = vmatprep.subr.mxu0 0.0
        %446 = vmatpush1.msra.mxu0 0.0
        %447 = vmatprep.subr.mxu0 %v359
        %448 = vmatpush1.msra.mxu0 %v358
        %449 = vmatprep.subr.mxu0 %v357
        %450 = vmatpush1.msra.mxu0 %v356
        %451 = vmatprep.subr.mxu0 %v355
        %452 = vmatpush1.msra.mxu0 %v354
        %453 = vmatprep.subr.mxu0 0.0
        %454 = vmatpush2.msra.mxu0 0.0
        %455 = vmatprep.subr.mxu0 0.0
        %456 = vmatpush2.msra.mxu0 0.0
        %457 = vmatprep.subr.mxu0 0.0
        %458 = vmatpush2.msra.mxu0 0.0
        %459 = vmatprep.subr.mxu0 0.0
        %460 = vmatpush2.msra.mxu0 0.0
        %461 = vmatprep.subr.mxu0 0.0
        %462 = vmatpush2.msra.mxu0 0.0
        %463 = vmatprep.subr.mxu0 0.0
        %464 = vmatpush2.msra.mxu0 0.0
        %465 = vmatprep.subr.mxu0 0.0
        %466 = vmatpush2.msra.mxu0 0.0
        %467 = vmatprep.subr.mxu0 0.0
        %468 = vmatpush2.msra.mxu0 0.0
        %469 = vmatprep.subr.mxu0 0.0
        %470 = vmatpush2.msra.mxu0 0.0
        %471 = vmatprep.subr.mxu0 0.0
        %472 = vmatpush2.msra.mxu0 0.0
        %473 = vmatprep.subr.mxu0 0.0
        %474 = vmatpush2.msra.mxu0 0.0
        %475 = vmatprep.subr.mxu0 0.0
        %476 = vmatpush2.msra.mxu0 0.0
        %477 = vmatprep.subr.mxu0 0.0
        %478 = vmatpush2.msra.mxu0 0.0
        %479 = vmatprep.subr.mxu0 0.0
        %480 = vmatpush2.msra.mxu0 0.0
        %481 = vmatprep.subr.mxu0 0.0
        %482 = vmatpush2.msra.mxu0 0.0
        %483 = vmatprep.subr.mxu0 0.0
        %484 = vmatpush2.msra.mxu0 0.0
        %485 = vmatprep.mubr.f32.mxu0 0.0
        %486 = vmatmul.mubr.f32.gmra.mxu0 %v374
        %v487 = vpop.f32.mrf.mxu0
        %v488 = vadd.f32 %v365, %v487
        %v489 = vpop.f32.mrf.mxu0
        %v490 = vadd.f32 %v369, %v489
        %491 = vmatprep.mubr.f32.mxu0 0.0
        %492 = vmatmul.mubr.f32.gmra.mxu0 %v377
        %v493 = vpop.f32.mrf.mxu0
        %v494 = vadd.f32 %v365, %v493
        %v495 = vpop.f32.mrf.mxu0
        %v496 = vadd.f32 %v369, %v495
        %497 = vmatprep.mubr.f32.mxu0 0.0
        %498 = vmatmul.mubr.f32.gmra.mxu0 %v380
        %v499 = vpop.f32.mrf.mxu0
        %v500 = vadd.f32 %v365, %v499
        %v501 = vpop.f32.mrf.mxu0
        %v502 = vadd.f32 %v369, %v501
        %503 = vmatprep.mubr.f32.mxu0 0.0
        %504 = vmatmul.mubr.f32.gmra.mxu0 %v383
        %v505 = vpop.f32.mrf.mxu0
        %v506 = vadd.f32 %v365, %v505
        %v507 = vpop.f32.mrf.mxu0
        %v508 = vadd.f32 %v369, %v507
        %509 = vmatprep.mubr.f32.mxu0 0.0
        %510 = vmatmul.mubr.f32.gmra.mxu0 %v386
        %v511 = vpop.f32.mrf.mxu0
        %v512 = vadd.f32 %v365, %v511
        %v513 = vpop.f32.mrf.mxu0
        %v514 = vadd.f32 %v369, %v513
        %515 = vmatprep.mubr.f32.mxu0 0.0
        %516 = vmatmul.mubr.f32.gmra.mxu0 %v389
        %v517 = vpop.f32.mrf.mxu0
        %v518 = vadd.f32 %v365, %v517
        %v519 = vpop.f32.mrf.mxu0
        %v520 = vadd.f32 %v369, %v519
        %521 = vmatprep.mubr.f32.mxu0 0.0
        %522 = vmatmul.mubr.f32.gmra.mxu0 %v392
        %v523 = vpop.f32.mrf.mxu0
        %v524 = vadd.f32 %v365, %v523
        %v525 = vpop.f32.mrf.mxu0
        %v526 = vadd.f32 %v369, %v525
        %527 = vmatprep.mubr.f32.mxu0 0.0
        %528 = vmatmul.mubr.f32.gmra.mxu0 %v395
        %v529 = vpop.f32.mrf.mxu0
        %v530 = vadd.f32 %v365, %v529
        %v531 = vpop.f32.mrf.mxu0
        %v532 = vadd.f32 %v369, %v531
        %533 = vmatprep.mubr.f32.mxu0 0.0
        %534 = vmatmul.mubr.f32.gmra.mxu0 %v398
        %v535 = vpop.f32.mrf.mxu0
        %v536 = vadd.f32 %v365, %v535
        %v537 = vpop.f32.mrf.mxu0
        %v538 = vadd.f32 %v369, %v537
        %539 = vmatprep.mubr.f32.mxu0 0.0
        %540 = vmatmul.mubr.f32.gmra.mxu0 %v401
        %v541 = vpop.f32.mrf.mxu0
        %v542 = vadd.f32 %v365, %v541
        %v543 = vpop.f32.mrf.mxu0
        %v544 = vadd.f32 %v369, %v543
        %545 = vmatprep.mubr.f32.mxu0 0.0
        %546 = vmatmul.mubr.f32.gmra.mxu0 %v404
        %v547 = vpop.f32.mrf.mxu0
        %v548 = vadd.f32 %v365, %v547
        %v549 = vpop.f32.mrf.mxu0
        %v550 = vadd.f32 %v369, %v549
        %551 = vmatprep.mubr.f32.mxu0 0.0
        %552 = vmatmul.mubr.f32.gmra.mxu0 %v407
        %v553 = vpop.f32.mrf.mxu0
        %v554 = vadd.f32 %v365, %v553
        %v555 = vpop.f32.mrf.mxu0
        %v556 = vadd.f32 %v369, %v555
        %557 = vmatprep.mubr.f32.mxu0 0.0
        %558 = vmatmul.mubr.f32.gmra.mxu0 %v410
        %v559 = vpop.f32.mrf.mxu0
        %v560 = vadd.f32 %v365, %v559
        %v561 = vpop.f32.mrf.mxu0
        %v562 = vadd.f32 %v369, %v561
        %563 = vmatprep.mubr.f32.mxu0 0.0
        %564 = vmatmul.mubr.f32.gmra.mxu0 %v413
        %v565 = vpop.f32.mrf.mxu0
        %v566 = vadd.f32 %v365, %v565
        %v567 = vpop.f32.mrf.mxu0
        %v568 = vadd.f32 %v369, %v567
        %569 = vmatprep.mubr.f32.mxu0 0.0
        %570 = vmatmul.mubr.f32.gmra.mxu0 %v416
        %v571 = vpop.f32.mrf.mxu0
        %v572 = vadd.f32 %v365, %v571
        %v573 = vpop.f32.mrf.mxu0
        %v574 = vadd.f32 %v369, %v573
        %575 = vmatprep.mubr.f32.mxu0 0.0
        %576 = vmatmul.mubr.f32.gmra.mxu0 %v419
        %v577 = vpop.f32.mrf.mxu0
        %v578 = vadd.f32 %v365, %v577
        %v579 = vpop.f32.mrf.mxu0
        %v580 = vadd.f32 %v369, %v579
        %581 = vdwg.mxu0
        %v582 = vand.u32 2147483647, %v488
        %vm583 = vcmp.le.f32.partialorder %v582, 0.7853982
        %vm584 = vcmp.lt.s32.totalorder %v488, 0
        %v585 = vand.u32 %v488, 2139095040
        %v586 = vshrl.u32 %v585, 23
        %v587 = vsub.s32 %v586, 127
        %v588 = vand.u32 2147483647, %v488
        %v589 = vand.u32 %v588, 8388607
        %v590 = vor.u32 %v589, 8388608
        %v591 = vsub.s32 0, %v590
        %v592 = vadd.s32 %v587, 1
        %vm593 = vcmp.gt.s32.totalorder %v592, 0
        %v594 = vsel %vm593, %v592, 0
        %v595 = vshrl.u32 %v594, 5
        %v596 = vand.u32 %v594, 31
        %v597 = vsub.s32 32, %v596
        %v598 = vshrl.u32 683565275, %v597
        %v599 = vshll.u32 683565275, %v596
        %v600 = vshrl.u32 2475754826, %v597
        %v601 = vor.u32 %v599, %v600
        %v602 = vshll.u32 2475754826, %v596
        %v603 = vshrl.u32 2131351028, %v597
        %v604 = vor.u32 %v602, %v603
        %v605 = vshll.u32 2131351028, %v596
        %v606 = vshrl.u32 2102212464, %v597
        %v607 = vor.u32 %v605, %v606
        %v608 = vshll.u32 2102212464, %v596
        %v609 = vshrl.u32 920167782, %v597
        %v610 = vor.u32 %v608, %v609
        %v611 = vshll.u32 920167782, %v596
        %v612 = vshrl.u32 1326507024, %v597
        %v613 = vor.u32 %v611, %v612
        %vm614 = vcmp.lt.s32.totalorder %v595, 1
        %vm615 = vcmp.lt.s32.totalorder %v595, 2
        %vm616 = vcmp.lt.s32.totalorder %v595, 3
        %vm617 = vcmp.lt.s32.totalorder %v595, 4
        %v618 = vsel %vm614, %v598, %v601
        %v619 = vsel %vm617, %v607, 2102212464
        %v620 = vsel %vm616, %v604, %v619
        %v621 = vsel %vm615, %v618, %v620
        %v622 = vsel %vm614, %v601, %v604
        %v623 = vsel %vm617, %v610, 920167782
        %v624 = vsel %vm616, %v607, %v623
        %v625 = vsel %vm615, %v622, %v624
        %v626 = vsel %vm614, %v604, %v607
        %v627 = vsel %vm617, %v613, 1326507024
        %v628 = vsel %vm616, %v610, %v627
        %v629 = vsel %vm615, %v626, %v628
        %v630 = vshll.u32 %v590, 8
        %v631 = vmul.u32.u64.compose %v630, %v629
        %v632 = vextract.low.u32 %v631
        %v633 = vextract.high.u32 %v631
        %v634 = vmul.u32.u64.compose %v630, %v625
        %v635 = vextract.low.u32 %v634
        %v636 = vextract.high.u32 %v634
        %v637 = vmul.u32 %v630, %v621
        %v638 = vadd.s32 %v633, %v635
        %vm639 = vc.u32 %v633, %v635
        %v640 = vadd.s32 %v636, 1
        %v641 = vsel %vm639, %v640, %v636
        %v642 = vadd.s32 %v637, %v641
        %v643 = vadd.s32 %v642, 536870912
        %v644 = vshrl.u32 %v643, 30
        %v645 = vshll.u32 %v644, 30
        %v646 = vsub.s32 %v642, %v645
        %vm647 = vcmp.lt.s32.totalorder %v646, 0
        %v648 = vsub.s32 0, %v646
        %v649 = vsel %vm647, %v648, %v646
        %v650 = vclz %v649
        %v651 = vsub.s32 %v650, 2
        %vm652 = vcmp.gt.s32.totalorder 0, %v651
        %v653 = vsel %vm652, 0, %v651
        %v654 = vsub.s32 32, %v653
        %v655 = vshll.u32 %v646, %v653
        %v656 = vshrl.u32 %v638, %v654
        %v657 = vor.u32 %v655, %v656
        %v658 = vsub.s32 4294967266, %v653
        %v659 = vadd.s32 %v658, 127
        %v660 = vshll.u32 %v659, 23
        %v661 = vor.u32 4788187, %v660
        %v662 = vand.u32 2147483647, %v661
        %v664 = vcvt.s32.f32 %v657
        %v665 = vmul.f32 %v664, %v662
        %v666 = vxor.u32 %v665, 2147483648
        %v667 = vsel %vm584, %v666, %v665
        %v668 = vsub.s32 4, %v644
        %v669 = vsel %vm584, %v668, %v644
        %v670 = vsel %vm583, %v488, %v667
        %v671 = vsel %vm583, 0, %v669
        %v672 = vcosq.f32.pop %v670
        %v673 = vsinq.f32.pop %v670
        %vm674 = vweird.f32 %v488
        %v675 = vadd.s32 %v671, 3
        %v676 = vand.u32 %v675, 3
        %vm677 = vcmp.lt.s32.totalorder %v676, 2
        %vm678 = vcmp.eq.s32.totalorder %v676, 0
        %v679 = vxor.u32 %v673, 2147483648
        %v680 = vsel %vm678, %v672, %v679
        %vm681 = vcmp.eq.s32.totalorder %v676, 2
        %v682 = vxor.u32 %v672, 2147483648
        %v683 = vsel %vm681, %v682, %v673
        %v684 = vsel %vm677, %v680, %v683
        %v685 = vsel %vm674, nan, %v684
        %v686 = vand.u32 2147483647, %v490
        %vm687 = vcmp.le.f32.partialorder %v686, 0.7853982
        %vm688 = vcmp.lt.s32.totalorder %v490, 0
        %v689 = vand.u32 %v490, 2139095040
        %v690 = vshrl.u32 %v689, 23
        %v691 = vsub.s32 %v690, 127
        %v692 = vand.u32 2147483647, %v490
        %v693 = vand.u32 %v692, 8388607
        %v694 = vor.u32 %v693, 8388608
        %v695 = vsub.s32 0, %v694
        %v696 = vadd.s32 %v691, 1
        %vm697 = vcmp.gt.s32.totalorder %v696, 0
        %v698 = vsel %vm697, %v696, 0
        %v699 = vshrl.u32 %v698, 5
        %v700 = vand.u32 %v698, 31
        %v701 = vsub.s32 32, %v700
        %v702 = vshrl.u32 683565275, %v701
        %v703 = vshll.u32 683565275, %v700
        %v704 = vshrl.u32 2475754826, %v701
        %v705 = vor.u32 %v703, %v704
        %v706 = vshll.u32 2475754826, %v700
        %v707 = vshrl.u32 2131351028, %v701
        %v708 = vor.u32 %v706, %v707
        %v709 = vshll.u32 2131351028, %v700
        %v710 = vshrl.u32 2102212464, %v701
        %v711 = vor.u32 %v709, %v710
        %v712 = vshll.u32 2102212464, %v700
        %v713 = vshrl.u32 920167782, %v701
        %v714 = vor.u32 %v712, %v713
        %v715 = vshll.u32 920167782, %v700
        %v716 = vshrl.u32 1326507024, %v701
        %v717 = vor.u32 %v715, %v716
        %vm718 = vcmp.lt.s32.totalorder %v699, 1
        %vm719 = vcmp.lt.s32.totalorder %v699, 2
        %vm720 = vcmp.lt.s32.totalorder %v699, 3
        %vm721 = vcmp.lt.s32.totalorder %v699, 4
        %v722 = vsel %vm718, %v702, %v705
        %v723 = vsel %vm721, %v711, 2102212464
        %v724 = vsel %vm720, %v708, %v723
        %v725 = vsel %vm719, %v722, %v724
        %v726 = vsel %vm718, %v705, %v708
        %v727 = vsel %vm721, %v714, 920167782
        %v728 = vsel %vm720, %v711, %v727
        %v729 = vsel %vm719, %v726, %v728
        %v730 = vsel %vm718, %v708, %v711
        %v731 = vsel %vm721, %v717, 1326507024
        %v732 = vsel %vm720, %v714, %v731
        %v733 = vsel %vm719, %v730, %v732
        %v734 = vshll.u32 %v694, 8
        %v735 = vmul.u32.u64.compose %v734, %v733
        %v736 = vextract.low.u32 %v735
        %v737 = vextract.high.u32 %v735
        %v738 = vmul.u32.u64.compose %v734, %v729
        %v739 = vextract.low.u32 %v738
        %v740 = vextract.high.u32 %v738
        %v741 = vmul.u32 %v734, %v725
        %v742 = vadd.s32 %v737, %v739
        %vm743 = vc.u32 %v737, %v739
        %v744 = vadd.s32 %v740, 1
        %v745 = vsel %vm743, %v744, %v740
        %v746 = vadd.s32 %v741, %v745
        %v747 = vadd.s32 %v746, 536870912
        %v748 = vshrl.u32 %v747, 30
        %v749 = vshll.u32 %v748, 30
        %v750 = vsub.s32 %v746, %v749
        %vm751 = vcmp.lt.s32.totalorder %v750, 0
        %v752 = vsub.s32 0, %v750
        %v753 = vsel %vm751, %v752, %v750
        %v754 = vclz %v753
        %v755 = vsub.s32 %v754, 2
        %vm756 = vcmp.gt.s32.totalorder 0, %v755
        %v757 = vsel %vm756, 0, %v755
        %v758 = vsub.s32 32, %v757
        %v759 = vshll.u32 %v750, %v757
        %v760 = vshrl.u32 %v742, %v758
        %v761 = vor.u32 %v759, %v760
        %v762 = vsub.s32 4294967266, %v757
        %v763 = vadd.s32 %v762, 127
        %v764 = vshll.u32 %v763, 23
        %v765 = vor.u32 4788187, %v764
        %v766 = vand.u32 2147483647, %v765
        %v768 = vcvt.s32.f32 %v761
        %v769 = vmul.f32 %v768, %v766
        %v770 = vxor.u32 %v769, 2147483648
        %v771 = vsel %vm688, %v770, %v769
        %v772 = vsub.s32 4, %v748
        %v773 = vsel %vm688, %v772, %v748
        %v774 = vsel %vm687, %v490, %v771
        %v775 = vsel %vm687, 0, %v773
        %v776 = vcosq.f32.pop %v774
        %v777 = vsinq.f32.pop %v774
        %vm778 = vweird.f32 %v490
        %v779 = vadd.s32 %v775, 3
        %v780 = vand.u32 %v779, 3
        %vm781 = vcmp.lt.s32.totalorder %v780, 2
        %vm782 = vcmp.eq.s32.totalorder %v780, 0
        %v783 = vxor.u32 %v777, 2147483648
        %v784 = vsel %vm782, %v776, %v783
        %vm785 = vcmp.eq.s32.totalorder %v780, 2
        %v786 = vxor.u32 %v776, 2147483648
        %v787 = vsel %vm785, %v786, %v777
        %v788 = vsel %vm781, %v784, %v787
        %v789 = vsel %vm778, nan, %v788
        %v790 = vand.u32 2147483647, %v494
        %vm791 = vcmp.le.f32.partialorder %v790, 0.7853982
        %vm792 = vcmp.lt.s32.totalorder %v494, 0
        %v793 = vand.u32 %v494, 2139095040
        %v794 = vshrl.u32 %v793, 23
        %v795 = vsub.s32 %v794, 127
        %v796 = vand.u32 2147483647, %v494
        %v797 = vand.u32 %v796, 8388607
        %v798 = vor.u32 %v797, 8388608
        %v799 = vsub.s32 0, %v798
        %v800 = vadd.s32 %v795, 1
        %vm801 = vcmp.gt.s32.totalorder %v800, 0
        %v802 = vsel %vm801, %v800, 0
        %v803 = vshrl.u32 %v802, 5
        %v804 = vand.u32 %v802, 31
        %v805 = vsub.s32 32, %v804
        %v806 = vshrl.u32 683565275, %v805
        %v807 = vshll.u32 683565275, %v804
        %v808 = vshrl.u32 2475754826, %v805
        %v809 = vor.u32 %v807, %v808
        %v810 = vshll.u32 2475754826, %v804
        %v811 = vshrl.u32 2131351028, %v805
        %v812 = vor.u32 %v810, %v811
        %v813 = vshll.u32 2131351028, %v804
        %v814 = vshrl.u32 2102212464, %v805
        %v815 = vor.u32 %v813, %v814
        %v816 = vshll.u32 2102212464, %v804
        %v817 = vshrl.u32 920167782, %v805
        %v818 = vor.u32 %v816, %v817
        %v819 = vshll.u32 920167782, %v804
        %v820 = vshrl.u32 1326507024, %v805
        %v821 = vor.u32 %v819, %v820
        %vm822 = vcmp.lt.s32.totalorder %v803, 1
        %vm823 = vcmp.lt.s32.totalorder %v803, 2
        %vm824 = vcmp.lt.s32.totalorder %v803, 3
        %vm825 = vcmp.lt.s32.totalorder %v803, 4
        %v826 = vsel %vm822, %v806, %v809
        %v827 = vsel %vm825, %v815, 2102212464
        %v828 = vsel %vm824, %v812, %v827
        %v829 = vsel %vm823, %v826, %v828
        %v830 = vsel %vm822, %v809, %v812
        %v831 = vsel %vm825, %v818, 920167782
        %v832 = vsel %vm824, %v815, %v831
        %v833 = vsel %vm823, %v830, %v832
        %v834 = vsel %vm822, %v812, %v815
        %v835 = vsel %vm825, %v821, 1326507024
        %v836 = vsel %vm824, %v818, %v835
        %v837 = vsel %vm823, %v834, %v836
        %v838 = vshll.u32 %v798, 8
        %v839 = vmul.u32.u64.compose %v838, %v837
        %v840 = vextract.low.u32 %v839
        %v841 = vextract.high.u32 %v839
        %v842 = vmul.u32.u64.compose %v838, %v833
        %v843 = vextract.low.u32 %v842
        %v844 = vextract.high.u32 %v842
        %v845 = vmul.u32 %v838, %v829
        %v846 = vadd.s32 %v841, %v843
        %vm847 = vc.u32 %v841, %v843
        %v848 = vadd.s32 %v844, 1
        %v849 = vsel %vm847, %v848, %v844
        %v850 = vadd.s32 %v845, %v849
        %v851 = vadd.s32 %v850, 536870912
        %v852 = vshrl.u32 %v851, 30
        %v853 = vshll.u32 %v852, 30
        %v854 = vsub.s32 %v850, %v853
        %vm855 = vcmp.lt.s32.totalorder %v854, 0
        %v856 = vsub.s32 0, %v854
        %v857 = vsel %vm855, %v856, %v854
        %v858 = vclz %v857
        %v859 = vsub.s32 %v858, 2
        %vm860 = vcmp.gt.s32.totalorder 0, %v859
        %v861 = vsel %vm860, 0, %v859
        %v862 = vsub.s32 32, %v861
        %v863 = vshll.u32 %v854, %v861
        %v864 = vshrl.u32 %v846, %v862
        %v865 = vor.u32 %v863, %v864
        %v866 = vsub.s32 4294967266, %v861
        %v867 = vadd.s32 %v866, 127
        %v868 = vshll.u32 %v867, 23
        %v869 = vor.u32 4788187, %v868
        %v870 = vand.u32 2147483647, %v869
        %v872 = vcvt.s32.f32 %v865
        %v873 = vmul.f32 %v872, %v870
        %v874 = vxor.u32 %v873, 2147483648
        %v875 = vsel %vm792, %v874, %v873
        %v876 = vsub.s32 4, %v852
        %v877 = vsel %vm792, %v876, %v852
        %v878 = vsel %vm791, %v494, %v875
        %v879 = vsel %vm791, 0, %v877
        %v880 = vcosq.f32.pop %v878
        %v881 = vsinq.f32.pop %v878
        %vm882 = vweird.f32 %v494
        %v883 = vadd.s32 %v879, 3
        %v884 = vand.u32 %v883, 3
        %vm885 = vcmp.lt.s32.totalorder %v884, 2
        %vm886 = vcmp.eq.s32.totalorder %v884, 0
        %v887 = vxor.u32 %v881, 2147483648
        %v888 = vsel %vm886, %v880, %v887
        %vm889 = vcmp.eq.s32.totalorder %v884, 2
        %v890 = vxor.u32 %v880, 2147483648
        %v891 = vsel %vm889, %v890, %v881
        %v892 = vsel %vm885, %v888, %v891
        %v893 = vsel %vm882, nan, %v892
        %v894 = vand.u32 2147483647, %v496
        %vm895 = vcmp.le.f32.partialorder %v894, 0.7853982
        %vm896 = vcmp.lt.s32.totalorder %v496, 0
        %v897 = vand.u32 %v496, 2139095040
        %v898 = vshrl.u32 %v897, 23
        %v899 = vsub.s32 %v898, 127
        %v900 = vand.u32 2147483647, %v496
        %v901 = vand.u32 %v900, 8388607
        %v902 = vor.u32 %v901, 8388608
        %v903 = vsub.s32 0, %v902
        %v904 = vadd.s32 %v899, 1
        %vm905 = vcmp.gt.s32.totalorder %v904, 0
        %v906 = vsel %vm905, %v904, 0
        %v907 = vshrl.u32 %v906, 5
        %v908 = vand.u32 %v906, 31
        %v909 = vsub.s32 32, %v908
        %v910 = vshrl.u32 683565275, %v909
        %v911 = vshll.u32 683565275, %v908
        %v912 = vshrl.u32 2475754826, %v909
        %v913 = vor.u32 %v911, %v912
        %v914 = vshll.u32 2475754826, %v908
        %v915 = vshrl.u32 2131351028, %v909
        %v916 = vor.u32 %v914, %v915
        %v917 = vshll.u32 2131351028, %v908
        %v918 = vshrl.u32 2102212464, %v909
        %v919 = vor.u32 %v917, %v918
        %v920 = vshll.u32 2102212464, %v908
        %v921 = vshrl.u32 920167782, %v909
        %v922 = vor.u32 %v920, %v921
        %v923 = vshll.u32 920167782, %v908
        %v924 = vshrl.u32 1326507024, %v909
        %v925 = vor.u32 %v923, %v924
        %vm926 = vcmp.lt.s32.totalorder %v907, 1
        %vm927 = vcmp.lt.s32.totalorder %v907, 2
        %vm928 = vcmp.lt.s32.totalorder %v907, 3
        %vm929 = vcmp.lt.s32.totalorder %v907, 4
        %v930 = vsel %vm926, %v910, %v913
        %v931 = vsel %vm929, %v919, 2102212464
        %v932 = vsel %vm928, %v916, %v931
        %v933 = vsel %vm927, %v930, %v932
        %v934 = vsel %vm926, %v913, %v916
        %v935 = vsel %vm929, %v922, 920167782
        %v936 = vsel %vm928, %v919, %v935
        %v937 = vsel %vm927, %v934, %v936
        %v938 = vsel %vm926, %v916, %v919
        %v939 = vsel %vm929, %v925, 1326507024
        %v940 = vsel %vm928, %v922, %v939
        %v941 = vsel %vm927, %v938, %v940
        %v942 = vshll.u32 %v902, 8
        %v943 = vmul.u32.u64.compose %v942, %v941
        %v944 = vextract.low.u32 %v943
        %v945 = vextract.high.u32 %v943
        %v946 = vmul.u32.u64.compose %v942, %v937
        %v947 = vextract.low.u32 %v946
        %v948 = vextract.high.u32 %v946
        %v949 = vmul.u32 %v942, %v933
        %v950 = vadd.s32 %v945, %v947
        %vm951 = vc.u32 %v945, %v947
        %v952 = vadd.s32 %v948, 1
        %v953 = vsel %vm951, %v952, %v948
        %v954 = vadd.s32 %v949, %v953
        %v955 = vadd.s32 %v954, 536870912
        %v956 = vshrl.u32 %v955, 30
        %v957 = vshll.u32 %v956, 30
        %v958 = vsub.s32 %v954, %v957
        %vm959 = vcmp.lt.s32.totalorder %v958, 0
        %v960 = vsub.s32 0, %v958
        %v961 = vsel %vm959, %v960, %v958
        %v962 = vclz %v961
        %v963 = vsub.s32 %v962, 2
        %vm964 = vcmp.gt.s32.totalorder 0, %v963
        %v965 = vsel %vm964, 0, %v963
        %v966 = vsub.s32 32, %v965
        %v967 = vshll.u32 %v958, %v965
        %v968 = vshrl.u32 %v950, %v966
        %v969 = vor.u32 %v967, %v968
        %v970 = vsub.s32 4294967266, %v965
        %v971 = vadd.s32 %v970, 127
        %v972 = vshll.u32 %v971, 23
        %v973 = vor.u32 4788187, %v972
        %v974 = vand.u32 2147483647, %v973
        %v976 = vcvt.s32.f32 %v969
        %v977 = vmul.f32 %v976, %v974
        %v978 = vxor.u32 %v977, 2147483648
        %v979 = vsel %vm896, %v978, %v977
        %v980 = vsub.s32 4, %v956
        %v981 = vsel %vm896, %v980, %v956
        %v982 = vsel %vm895, %v496, %v979
        %v983 = vsel %vm895, 0, %v981
        %v984 = vcosq.f32.pop %v982
        %v985 = vsinq.f32.pop %v982
        %vm986 = vweird.f32 %v496
        %v987 = vadd.s32 %v983, 3
        %v988 = vand.u32 %v987, 3
        %vm989 = vcmp.lt.s32.totalorder %v988, 2
        %vm990 = vcmp.eq.s32.totalorder %v988, 0
        %v991 = vxor.u32 %v985, 2147483648
        %v992 = vsel %vm990, %v984, %v991
        %vm993 = vcmp.eq.s32.totalorder %v988, 2
        %v994 = vxor.u32 %v984, 2147483648
        %v995 = vsel %vm993, %v994, %v985
        %v996 = vsel %vm989, %v992, %v995
        %v997 = vsel %vm986, nan, %v996
        %v998 = vand.u32 2147483647, %v500
        %vm999 = vcmp.le.f32.partialorder %v998, 0.7853982
        %vm1000 = vcmp.lt.s32.totalorder %v500, 0
        %v1001 = vand.u32 %v500, 2139095040
        %v1002 = vshrl.u32 %v1001, 23
        %v1003 = vsub.s32 %v1002, 127
        %v1004 = vand.u32 2147483647, %v500
        %v1005 = vand.u32 %v1004, 8388607
        %v1006 = vor.u32 %v1005, 8388608
        %v1007 = vsub.s32 0, %v1006
        %v1008 = vadd.s32 %v1003, 1
        %vm1009 = vcmp.gt.s32.totalorder %v1008, 0
        %v1010 = vsel %vm1009, %v1008, 0
        %v1011 = vshrl.u32 %v1010, 5
        %v1012 = vand.u32 %v1010, 31
        %v1013 = vsub.s32 32, %v1012
        %v1014 = vshrl.u32 683565275, %v1013
        %v1015 = vshll.u32 683565275, %v1012
        %v1016 = vshrl.u32 2475754826, %v1013
        %v1017 = vor.u32 %v1015, %v1016
        %v1018 = vshll.u32 2475754826, %v1012
        %v1019 = vshrl.u32 2131351028, %v1013
        %v1020 = vor.u32 %v1018, %v1019
        %v1021 = vshll.u32 2131351028, %v1012
        %v1022 = vshrl.u32 2102212464, %v1013
        %v1023 = vor.u32 %v1021, %v1022
        %v1024 = vshll.u32 2102212464, %v1012
        %v1025 = vshrl.u32 920167782, %v1013
        %v1026 = vor.u32 %v1024, %v1025
        %v1027 = vshll.u32 920167782, %v1012
        %v1028 = vshrl.u32 1326507024, %v1013
        %v1029 = vor.u32 %v1027, %v1028
        %vm1030 = vcmp.lt.s32.totalorder %v1011, 1
        %vm1031 = vcmp.lt.s32.totalorder %v1011, 2
        %vm1032 = vcmp.lt.s32.totalorder %v1011, 3
        %vm1033 = vcmp.lt.s32.totalorder %v1011, 4
        %v1034 = vsel %vm1030, %v1014, %v1017
        %v1035 = vsel %vm1033, %v1023, 2102212464
        %v1036 = vsel %vm1032, %v1020, %v1035
        %v1037 = vsel %vm1031, %v1034, %v1036
        %v1038 = vsel %vm1030, %v1017, %v1020
        %v1039 = vsel %vm1033, %v1026, 920167782
        %v1040 = vsel %vm1032, %v1023, %v1039
        %v1041 = vsel %vm1031, %v1038, %v1040
        %v1042 = vsel %vm1030, %v1020, %v1023
        %v1043 = vsel %vm1033, %v1029, 1326507024
        %v1044 = vsel %vm1032, %v1026, %v1043
        %v1045 = vsel %vm1031, %v1042, %v1044
        %v1046 = vshll.u32 %v1006, 8
        %v1047 = vmul.u32.u64.compose %v1046, %v1045
        %v1048 = vextract.low.u32 %v1047
        %v1049 = vextract.high.u32 %v1047
        %v1050 = vmul.u32.u64.compose %v1046, %v1041
        %v1051 = vextract.low.u32 %v1050
        %v1052 = vextract.high.u32 %v1050
        %v1053 = vmul.u32 %v1046, %v1037
        %v1054 = vadd.s32 %v1049, %v1051
        %vm1055 = vc.u32 %v1049, %v1051
        %v1056 = vadd.s32 %v1052, 1
        %v1057 = vsel %vm1055, %v1056, %v1052
        %v1058 = vadd.s32 %v1053, %v1057
        %v1059 = vadd.s32 %v1058, 536870912
        %v1060 = vshrl.u32 %v1059, 30
        %v1061 = vshll.u32 %v1060, 30
        %v1062 = vsub.s32 %v1058, %v1061
        %vm1063 = vcmp.lt.s32.totalorder %v1062, 0
        %v1064 = vsub.s32 0, %v1062
        %v1065 = vsel %vm1063, %v1064, %v1062
        %v1066 = vclz %v1065
        %v1067 = vsub.s32 %v1066, 2
        %vm1068 = vcmp.gt.s32.totalorder 0, %v1067
        %v1069 = vsel %vm1068, 0, %v1067
        %v1070 = vsub.s32 32, %v1069
        %v1071 = vshll.u32 %v1062, %v1069
        %v1072 = vshrl.u32 %v1054, %v1070
        %v1073 = vor.u32 %v1071, %v1072
        %v1074 = vsub.s32 4294967266, %v1069
        %v1075 = vadd.s32 %v1074, 127
        %v1076 = vshll.u32 %v1075, 23
        %v1077 = vor.u32 4788187, %v1076
        %v1078 = vand.u32 2147483647, %v1077
        %v1080 = vcvt.s32.f32 %v1073
        %v1081 = vmul.f32 %v1080, %v1078
        %v1082 = vxor.u32 %v1081, 2147483648
        %v1083 = vsel %vm1000, %v1082, %v1081
        %v1084 = vsub.s32 4, %v1060
        %v1085 = vsel %vm1000, %v1084, %v1060
        %v1086 = vsel %vm999, %v500, %v1083
        %v1087 = vsel %vm999, 0, %v1085
        %v1088 = vcosq.f32.pop %v1086
        %v1089 = vsinq.f32.pop %v1086
        %vm1090 = vweird.f32 %v500
        %v1091 = vadd.s32 %v1087, 3
        %v1092 = vand.u32 %v1091, 3
        %vm1093 = vcmp.lt.s32.totalorder %v1092, 2
        %vm1094 = vcmp.eq.s32.totalorder %v1092, 0
        %v1095 = vxor.u32 %v1089, 2147483648
        %v1096 = vsel %vm1094, %v1088, %v1095
        %vm1097 = vcmp.eq.s32.totalorder %v1092, 2
        %v1098 = vxor.u32 %v1088, 2147483648
        %v1099 = vsel %vm1097, %v1098, %v1089
        %v1100 = vsel %vm1093, %v1096, %v1099
        %v1101 = vsel %vm1090, nan, %v1100
        %v1102 = vand.u32 2147483647, %v502
        %vm1103 = vcmp.le.f32.partialorder %v1102, 0.7853982
        %vm1104 = vcmp.lt.s32.totalorder %v502, 0
        %v1105 = vand.u32 %v502, 2139095040
        %v1106 = vshrl.u32 %v1105, 23
        %v1107 = vsub.s32 %v1106, 127
        %v1108 = vand.u32 2147483647, %v502
        %v1109 = vand.u32 %v1108, 8388607
        %v1110 = vor.u32 %v1109, 8388608
        %v1111 = vsub.s32 0, %v1110
        %v1112 = vadd.s32 %v1107, 1
        %vm1113 = vcmp.gt.s32.totalorder %v1112, 0
        %v1114 = vsel %vm1113, %v1112, 0
        %v1115 = vshrl.u32 %v1114, 5
        %v1116 = vand.u32 %v1114, 31
        %v1117 = vsub.s32 32, %v1116
        %v1118 = vshrl.u32 683565275, %v1117
        %v1119 = vshll.u32 683565275, %v1116
        %v1120 = vshrl.u32 2475754826, %v1117
        %v1121 = vor.u32 %v1119, %v1120
        %v1122 = vshll.u32 2475754826, %v1116
        %v1123 = vshrl.u32 2131351028, %v1117
        %v1124 = vor.u32 %v1122, %v1123
        %v1125 = vshll.u32 2131351028, %v1116
        %v1126 = vshrl.u32 2102212464, %v1117
        %v1127 = vor.u32 %v1125, %v1126
        %v1128 = vshll.u32 2102212464, %v1116
        %v1129 = vshrl.u32 920167782, %v1117
        %v1130 = vor.u32 %v1128, %v1129
        %v1131 = vshll.u32 920167782, %v1116
        %v1132 = vshrl.u32 1326507024, %v1117
        %v1133 = vor.u32 %v1131, %v1132
        %vm1134 = vcmp.lt.s32.totalorder %v1115, 1
        %vm1135 = vcmp.lt.s32.totalorder %v1115, 2
        %vm1136 = vcmp.lt.s32.totalorder %v1115, 3
        %vm1137 = vcmp.lt.s32.totalorder %v1115, 4
        %v1138 = vsel %vm1134, %v1118, %v1121
        %v1139 = vsel %vm1137, %v1127, 2102212464
        %v1140 = vsel %vm1136, %v1124, %v1139
        %v1141 = vsel %vm1135, %v1138, %v1140
        %v1142 = vsel %vm1134, %v1121, %v1124
        %v1143 = vsel %vm1137, %v1130, 920167782
        %v1144 = vsel %vm1136, %v1127, %v1143
        %v1145 = vsel %vm1135, %v1142, %v1144
        %v1146 = vsel %vm1134, %v1124, %v1127
        %v1147 = vsel %vm1137, %v1133, 1326507024
        %v1148 = vsel %vm1136, %v1130, %v1147
        %v1149 = vsel %vm1135, %v1146, %v1148
        %v1150 = vshll.u32 %v1110, 8
        %v1151 = vmul.u32.u64.compose %v1150, %v1149
        %v1152 = vextract.low.u32 %v1151
        %v1153 = vextract.high.u32 %v1151
        %v1154 = vmul.u32.u64.compose %v1150, %v1145
        %v1155 = vextract.low.u32 %v1154
        %v1156 = vextract.high.u32 %v1154
        %v1157 = vmul.u32 %v1150, %v1141
        %v1158 = vadd.s32 %v1153, %v1155
        %vm1159 = vc.u32 %v1153, %v1155
        %v1160 = vadd.s32 %v1156, 1
        %v1161 = vsel %vm1159, %v1160, %v1156
        %v1162 = vadd.s32 %v1157, %v1161
        %v1163 = vadd.s32 %v1162, 536870912
        %v1164 = vshrl.u32 %v1163, 30
        %v1165 = vshll.u32 %v1164, 30
        %v1166 = vsub.s32 %v1162, %v1165
        %vm1167 = vcmp.lt.s32.totalorder %v1166, 0
        %v1168 = vsub.s32 0, %v1166
        %v1169 = vsel %vm1167, %v1168, %v1166
        %v1170 = vclz %v1169
        %v1171 = vsub.s32 %v1170, 2
        %vm1172 = vcmp.gt.s32.totalorder 0, %v1171
        %v1173 = vsel %vm1172, 0, %v1171
        %v1174 = vsub.s32 32, %v1173
        %v1175 = vshll.u32 %v1166, %v1173
        %v1176 = vshrl.u32 %v1158, %v1174
        %v1177 = vor.u32 %v1175, %v1176
        %v1178 = vsub.s32 4294967266, %v1173
        %v1179 = vadd.s32 %v1178, 127
        %v1180 = vshll.u32 %v1179, 23
        %v1181 = vor.u32 4788187, %v1180
        %v1182 = vand.u32 2147483647, %v1181
        %v1184 = vcvt.s32.f32 %v1177
        %v1185 = vmul.f32 %v1184, %v1182
        %v1186 = vxor.u32 %v1185, 2147483648
        %v1187 = vsel %vm1104, %v1186, %v1185
        %v1188 = vsub.s32 4, %v1164
        %v1189 = vsel %vm1104, %v1188, %v1164
        %v1190 = vsel %vm1103, %v502, %v1187
        %v1191 = vsel %vm1103, 0, %v1189
        %v1192 = vcosq.f32.pop %v1190
        %v1193 = vsinq.f32.pop %v1190
        %vm1194 = vweird.f32 %v502
        %v1195 = vadd.s32 %v1191, 3
        %v1196 = vand.u32 %v1195, 3
        %vm1197 = vcmp.lt.s32.totalorder %v1196, 2
        %vm1198 = vcmp.eq.s32.totalorder %v1196, 0
        %v1199 = vxor.u32 %v1193, 2147483648
        %v1200 = vsel %vm1198, %v1192, %v1199
        %vm1201 = vcmp.eq.s32.totalorder %v1196, 2
        %v1202 = vxor.u32 %v1192, 2147483648
        %v1203 = vsel %vm1201, %v1202, %v1193
        %v1204 = vsel %vm1197, %v1200, %v1203
        %v1205 = vsel %vm1194, nan, %v1204
        %v1206 = vand.u32 2147483647, %v506
        %vm1207 = vcmp.le.f32.partialorder %v1206, 0.7853982
        %vm1208 = vcmp.lt.s32.totalorder %v506, 0
        %v1209 = vand.u32 %v506, 2139095040
        %v1210 = vshrl.u32 %v1209, 23
        %v1211 = vsub.s32 %v1210, 127
        %v1212 = vand.u32 2147483647, %v506
        %v1213 = vand.u32 %v1212, 8388607
        %v1214 = vor.u32 %v1213, 8388608
        %v1215 = vsub.s32 0, %v1214
        %v1216 = vadd.s32 %v1211, 1
        %vm1217 = vcmp.gt.s32.totalorder %v1216, 0
        %v1218 = vsel %vm1217, %v1216, 0
        %v1219 = vshrl.u32 %v1218, 5
        %v1220 = vand.u32 %v1218, 31
        %v1221 = vsub.s32 32, %v1220
        %v1222 = vshrl.u32 683565275, %v1221
        %v1223 = vshll.u32 683565275, %v1220
        %v1224 = vshrl.u32 2475754826, %v1221
        %v1225 = vor.u32 %v1223, %v1224
        %v1226 = vshll.u32 2475754826, %v1220
        %v1227 = vshrl.u32 2131351028, %v1221
        %v1228 = vor.u32 %v1226, %v1227
        %v1229 = vshll.u32 2131351028, %v1220
        %v1230 = vshrl.u32 2102212464, %v1221
        %v1231 = vor.u32 %v1229, %v1230
        %v1232 = vshll.u32 2102212464, %v1220
        %v1233 = vshrl.u32 920167782, %v1221
        %v1234 = vor.u32 %v1232, %v1233
        %v1235 = vshll.u32 920167782, %v1220
        %v1236 = vshrl.u32 1326507024, %v1221
        %v1237 = vor.u32 %v1235, %v1236
        %vm1238 = vcmp.lt.s32.totalorder %v1219, 1
        %vm1239 = vcmp.lt.s32.totalorder %v1219, 2
        %vm1240 = vcmp.lt.s32.totalorder %v1219, 3
        %vm1241 = vcmp.lt.s32.totalorder %v1219, 4
        %v1242 = vsel %vm1238, %v1222, %v1225
        %v1243 = vsel %vm1241, %v1231, 2102212464
        %v1244 = vsel %vm1240, %v1228, %v1243
        %v1245 = vsel %vm1239, %v1242, %v1244
        %v1246 = vsel %vm1238, %v1225, %v1228
        %v1247 = vsel %vm1241, %v1234, 920167782
        %v1248 = vsel %vm1240, %v1231, %v1247
        %v1249 = vsel %vm1239, %v1246, %v1248
        %v1250 = vsel %vm1238, %v1228, %v1231
        %v1251 = vsel %vm1241, %v1237, 1326507024
        %v1252 = vsel %vm1240, %v1234, %v1251
        %v1253 = vsel %vm1239, %v1250, %v1252
        %v1254 = vshll.u32 %v1214, 8
        %v1255 = vmul.u32.u64.compose %v1254, %v1253
        %v1256 = vextract.low.u32 %v1255
        %v1257 = vextract.high.u32 %v1255
        %v1258 = vmul.u32.u64.compose %v1254, %v1249
        %v1259 = vextract.low.u32 %v1258
        %v1260 = vextract.high.u32 %v1258
        %v1261 = vmul.u32 %v1254, %v1245
        %v1262 = vadd.s32 %v1257, %v1259
        %vm1263 = vc.u32 %v1257, %v1259
        %v1264 = vadd.s32 %v1260, 1
        %v1265 = vsel %vm1263, %v1264, %v1260
        %v1266 = vadd.s32 %v1261, %v1265
        %v1267 = vadd.s32 %v1266, 536870912
        %v1268 = vshrl.u32 %v1267, 30
        %v1269 = vshll.u32 %v1268, 30
        %v1270 = vsub.s32 %v1266, %v1269
        %vm1271 = vcmp.lt.s32.totalorder %v1270, 0
        %v1272 = vsub.s32 0, %v1270
        %v1273 = vsel %vm1271, %v1272, %v1270
        %v1274 = vclz %v1273
        %v1275 = vsub.s32 %v1274, 2
        %vm1276 = vcmp.gt.s32.totalorder 0, %v1275
        %v1277 = vsel %vm1276, 0, %v1275
        %v1278 = vsub.s32 32, %v1277
        %v1279 = vshll.u32 %v1270, %v1277
        %v1280 = vshrl.u32 %v1262, %v1278
        %v1281 = vor.u32 %v1279, %v1280
        %v1282 = vsub.s32 4294967266, %v1277
        %v1283 = vadd.s32 %v1282, 127
        %v1284 = vshll.u32 %v1283, 23
        %v1285 = vor.u32 4788187, %v1284
        %v1286 = vand.u32 2147483647, %v1285
        %v1288 = vcvt.s32.f32 %v1281
        %v1289 = vmul.f32 %v1288, %v1286
        %v1290 = vxor.u32 %v1289, 2147483648
        %v1291 = vsel %vm1208, %v1290, %v1289
        %v1292 = vsub.s32 4, %v1268
        %v1293 = vsel %vm1208, %v1292, %v1268
        %v1294 = vsel %vm1207, %v506, %v1291
        %v1295 = vsel %vm1207, 0, %v1293
        %v1296 = vcosq.f32.pop %v1294
        %v1297 = vsinq.f32.pop %v1294
        %vm1298 = vweird.f32 %v506
        %v1299 = vadd.s32 %v1295, 3
        %v1300 = vand.u32 %v1299, 3
        %vm1301 = vcmp.lt.s32.totalorder %v1300, 2
        %vm1302 = vcmp.eq.s32.totalorder %v1300, 0
        %v1303 = vxor.u32 %v1297, 2147483648
        %v1304 = vsel %vm1302, %v1296, %v1303
        %vm1305 = vcmp.eq.s32.totalorder %v1300, 2
        %v1306 = vxor.u32 %v1296, 2147483648
        %v1307 = vsel %vm1305, %v1306, %v1297
        %v1308 = vsel %vm1301, %v1304, %v1307
        %v1309 = vsel %vm1298, nan, %v1308
        %v1310 = vand.u32 2147483647, %v508
        %vm1311 = vcmp.le.f32.partialorder %v1310, 0.7853982
        %vm1312 = vcmp.lt.s32.totalorder %v508, 0
        %v1313 = vand.u32 %v508, 2139095040
        %v1314 = vshrl.u32 %v1313, 23
        %v1315 = vsub.s32 %v1314, 127
        %v1316 = vand.u32 2147483647, %v508
        %v1317 = vand.u32 %v1316, 8388607
        %v1318 = vor.u32 %v1317, 8388608
        %v1319 = vsub.s32 0, %v1318
        %v1320 = vadd.s32 %v1315, 1
        %vm1321 = vcmp.gt.s32.totalorder %v1320, 0
        %v1322 = vsel %vm1321, %v1320, 0
        %v1323 = vshrl.u32 %v1322, 5
        %v1324 = vand.u32 %v1322, 31
        %v1325 = vsub.s32 32, %v1324
        %v1326 = vshrl.u32 683565275, %v1325
        %v1327 = vshll.u32 683565275, %v1324
        %v1328 = vshrl.u32 2475754826, %v1325
        %v1329 = vor.u32 %v1327, %v1328
        %v1330 = vshll.u32 2475754826, %v1324
        %v1331 = vshrl.u32 2131351028, %v1325
        %v1332 = vor.u32 %v1330, %v1331
        %v1333 = vshll.u32 2131351028, %v1324
        %v1334 = vshrl.u32 2102212464, %v1325
        %v1335 = vor.u32 %v1333, %v1334
        %v1336 = vshll.u32 2102212464, %v1324
        %v1337 = vshrl.u32 920167782, %v1325
        %v1338 = vor.u32 %v1336, %v1337
        %v1339 = vshll.u32 920167782, %v1324
        %v1340 = vshrl.u32 1326507024, %v1325
        %v1341 = vor.u32 %v1339, %v1340
        %vm1342 = vcmp.lt.s32.totalorder %v1323, 1
        %vm1343 = vcmp.lt.s32.totalorder %v1323, 2
        %vm1344 = vcmp.lt.s32.totalorder %v1323, 3
        %vm1345 = vcmp.lt.s32.totalorder %v1323, 4
        %v1346 = vsel %vm1342, %v1326, %v1329
        %v1347 = vsel %vm1345, %v1335, 2102212464
        %v1348 = vsel %vm1344, %v1332, %v1347
        %v1349 = vsel %vm1343, %v1346, %v1348
        %v1350 = vsel %vm1342, %v1329, %v1332
        %v1351 = vsel %vm1345, %v1338, 920167782
        %v1352 = vsel %vm1344, %v1335, %v1351
        %v1353 = vsel %vm1343, %v1350, %v1352
        %v1354 = vsel %vm1342, %v1332, %v1335
        %v1355 = vsel %vm1345, %v1341, 1326507024
        %v1356 = vsel %vm1344, %v1338, %v1355
        %v1357 = vsel %vm1343, %v1354, %v1356
        %v1358 = vshll.u32 %v1318, 8
        %v1359 = vmul.u32.u64.compose %v1358, %v1357
        %v1360 = vextract.low.u32 %v1359
        %v1361 = vextract.high.u32 %v1359
        %v1362 = vmul.u32.u64.compose %v1358, %v1353
        %v1363 = vextract.low.u32 %v1362
        %v1364 = vextract.high.u32 %v1362
        %v1365 = vmul.u32 %v1358, %v1349
        %v1366 = vadd.s32 %v1361, %v1363
        %vm1367 = vc.u32 %v1361, %v1363
        %v1368 = vadd.s32 %v1364, 1
        %v1369 = vsel %vm1367, %v1368, %v1364
        %v1370 = vadd.s32 %v1365, %v1369
        %v1371 = vadd.s32 %v1370, 536870912
        %v1372 = vshrl.u32 %v1371, 30
        %v1373 = vshll.u32 %v1372, 30
        %v1374 = vsub.s32 %v1370, %v1373
        %vm1375 = vcmp.lt.s32.totalorder %v1374, 0
        %v1376 = vsub.s32 0, %v1374
        %v1377 = vsel %vm1375, %v1376, %v1374
        %v1378 = vclz %v1377
        %v1379 = vsub.s32 %v1378, 2
        %vm1380 = vcmp.gt.s32.totalorder 0, %v1379
        %v1381 = vsel %vm1380, 0, %v1379
        %v1382 = vsub.s32 32, %v1381
        %v1383 = vshll.u32 %v1374, %v1381
        %v1384 = vshrl.u32 %v1366, %v1382
        %v1385 = vor.u32 %v1383, %v1384
        %v1386 = vsub.s32 4294967266, %v1381
        %v1387 = vadd.s32 %v1386, 127
        %v1388 = vshll.u32 %v1387, 23
        %v1389 = vor.u32 4788187, %v1388
        %v1390 = vand.u32 2147483647, %v1389
        %v1392 = vcvt.s32.f32 %v1385
        %v1393 = vmul.f32 %v1392, %v1390
        %v1394 = vxor.u32 %v1393, 2147483648
        %v1395 = vsel %vm1312, %v1394, %v1393
        %v1396 = vsub.s32 4, %v1372
        %v1397 = vsel %vm1312, %v1396, %v1372
        %v1398 = vsel %vm1311, %v508, %v1395
        %v1399 = vsel %vm1311, 0, %v1397
        %v1400 = vcosq.f32.pop %v1398
        %v1401 = vsinq.f32.pop %v1398
        %vm1402 = vweird.f32 %v508
        %v1403 = vadd.s32 %v1399, 3
        %v1404 = vand.u32 %v1403, 3
        %vm1405 = vcmp.lt.s32.totalorder %v1404, 2
        %vm1406 = vcmp.eq.s32.totalorder %v1404, 0
        %v1407 = vxor.u32 %v1401, 2147483648
        %v1408 = vsel %vm1406, %v1400, %v1407
        %vm1409 = vcmp.eq.s32.totalorder %v1404, 2
        %v1410 = vxor.u32 %v1400, 2147483648
        %v1411 = vsel %vm1409, %v1410, %v1401
        %v1412 = vsel %vm1405, %v1408, %v1411
        %v1413 = vsel %vm1402, nan, %v1412
        %v1414 = vand.u32 2147483647, %v512
        %vm1415 = vcmp.le.f32.partialorder %v1414, 0.7853982
        %vm1416 = vcmp.lt.s32.totalorder %v512, 0
        %v1417 = vand.u32 %v512, 2139095040
        %v1418 = vshrl.u32 %v1417, 23
        %v1419 = vsub.s32 %v1418, 127
        %v1420 = vand.u32 2147483647, %v512
        %v1421 = vand.u32 %v1420, 8388607
        %v1422 = vor.u32 %v1421, 8388608
        %v1423 = vsub.s32 0, %v1422
        %v1424 = vadd.s32 %v1419, 1
        %vm1425 = vcmp.gt.s32.totalorder %v1424, 0
        %v1426 = vsel %vm1425, %v1424, 0
        %v1427 = vshrl.u32 %v1426, 5
        %v1428 = vand.u32 %v1426, 31
        %v1429 = vsub.s32 32, %v1428
        %v1430 = vshrl.u32 683565275, %v1429
        %v1431 = vshll.u32 683565275, %v1428
        %v1432 = vshrl.u32 2475754826, %v1429
        %v1433 = vor.u32 %v1431, %v1432
        %v1434 = vshll.u32 2475754826, %v1428
        %v1435 = vshrl.u32 2131351028, %v1429
        %v1436 = vor.u32 %v1434, %v1435
        %v1437 = vshll.u32 2131351028, %v1428
        %v1438 = vshrl.u32 2102212464, %v1429
        %v1439 = vor.u32 %v1437, %v1438
        %v1440 = vshll.u32 2102212464, %v1428
        %v1441 = vshrl.u32 920167782, %v1429
        %v1442 = vor.u32 %v1440, %v1441
        %v1443 = vshll.u32 920167782, %v1428
        %v1444 = vshrl.u32 1326507024, %v1429
        %v1445 = vor.u32 %v1443, %v1444
        %vm1446 = vcmp.lt.s32.totalorder %v1427, 1
        %vm1447 = vcmp.lt.s32.totalorder %v1427, 2
        %vm1448 = vcmp.lt.s32.totalorder %v1427, 3
        %vm1449 = vcmp.lt.s32.totalorder %v1427, 4
        %v1450 = vsel %vm1446, %v1430, %v1433
        %v1451 = vsel %vm1449, %v1439, 2102212464
        %v1452 = vsel %vm1448, %v1436, %v1451
        %v1453 = vsel %vm1447, %v1450, %v1452
        %v1454 = vsel %vm1446, %v1433, %v1436
        %v1455 = vsel %vm1449, %v1442, 920167782
        %v1456 = vsel %vm1448, %v1439, %v1455
        %v1457 = vsel %vm1447, %v1454, %v1456
        %v1458 = vsel %vm1446, %v1436, %v1439
        %v1459 = vsel %vm1449, %v1445, 1326507024
        %v1460 = vsel %vm1448, %v1442, %v1459
        %v1461 = vsel %vm1447, %v1458, %v1460
        %v1462 = vshll.u32 %v1422, 8
        %v1463 = vmul.u32.u64.compose %v1462, %v1461
        %v1464 = vextract.low.u32 %v1463
        %v1465 = vextract.high.u32 %v1463
        %v1466 = vmul.u32.u64.compose %v1462, %v1457
        %v1467 = vextract.low.u32 %v1466
        %v1468 = vextract.high.u32 %v1466
        %v1469 = vmul.u32 %v1462, %v1453
        %v1470 = vadd.s32 %v1465, %v1467
        %vm1471 = vc.u32 %v1465, %v1467
        %v1472 = vadd.s32 %v1468, 1
        %v1473 = vsel %vm1471, %v1472, %v1468
        %v1474 = vadd.s32 %v1469, %v1473
        %v1475 = vadd.s32 %v1474, 536870912
        %v1476 = vshrl.u32 %v1475, 30
        %v1477 = vshll.u32 %v1476, 30
        %v1478 = vsub.s32 %v1474, %v1477
        %vm1479 = vcmp.lt.s32.totalorder %v1478, 0
        %v1480 = vsub.s32 0, %v1478
        %v1481 = vsel %vm1479, %v1480, %v1478
        %v1482 = vclz %v1481
        %v1483 = vsub.s32 %v1482, 2
        %vm1484 = vcmp.gt.s32.totalorder 0, %v1483
        %v1485 = vsel %vm1484, 0, %v1483
        %v1486 = vsub.s32 32, %v1485
        %v1487 = vshll.u32 %v1478, %v1485
        %v1488 = vshrl.u32 %v1470, %v1486
        %v1489 = vor.u32 %v1487, %v1488
        %v1490 = vsub.s32 4294967266, %v1485
        %v1491 = vadd.s32 %v1490, 127
        %v1492 = vshll.u32 %v1491, 23
        %v1493 = vor.u32 4788187, %v1492
        %v1494 = vand.u32 2147483647, %v1493
        %v1496 = vcvt.s32.f32 %v1489
        %v1497 = vmul.f32 %v1496, %v1494
        %v1498 = vxor.u32 %v1497, 2147483648
        %v1499 = vsel %vm1416, %v1498, %v1497
        %v1500 = vsub.s32 4, %v1476
        %v1501 = vsel %vm1416, %v1500, %v1476
        %v1502 = vsel %vm1415, %v512, %v1499
        %v1503 = vsel %vm1415, 0, %v1501
        %v1504 = vcosq.f32.pop %v1502
        %v1505 = vsinq.f32.pop %v1502
        %vm1506 = vweird.f32 %v512
        %v1507 = vadd.s32 %v1503, 3
        %v1508 = vand.u32 %v1507, 3
        %vm1509 = vcmp.lt.s32.totalorder %v1508, 2
        %vm1510 = vcmp.eq.s32.totalorder %v1508, 0
        %v1511 = vxor.u32 %v1505, 2147483648
        %v1512 = vsel %vm1510, %v1504, %v1511
        %vm1513 = vcmp.eq.s32.totalorder %v1508, 2
        %v1514 = vxor.u32 %v1504, 2147483648
        %v1515 = vsel %vm1513, %v1514, %v1505
        %v1516 = vsel %vm1509, %v1512, %v1515
        %v1517 = vsel %vm1506, nan, %v1516
        %v1518 = vand.u32 2147483647, %v514
        %vm1519 = vcmp.le.f32.partialorder %v1518, 0.7853982
        %vm1520 = vcmp.lt.s32.totalorder %v514, 0
        %v1521 = vand.u32 %v514, 2139095040
        %v1522 = vshrl.u32 %v1521, 23
        %v1523 = vsub.s32 %v1522, 127
        %v1524 = vand.u32 2147483647, %v514
        %v1525 = vand.u32 %v1524, 8388607
        %v1526 = vor.u32 %v1525, 8388608
        %v1527 = vsub.s32 0, %v1526
        %v1528 = vadd.s32 %v1523, 1
        %vm1529 = vcmp.gt.s32.totalorder %v1528, 0
        %v1530 = vsel %vm1529, %v1528, 0
        %v1531 = vshrl.u32 %v1530, 5
        %v1532 = vand.u32 %v1530, 31
        %v1533 = vsub.s32 32, %v1532
        %v1534 = vshrl.u32 683565275, %v1533
        %v1535 = vshll.u32 683565275, %v1532
        %v1536 = vshrl.u32 2475754826, %v1533
        %v1537 = vor.u32 %v1535, %v1536
        %v1538 = vshll.u32 2475754826, %v1532
        %v1539 = vshrl.u32 2131351028, %v1533
        %v1540 = vor.u32 %v1538, %v1539
        %v1541 = vshll.u32 2131351028, %v1532
        %v1542 = vshrl.u32 2102212464, %v1533
        %v1543 = vor.u32 %v1541, %v1542
        %v1544 = vshll.u32 2102212464, %v1532
        %v1545 = vshrl.u32 920167782, %v1533
        %v1546 = vor.u32 %v1544, %v1545
        %v1547 = vshll.u32 920167782, %v1532
        %v1548 = vshrl.u32 1326507024, %v1533
        %v1549 = vor.u32 %v1547, %v1548
        %vm1550 = vcmp.lt.s32.totalorder %v1531, 1
        %vm1551 = vcmp.lt.s32.totalorder %v1531, 2
        %vm1552 = vcmp.lt.s32.totalorder %v1531, 3
        %vm1553 = vcmp.lt.s32.totalorder %v1531, 4
        %v1554 = vsel %vm1550, %v1534, %v1537
        %v1555 = vsel %vm1553, %v1543, 2102212464
        %v1556 = vsel %vm1552, %v1540, %v1555
        %v1557 = vsel %vm1551, %v1554, %v1556
        %v1558 = vsel %vm1550, %v1537, %v1540
        %v1559 = vsel %vm1553, %v1546, 920167782
        %v1560 = vsel %vm1552, %v1543, %v1559
        %v1561 = vsel %vm1551, %v1558, %v1560
        %v1562 = vsel %vm1550, %v1540, %v1543
        %v1563 = vsel %vm1553, %v1549, 1326507024
        %v1564 = vsel %vm1552, %v1546, %v1563
        %v1565 = vsel %vm1551, %v1562, %v1564
        %v1566 = vshll.u32 %v1526, 8
        %v1567 = vmul.u32.u64.compose %v1566, %v1565
        %v1568 = vextract.low.u32 %v1567
        %v1569 = vextract.high.u32 %v1567
        %v1570 = vmul.u32.u64.compose %v1566, %v1561
        %v1571 = vextract.low.u32 %v1570
        %v1572 = vextract.high.u32 %v1570
        %v1573 = vmul.u32 %v1566, %v1557
        %v1574 = vadd.s32 %v1569, %v1571
        %vm1575 = vc.u32 %v1569, %v1571
        %v1576 = vadd.s32 %v1572, 1
        %v1577 = vsel %vm1575, %v1576, %v1572
        %v1578 = vadd.s32 %v1573, %v1577
        %v1579 = vadd.s32 %v1578, 536870912
        %v1580 = vshrl.u32 %v1579, 30
        %v1581 = vshll.u32 %v1580, 30
        %v1582 = vsub.s32 %v1578, %v1581
        %vm1583 = vcmp.lt.s32.totalorder %v1582, 0
        %v1584 = vsub.s32 0, %v1582
        %v1585 = vsel %vm1583, %v1584, %v1582
        %v1586 = vclz %v1585
        %v1587 = vsub.s32 %v1586, 2
        %vm1588 = vcmp.gt.s32.totalorder 0, %v1587
        %v1589 = vsel %vm1588, 0, %v1587
        %v1590 = vsub.s32 32, %v1589
        %v1591 = vshll.u32 %v1582, %v1589
        %v1592 = vshrl.u32 %v1574, %v1590
        %v1593 = vor.u32 %v1591, %v1592
        %v1594 = vsub.s32 4294967266, %v1589
        %v1595 = vadd.s32 %v1594, 127
        %v1596 = vshll.u32 %v1595, 23
        %v1597 = vor.u32 4788187, %v1596
        %v1598 = vand.u32 2147483647, %v1597
        %v1600 = vcvt.s32.f32 %v1593
        %v1601 = vmul.f32 %v1600, %v1598
        %v1602 = vxor.u32 %v1601, 2147483648
        %v1603 = vsel %vm1520, %v1602, %v1601
        %v1604 = vsub.s32 4, %v1580
        %v1605 = vsel %vm1520, %v1604, %v1580
        %v1606 = vsel %vm1519, %v514, %v1603
        %v1607 = vsel %vm1519, 0, %v1605
        %v1608 = vcosq.f32.pop %v1606
        %v1609 = vsinq.f32.pop %v1606
        %vm1610 = vweird.f32 %v514
        %v1611 = vadd.s32 %v1607, 3
        %v1612 = vand.u32 %v1611, 3
        %vm1613 = vcmp.lt.s32.totalorder %v1612, 2
        %vm1614 = vcmp.eq.s32.totalorder %v1612, 0
        %v1615 = vxor.u32 %v1609, 2147483648
        %v1616 = vsel %vm1614, %v1608, %v1615
        %vm1617 = vcmp.eq.s32.totalorder %v1612, 2
        %v1618 = vxor.u32 %v1608, 2147483648
        %v1619 = vsel %vm1617, %v1618, %v1609
        %v1620 = vsel %vm1613, %v1616, %v1619
        %v1621 = vsel %vm1610, nan, %v1620
        %v1622 = vand.u32 2147483647, %v518
        %vm1623 = vcmp.le.f32.partialorder %v1622, 0.7853982
        %vm1624 = vcmp.lt.s32.totalorder %v518, 0
        %v1625 = vand.u32 %v518, 2139095040
        %v1626 = vshrl.u32 %v1625, 23
        %v1627 = vsub.s32 %v1626, 127
        %v1628 = vand.u32 2147483647, %v518
        %v1629 = vand.u32 %v1628, 8388607
        %v1630 = vor.u32 %v1629, 8388608
        %v1631 = vsub.s32 0, %v1630
        %v1632 = vadd.s32 %v1627, 1
        %vm1633 = vcmp.gt.s32.totalorder %v1632, 0
        %v1634 = vsel %vm1633, %v1632, 0
        %v1635 = vshrl.u32 %v1634, 5
        %v1636 = vand.u32 %v1634, 31
        %v1637 = vsub.s32 32, %v1636
        %v1638 = vshrl.u32 683565275, %v1637
        %v1639 = vshll.u32 683565275, %v1636
        %v1640 = vshrl.u32 2475754826, %v1637
        %v1641 = vor.u32 %v1639, %v1640
        %v1642 = vshll.u32 2475754826, %v1636
        %v1643 = vshrl.u32 2131351028, %v1637
        %v1644 = vor.u32 %v1642, %v1643
        %v1645 = vshll.u32 2131351028, %v1636
        %v1646 = vshrl.u32 2102212464, %v1637
        %v1647 = vor.u32 %v1645, %v1646
        %v1648 = vshll.u32 2102212464, %v1636
        %v1649 = vshrl.u32 920167782, %v1637
        %v1650 = vor.u32 %v1648, %v1649
        %v1651 = vshll.u32 920167782, %v1636
        %v1652 = vshrl.u32 1326507024, %v1637
        %v1653 = vor.u32 %v1651, %v1652
        %vm1654 = vcmp.lt.s32.totalorder %v1635, 1
        %vm1655 = vcmp.lt.s32.totalorder %v1635, 2
        %vm1656 = vcmp.lt.s32.totalorder %v1635, 3
        %vm1657 = vcmp.lt.s32.totalorder %v1635, 4
        %v1658 = vsel %vm1654, %v1638, %v1641
        %v1659 = vsel %vm1657, %v1647, 2102212464
        %v1660 = vsel %vm1656, %v1644, %v1659
        %v1661 = vsel %vm1655, %v1658, %v1660
        %v1662 = vsel %vm1654, %v1641, %v1644
        %v1663 = vsel %vm1657, %v1650, 920167782
        %v1664 = vsel %vm1656, %v1647, %v1663
        %v1665 = vsel %vm1655, %v1662, %v1664
        %v1666 = vsel %vm1654, %v1644, %v1647
        %v1667 = vsel %vm1657, %v1653, 1326507024
        %v1668 = vsel %vm1656, %v1650, %v1667
        %v1669 = vsel %vm1655, %v1666, %v1668
        %v1670 = vshll.u32 %v1630, 8
        %v1671 = vmul.u32.u64.compose %v1670, %v1669
        %v1672 = vextract.low.u32 %v1671
        %v1673 = vextract.high.u32 %v1671
        %v1674 = vmul.u32.u64.compose %v1670, %v1665
        %v1675 = vextract.low.u32 %v1674
        %v1676 = vextract.high.u32 %v1674
        %v1677 = vmul.u32 %v1670, %v1661
        %v1678 = vadd.s32 %v1673, %v1675
        %vm1679 = vc.u32 %v1673, %v1675
        %v1680 = vadd.s32 %v1676, 1
        %v1681 = vsel %vm1679, %v1680, %v1676
        %v1682 = vadd.s32 %v1677, %v1681
        %v1683 = vadd.s32 %v1682, 536870912
        %v1684 = vshrl.u32 %v1683, 30
        %v1685 = vshll.u32 %v1684, 30
        %v1686 = vsub.s32 %v1682, %v1685
        %vm1687 = vcmp.lt.s32.totalorder %v1686, 0
        %v1688 = vsub.s32 0, %v1686
        %v1689 = vsel %vm1687, %v1688, %v1686
        %v1690 = vclz %v1689
        %v1691 = vsub.s32 %v1690, 2
        %vm1692 = vcmp.gt.s32.totalorder 0, %v1691
        %v1693 = vsel %vm1692, 0, %v1691
        %v1694 = vsub.s32 32, %v1693
        %v1695 = vshll.u32 %v1686, %v1693
        %v1696 = vshrl.u32 %v1678, %v1694
        %v1697 = vor.u32 %v1695, %v1696
        %v1698 = vsub.s32 4294967266, %v1693
        %v1699 = vadd.s32 %v1698, 127
        %v1700 = vshll.u32 %v1699, 23
        %v1701 = vor.u32 4788187, %v1700
        %v1702 = vand.u32 2147483647, %v1701
        %v1704 = vcvt.s32.f32 %v1697
        %v1705 = vmul.f32 %v1704, %v1702
        %v1706 = vxor.u32 %v1705, 2147483648
        %v1707 = vsel %vm1624, %v1706, %v1705
        %v1708 = vsub.s32 4, %v1684
        %v1709 = vsel %vm1624, %v1708, %v1684
        %v1710 = vsel %vm1623, %v518, %v1707
        %v1711 = vsel %vm1623, 0, %v1709
        %v1712 = vcosq.f32.pop %v1710
        %v1713 = vsinq.f32.pop %v1710
        %vm1714 = vweird.f32 %v518
        %v1715 = vadd.s32 %v1711, 3
        %v1716 = vand.u32 %v1715, 3
        %vm1717 = vcmp.lt.s32.totalorder %v1716, 2
        %vm1718 = vcmp.eq.s32.totalorder %v1716, 0
        %v1719 = vxor.u32 %v1713, 2147483648
        %v1720 = vsel %vm1718, %v1712, %v1719
        %vm1721 = vcmp.eq.s32.totalorder %v1716, 2
        %v1722 = vxor.u32 %v1712, 2147483648
        %v1723 = vsel %vm1721, %v1722, %v1713
        %v1724 = vsel %vm1717, %v1720, %v1723
        %v1725 = vsel %vm1714, nan, %v1724
        %v1726 = vand.u32 2147483647, %v520
        %vm1727 = vcmp.le.f32.partialorder %v1726, 0.7853982
        %vm1728 = vcmp.lt.s32.totalorder %v520, 0
        %v1729 = vand.u32 %v520, 2139095040
        %v1730 = vshrl.u32 %v1729, 23
        %v1731 = vsub.s32 %v1730, 127
        %v1732 = vand.u32 2147483647, %v520
        %v1733 = vand.u32 %v1732, 8388607
        %v1734 = vor.u32 %v1733, 8388608
        %v1735 = vsub.s32 0, %v1734
        %v1736 = vadd.s32 %v1731, 1
        %vm1737 = vcmp.gt.s32.totalorder %v1736, 0
        %v1738 = vsel %vm1737, %v1736, 0
        %v1739 = vshrl.u32 %v1738, 5
        %v1740 = vand.u32 %v1738, 31
        %v1741 = vsub.s32 32, %v1740
        %v1742 = vshrl.u32 683565275, %v1741
        %v1743 = vshll.u32 683565275, %v1740
        %v1744 = vshrl.u32 2475754826, %v1741
        %v1745 = vor.u32 %v1743, %v1744
        %v1746 = vshll.u32 2475754826, %v1740
        %v1747 = vshrl.u32 2131351028, %v1741
        %v1748 = vor.u32 %v1746, %v1747
        %v1749 = vshll.u32 2131351028, %v1740
        %v1750 = vshrl.u32 2102212464, %v1741
        %v1751 = vor.u32 %v1749, %v1750
        %v1752 = vshll.u32 2102212464, %v1740
        %v1753 = vshrl.u32 920167782, %v1741
        %v1754 = vor.u32 %v1752, %v1753
        %v1755 = vshll.u32 920167782, %v1740
        %v1756 = vshrl.u32 1326507024, %v1741
        %v1757 = vor.u32 %v1755, %v1756
        %vm1758 = vcmp.lt.s32.totalorder %v1739, 1
        %vm1759 = vcmp.lt.s32.totalorder %v1739, 2
        %vm1760 = vcmp.lt.s32.totalorder %v1739, 3
        %vm1761 = vcmp.lt.s32.totalorder %v1739, 4
        %v1762 = vsel %vm1758, %v1742, %v1745
        %v1763 = vsel %vm1761, %v1751, 2102212464
        %v1764 = vsel %vm1760, %v1748, %v1763
        %v1765 = vsel %vm1759, %v1762, %v1764
        %v1766 = vsel %vm1758, %v1745, %v1748
        %v1767 = vsel %vm1761, %v1754, 920167782
        %v1768 = vsel %vm1760, %v1751, %v1767
        %v1769 = vsel %vm1759, %v1766, %v1768
        %v1770 = vsel %vm1758, %v1748, %v1751
        %v1771 = vsel %vm1761, %v1757, 1326507024
        %v1772 = vsel %vm1760, %v1754, %v1771
        %v1773 = vsel %vm1759, %v1770, %v1772
        %v1774 = vshll.u32 %v1734, 8
        %v1775 = vmul.u32.u64.compose %v1774, %v1773
        %v1776 = vextract.low.u32 %v1775
        %v1777 = vextract.high.u32 %v1775
        %v1778 = vmul.u32.u64.compose %v1774, %v1769
        %v1779 = vextract.low.u32 %v1778
        %v1780 = vextract.high.u32 %v1778
        %v1781 = vmul.u32 %v1774, %v1765
        %v1782 = vadd.s32 %v1777, %v1779
        %vm1783 = vc.u32 %v1777, %v1779
        %v1784 = vadd.s32 %v1780, 1
        %v1785 = vsel %vm1783, %v1784, %v1780
        %v1786 = vadd.s32 %v1781, %v1785
        %v1787 = vadd.s32 %v1786, 536870912
        %v1788 = vshrl.u32 %v1787, 30
        %v1789 = vshll.u32 %v1788, 30
        %v1790 = vsub.s32 %v1786, %v1789
        %vm1791 = vcmp.lt.s32.totalorder %v1790, 0
        %v1792 = vsub.s32 0, %v1790
        %v1793 = vsel %vm1791, %v1792, %v1790
        %v1794 = vclz %v1793
        %v1795 = vsub.s32 %v1794, 2
        %vm1796 = vcmp.gt.s32.totalorder 0, %v1795
        %v1797 = vsel %vm1796, 0, %v1795
        %v1798 = vsub.s32 32, %v1797
        %v1799 = vshll.u32 %v1790, %v1797
        %v1800 = vshrl.u32 %v1782, %v1798
        %v1801 = vor.u32 %v1799, %v1800
        %v1802 = vsub.s32 4294967266, %v1797
        %v1803 = vadd.s32 %v1802, 127
        %v1804 = vshll.u32 %v1803, 23
        %v1805 = vor.u32 4788187, %v1804
        %v1806 = vand.u32 2147483647, %v1805
        %v1808 = vcvt.s32.f32 %v1801
        %v1809 = vmul.f32 %v1808, %v1806
        %v1810 = vxor.u32 %v1809, 2147483648
        %v1811 = vsel %vm1728, %v1810, %v1809
        %v1812 = vsub.s32 4, %v1788
        %v1813 = vsel %vm1728, %v1812, %v1788
        %v1814 = vsel %vm1727, %v520, %v1811
        %v1815 = vsel %vm1727, 0, %v1813
        %v1816 = vcosq.f32.pop %v1814
        %v1817 = vsinq.f32.pop %v1814
        %vm1818 = vweird.f32 %v520
        %v1819 = vadd.s32 %v1815, 3
        %v1820 = vand.u32 %v1819, 3
        %vm1821 = vcmp.lt.s32.totalorder %v1820, 2
        %vm1822 = vcmp.eq.s32.totalorder %v1820, 0
        %v1823 = vxor.u32 %v1817, 2147483648
        %v1824 = vsel %vm1822, %v1816, %v1823
        %vm1825 = vcmp.eq.s32.totalorder %v1820, 2
        %v1826 = vxor.u32 %v1816, 2147483648
        %v1827 = vsel %vm1825, %v1826, %v1817
        %v1828 = vsel %vm1821, %v1824, %v1827
        %v1829 = vsel %vm1818, nan, %v1828
        %v1830 = vand.u32 2147483647, %v524
        %vm1831 = vcmp.le.f32.partialorder %v1830, 0.7853982
        %vm1832 = vcmp.lt.s32.totalorder %v524, 0
        %v1833 = vand.u32 %v524, 2139095040
        %v1834 = vshrl.u32 %v1833, 23
        %v1835 = vsub.s32 %v1834, 127
        %v1836 = vand.u32 2147483647, %v524
        %v1837 = vand.u32 %v1836, 8388607
        %v1838 = vor.u32 %v1837, 8388608
        %v1839 = vsub.s32 0, %v1838
        %v1840 = vadd.s32 %v1835, 1
        %vm1841 = vcmp.gt.s32.totalorder %v1840, 0
        %v1842 = vsel %vm1841, %v1840, 0
        %v1843 = vshrl.u32 %v1842, 5
        %v1844 = vand.u32 %v1842, 31
        %v1845 = vsub.s32 32, %v1844
        %v1846 = vshrl.u32 683565275, %v1845
        %v1847 = vshll.u32 683565275, %v1844
        %v1848 = vshrl.u32 2475754826, %v1845
        %v1849 = vor.u32 %v1847, %v1848
        %v1850 = vshll.u32 2475754826, %v1844
        %v1851 = vshrl.u32 2131351028, %v1845
        %v1852 = vor.u32 %v1850, %v1851
        %v1853 = vshll.u32 2131351028, %v1844
        %v1854 = vshrl.u32 2102212464, %v1845
        %v1855 = vor.u32 %v1853, %v1854
        %v1856 = vshll.u32 2102212464, %v1844
        %v1857 = vshrl.u32 920167782, %v1845
        %v1858 = vor.u32 %v1856, %v1857
        %v1859 = vshll.u32 920167782, %v1844
        %v1860 = vshrl.u32 1326507024, %v1845
        %v1861 = vor.u32 %v1859, %v1860
        %vm1862 = vcmp.lt.s32.totalorder %v1843, 1
        %vm1863 = vcmp.lt.s32.totalorder %v1843, 2
        %vm1864 = vcmp.lt.s32.totalorder %v1843, 3
        %vm1865 = vcmp.lt.s32.totalorder %v1843, 4
        %v1866 = vsel %vm1862, %v1846, %v1849
        %v1867 = vsel %vm1865, %v1855, 2102212464
        %v1868 = vsel %vm1864, %v1852, %v1867
        %v1869 = vsel %vm1863, %v1866, %v1868
        %v1870 = vsel %vm1862, %v1849, %v1852
        %v1871 = vsel %vm1865, %v1858, 920167782
        %v1872 = vsel %vm1864, %v1855, %v1871
        %v1873 = vsel %vm1863, %v1870, %v1872
        %v1874 = vsel %vm1862, %v1852, %v1855
        %v1875 = vsel %vm1865, %v1861, 1326507024
        %v1876 = vsel %vm1864, %v1858, %v1875
        %v1877 = vsel %vm1863, %v1874, %v1876
        %v1878 = vshll.u32 %v1838, 8
        %v1879 = vmul.u32.u64.compose %v1878, %v1877
        %v1880 = vextract.low.u32 %v1879
        %v1881 = vextract.high.u32 %v1879
        %v1882 = vmul.u32.u64.compose %v1878, %v1873
        %v1883 = vextract.low.u32 %v1882
        %v1884 = vextract.high.u32 %v1882
        %v1885 = vmul.u32 %v1878, %v1869
        %v1886 = vadd.s32 %v1881, %v1883
        %vm1887 = vc.u32 %v1881, %v1883
        %v1888 = vadd.s32 %v1884, 1
        %v1889 = vsel %vm1887, %v1888, %v1884
        %v1890 = vadd.s32 %v1885, %v1889
        %v1891 = vadd.s32 %v1890, 536870912
        %v1892 = vshrl.u32 %v1891, 30
        %v1893 = vshll.u32 %v1892, 30
        %v1894 = vsub.s32 %v1890, %v1893
        %vm1895 = vcmp.lt.s32.totalorder %v1894, 0
        %v1896 = vsub.s32 0, %v1894
        %v1897 = vsel %vm1895, %v1896, %v1894
        %v1898 = vclz %v1897
        %v1899 = vsub.s32 %v1898, 2
        %vm1900 = vcmp.gt.s32.totalorder 0, %v1899
        %v1901 = vsel %vm1900, 0, %v1899
        %v1902 = vsub.s32 32, %v1901
        %v1903 = vshll.u32 %v1894, %v1901
        %v1904 = vshrl.u32 %v1886, %v1902
        %v1905 = vor.u32 %v1903, %v1904
        %v1906 = vsub.s32 4294967266, %v1901
        %v1907 = vadd.s32 %v1906, 127
        %v1908 = vshll.u32 %v1907, 23
        %v1909 = vor.u32 4788187, %v1908
        %v1910 = vand.u32 2147483647, %v1909
        %v1912 = vcvt.s32.f32 %v1905
        %v1913 = vmul.f32 %v1912, %v1910
        %v1914 = vxor.u32 %v1913, 2147483648
        %v1915 = vsel %vm1832, %v1914, %v1913
        %v1916 = vsub.s32 4, %v1892
        %v1917 = vsel %vm1832, %v1916, %v1892
        %v1918 = vsel %vm1831, %v524, %v1915
        %v1919 = vsel %vm1831, 0, %v1917
        %v1920 = vcosq.f32.pop %v1918
        %v1921 = vsinq.f32.pop %v1918
        %vm1922 = vweird.f32 %v524
        %v1923 = vadd.s32 %v1919, 3
        %v1924 = vand.u32 %v1923, 3
        %vm1925 = vcmp.lt.s32.totalorder %v1924, 2
        %vm1926 = vcmp.eq.s32.totalorder %v1924, 0
        %v1927 = vxor.u32 %v1921, 2147483648
        %v1928 = vsel %vm1926, %v1920, %v1927
        %vm1929 = vcmp.eq.s32.totalorder %v1924, 2
        %v1930 = vxor.u32 %v1920, 2147483648
        %v1931 = vsel %vm1929, %v1930, %v1921
        %v1932 = vsel %vm1925, %v1928, %v1931
        %v1933 = vsel %vm1922, nan, %v1932
        %v1934 = vand.u32 2147483647, %v526
        %vm1935 = vcmp.le.f32.partialorder %v1934, 0.7853982
        %vm1936 = vcmp.lt.s32.totalorder %v526, 0
        %v1937 = vand.u32 %v526, 2139095040
        %v1938 = vshrl.u32 %v1937, 23
        %v1939 = vsub.s32 %v1938, 127
        %v1940 = vand.u32 2147483647, %v526
        %v1941 = vand.u32 %v1940, 8388607
        %v1942 = vor.u32 %v1941, 8388608
        %v1943 = vsub.s32 0, %v1942
        %v1944 = vadd.s32 %v1939, 1
        %vm1945 = vcmp.gt.s32.totalorder %v1944, 0
        %v1946 = vsel %vm1945, %v1944, 0
        %v1947 = vshrl.u32 %v1946, 5
        %v1948 = vand.u32 %v1946, 31
        %v1949 = vsub.s32 32, %v1948
        %v1950 = vshrl.u32 683565275, %v1949
        %v1951 = vshll.u32 683565275, %v1948
        %v1952 = vshrl.u32 2475754826, %v1949
        %v1953 = vor.u32 %v1951, %v1952
        %v1954 = vshll.u32 2475754826, %v1948
        %v1955 = vshrl.u32 2131351028, %v1949
        %v1956 = vor.u32 %v1954, %v1955
        %v1957 = vshll.u32 2131351028, %v1948
        %v1958 = vshrl.u32 2102212464, %v1949
        %v1959 = vor.u32 %v1957, %v1958
        %v1960 = vshll.u32 2102212464, %v1948
        %v1961 = vshrl.u32 920167782, %v1949
        %v1962 = vor.u32 %v1960, %v1961
        %v1963 = vshll.u32 920167782, %v1948
        %v1964 = vshrl.u32 1326507024, %v1949
        %v1965 = vor.u32 %v1963, %v1964
        %vm1966 = vcmp.lt.s32.totalorder %v1947, 1
        %vm1967 = vcmp.lt.s32.totalorder %v1947, 2
        %vm1968 = vcmp.lt.s32.totalorder %v1947, 3
        %vm1969 = vcmp.lt.s32.totalorder %v1947, 4
        %v1970 = vsel %vm1966, %v1950, %v1953
        %v1971 = vsel %vm1969, %v1959, 2102212464
        %v1972 = vsel %vm1968, %v1956, %v1971
        %v1973 = vsel %vm1967, %v1970, %v1972
        %v1974 = vsel %vm1966, %v1953, %v1956
        %v1975 = vsel %vm1969, %v1962, 920167782
        %v1976 = vsel %vm1968, %v1959, %v1975
        %v1977 = vsel %vm1967, %v1974, %v1976
        %v1978 = vsel %vm1966, %v1956, %v1959
        %v1979 = vsel %vm1969, %v1965, 1326507024
        %v1980 = vsel %vm1968, %v1962, %v1979
        %v1981 = vsel %vm1967, %v1978, %v1980
        %v1982 = vshll.u32 %v1942, 8
        %v1983 = vmul.u32.u64.compose %v1982, %v1981
        %v1984 = vextract.low.u32 %v1983
        %v1985 = vextract.high.u32 %v1983
        %v1986 = vmul.u32.u64.compose %v1982, %v1977
        %v1987 = vextract.low.u32 %v1986
        %v1988 = vextract.high.u32 %v1986
        %v1989 = vmul.u32 %v1982, %v1973
        %v1990 = vadd.s32 %v1985, %v1987
        %vm1991 = vc.u32 %v1985, %v1987
        %v1992 = vadd.s32 %v1988, 1
        %v1993 = vsel %vm1991, %v1992, %v1988
        %v1994 = vadd.s32 %v1989, %v1993
        %v1995 = vadd.s32 %v1994, 536870912
        %v1996 = vshrl.u32 %v1995, 30
        %v1997 = vshll.u32 %v1996, 30
        %v1998 = vsub.s32 %v1994, %v1997
        %vm1999 = vcmp.lt.s32.totalorder %v1998, 0
        %v2000 = vsub.s32 0, %v1998
        %v2001 = vsel %vm1999, %v2000, %v1998
        %v2002 = vclz %v2001
        %v2003 = vsub.s32 %v2002, 2
        %vm2004 = vcmp.gt.s32.totalorder 0, %v2003
        %v2005 = vsel %vm2004, 0, %v2003
        %v2006 = vsub.s32 32, %v2005
        %v2007 = vshll.u32 %v1998, %v2005
        %v2008 = vshrl.u32 %v1990, %v2006
        %v2009 = vor.u32 %v2007, %v2008
        %v2010 = vsub.s32 4294967266, %v2005
        %v2011 = vadd.s32 %v2010, 127
        %v2012 = vshll.u32 %v2011, 23
        %v2013 = vor.u32 4788187, %v2012
        %v2014 = vand.u32 2147483647, %v2013
        %v2016 = vcvt.s32.f32 %v2009
        %v2017 = vmul.f32 %v2016, %v2014
        %v2018 = vxor.u32 %v2017, 2147483648
        %v2019 = vsel %vm1936, %v2018, %v2017
        %v2020 = vsub.s32 4, %v1996
        %v2021 = vsel %vm1936, %v2020, %v1996
        %v2022 = vsel %vm1935, %v526, %v2019
        %v2023 = vsel %vm1935, 0, %v2021
        %v2024 = vcosq.f32.pop %v2022
        %v2025 = vsinq.f32.pop %v2022
        %vm2026 = vweird.f32 %v526
        %v2027 = vadd.s32 %v2023, 3
        %v2028 = vand.u32 %v2027, 3
        %vm2029 = vcmp.lt.s32.totalorder %v2028, 2
        %vm2030 = vcmp.eq.s32.totalorder %v2028, 0
        %v2031 = vxor.u32 %v2025, 2147483648
        %v2032 = vsel %vm2030, %v2024, %v2031
        %vm2033 = vcmp.eq.s32.totalorder %v2028, 2
        %v2034 = vxor.u32 %v2024, 2147483648
        %v2035 = vsel %vm2033, %v2034, %v2025
        %v2036 = vsel %vm2029, %v2032, %v2035
        %v2037 = vsel %vm2026, nan, %v2036
        %v2038 = vand.u32 2147483647, %v530
        %vm2039 = vcmp.le.f32.partialorder %v2038, 0.7853982
        %vm2040 = vcmp.lt.s32.totalorder %v530, 0
        %v2041 = vand.u32 %v530, 2139095040
        %v2042 = vshrl.u32 %v2041, 23
        %v2043 = vsub.s32 %v2042, 127
        %v2044 = vand.u32 2147483647, %v530
        %v2045 = vand.u32 %v2044, 8388607
        %v2046 = vor.u32 %v2045, 8388608
        %v2047 = vsub.s32 0, %v2046
        %v2048 = vadd.s32 %v2043, 1
        %vm2049 = vcmp.gt.s32.totalorder %v2048, 0
        %v2050 = vsel %vm2049, %v2048, 0
        %v2051 = vshrl.u32 %v2050, 5
        %v2052 = vand.u32 %v2050, 31
        %v2053 = vsub.s32 32, %v2052
        %v2054 = vshrl.u32 683565275, %v2053
        %v2055 = vshll.u32 683565275, %v2052
        %v2056 = vshrl.u32 2475754826, %v2053
        %v2057 = vor.u32 %v2055, %v2056
        %v2058 = vshll.u32 2475754826, %v2052
        %v2059 = vshrl.u32 2131351028, %v2053
        %v2060 = vor.u32 %v2058, %v2059
        %v2061 = vshll.u32 2131351028, %v2052
        %v2062 = vshrl.u32 2102212464, %v2053
        %v2063 = vor.u32 %v2061, %v2062
        %v2064 = vshll.u32 2102212464, %v2052
        %v2065 = vshrl.u32 920167782, %v2053
        %v2066 = vor.u32 %v2064, %v2065
        %v2067 = vshll.u32 920167782, %v2052
        %v2068 = vshrl.u32 1326507024, %v2053
        %v2069 = vor.u32 %v2067, %v2068
        %vm2070 = vcmp.lt.s32.totalorder %v2051, 1
        %vm2071 = vcmp.lt.s32.totalorder %v2051, 2
        %vm2072 = vcmp.lt.s32.totalorder %v2051, 3
        %vm2073 = vcmp.lt.s32.totalorder %v2051, 4
        %v2074 = vsel %vm2070, %v2054, %v2057
        %v2075 = vsel %vm2073, %v2063, 2102212464
        %v2076 = vsel %vm2072, %v2060, %v2075
        %v2077 = vsel %vm2071, %v2074, %v2076
        %v2078 = vsel %vm2070, %v2057, %v2060
        %v2079 = vsel %vm2073, %v2066, 920167782
        %v2080 = vsel %vm2072, %v2063, %v2079
        %v2081 = vsel %vm2071, %v2078, %v2080
        %v2082 = vsel %vm2070, %v2060, %v2063
        %v2083 = vsel %vm2073, %v2069, 1326507024
        %v2084 = vsel %vm2072, %v2066, %v2083
        %v2085 = vsel %vm2071, %v2082, %v2084
        %v2086 = vshll.u32 %v2046, 8
        %v2087 = vmul.u32.u64.compose %v2086, %v2085
        %v2088 = vextract.low.u32 %v2087
        %v2089 = vextract.high.u32 %v2087
        %v2090 = vmul.u32.u64.compose %v2086, %v2081
        %v2091 = vextract.low.u32 %v2090
        %v2092 = vextract.high.u32 %v2090
        %v2093 = vmul.u32 %v2086, %v2077
        %v2094 = vadd.s32 %v2089, %v2091
        %vm2095 = vc.u32 %v2089, %v2091
        %v2096 = vadd.s32 %v2092, 1
        %v2097 = vsel %vm2095, %v2096, %v2092
        %v2098 = vadd.s32 %v2093, %v2097
        %v2099 = vadd.s32 %v2098, 536870912
        %v2100 = vshrl.u32 %v2099, 30
        %v2101 = vshll.u32 %v2100, 30
        %v2102 = vsub.s32 %v2098, %v2101
        %vm2103 = vcmp.lt.s32.totalorder %v2102, 0
        %v2104 = vsub.s32 0, %v2102
        %v2105 = vsel %vm2103, %v2104, %v2102
        %v2106 = vclz %v2105
        %v2107 = vsub.s32 %v2106, 2
        %vm2108 = vcmp.gt.s32.totalorder 0, %v2107
        %v2109 = vsel %vm2108, 0, %v2107
        %v2110 = vsub.s32 32, %v2109
        %v2111 = vshll.u32 %v2102, %v2109
        %v2112 = vshrl.u32 %v2094, %v2110
        %v2113 = vor.u32 %v2111, %v2112
        %v2114 = vsub.s32 4294967266, %v2109
        %v2115 = vadd.s32 %v2114, 127
        %v2116 = vshll.u32 %v2115, 23
        %v2117 = vor.u32 4788187, %v2116
        %v2118 = vand.u32 2147483647, %v2117
        %v2120 = vcvt.s32.f32 %v2113
        %v2121 = vmul.f32 %v2120, %v2118
        %v2122 = vxor.u32 %v2121, 2147483648
        %v2123 = vsel %vm2040, %v2122, %v2121
        %v2124 = vsub.s32 4, %v2100
        %v2125 = vsel %vm2040, %v2124, %v2100
        %v2126 = vsel %vm2039, %v530, %v2123
        %v2127 = vsel %vm2039, 0, %v2125
        %v2128 = vcosq.f32.pop %v2126
        %v2129 = vsinq.f32.pop %v2126
        %vm2130 = vweird.f32 %v530
        %v2131 = vadd.s32 %v2127, 3
        %v2132 = vand.u32 %v2131, 3
        %vm2133 = vcmp.lt.s32.totalorder %v2132, 2
        %vm2134 = vcmp.eq.s32.totalorder %v2132, 0
        %v2135 = vxor.u32 %v2129, 2147483648
        %v2136 = vsel %vm2134, %v2128, %v2135
        %vm2137 = vcmp.eq.s32.totalorder %v2132, 2
        %v2138 = vxor.u32 %v2128, 2147483648
        %v2139 = vsel %vm2137, %v2138, %v2129
        %v2140 = vsel %vm2133, %v2136, %v2139
        %v2141 = vsel %vm2130, nan, %v2140
        %v2142 = vand.u32 2147483647, %v532
        %vm2143 = vcmp.le.f32.partialorder %v2142, 0.7853982
        %vm2144 = vcmp.lt.s32.totalorder %v532, 0
        %v2145 = vand.u32 %v532, 2139095040
        %v2146 = vshrl.u32 %v2145, 23
        %v2147 = vsub.s32 %v2146, 127
        %v2148 = vand.u32 2147483647, %v532
        %v2149 = vand.u32 %v2148, 8388607
        %v2150 = vor.u32 %v2149, 8388608
        %v2151 = vsub.s32 0, %v2150
        %v2152 = vadd.s32 %v2147, 1
        %vm2153 = vcmp.gt.s32.totalorder %v2152, 0
        %v2154 = vsel %vm2153, %v2152, 0
        %v2155 = vshrl.u32 %v2154, 5
        %v2156 = vand.u32 %v2154, 31
        %v2157 = vsub.s32 32, %v2156
        %v2158 = vshrl.u32 683565275, %v2157
        %v2159 = vshll.u32 683565275, %v2156
        %v2160 = vshrl.u32 2475754826, %v2157
        %v2161 = vor.u32 %v2159, %v2160
        %v2162 = vshll.u32 2475754826, %v2156
        %v2163 = vshrl.u32 2131351028, %v2157
        %v2164 = vor.u32 %v2162, %v2163
        %v2165 = vshll.u32 2131351028, %v2156
        %v2166 = vshrl.u32 2102212464, %v2157
        %v2167 = vor.u32 %v2165, %v2166
        %v2168 = vshll.u32 2102212464, %v2156
        %v2169 = vshrl.u32 920167782, %v2157
        %v2170 = vor.u32 %v2168, %v2169
        %v2171 = vshll.u32 920167782, %v2156
        %v2172 = vshrl.u32 1326507024, %v2157
        %v2173 = vor.u32 %v2171, %v2172
        %vm2174 = vcmp.lt.s32.totalorder %v2155, 1
        %vm2175 = vcmp.lt.s32.totalorder %v2155, 2
        %vm2176 = vcmp.lt.s32.totalorder %v2155, 3
        %vm2177 = vcmp.lt.s32.totalorder %v2155, 4
        %v2178 = vsel %vm2174, %v2158, %v2161
        %v2179 = vsel %vm2177, %v2167, 2102212464
        %v2180 = vsel %vm2176, %v2164, %v2179
        %v2181 = vsel %vm2175, %v2178, %v2180
        %v2182 = vsel %vm2174, %v2161, %v2164
        %v2183 = vsel %vm2177, %v2170, 920167782
        %v2184 = vsel %vm2176, %v2167, %v2183
        %v2185 = vsel %vm2175, %v2182, %v2184
        %v2186 = vsel %vm2174, %v2164, %v2167
        %v2187 = vsel %vm2177, %v2173, 1326507024
        %v2188 = vsel %vm2176, %v2170, %v2187
        %v2189 = vsel %vm2175, %v2186, %v2188
        %v2190 = vshll.u32 %v2150, 8
        %v2191 = vmul.u32.u64.compose %v2190, %v2189
        %v2192 = vextract.low.u32 %v2191
        %v2193 = vextract.high.u32 %v2191
        %v2194 = vmul.u32.u64.compose %v2190, %v2185
        %v2195 = vextract.low.u32 %v2194
        %v2196 = vextract.high.u32 %v2194
        %v2197 = vmul.u32 %v2190, %v2181
        %v2198 = vadd.s32 %v2193, %v2195
        %vm2199 = vc.u32 %v2193, %v2195
        %v2200 = vadd.s32 %v2196, 1
        %v2201 = vsel %vm2199, %v2200, %v2196
        %v2202 = vadd.s32 %v2197, %v2201
        %v2203 = vadd.s32 %v2202, 536870912
        %v2204 = vshrl.u32 %v2203, 30
        %v2205 = vshll.u32 %v2204, 30
        %v2206 = vsub.s32 %v2202, %v2205
        %vm2207 = vcmp.lt.s32.totalorder %v2206, 0
        %v2208 = vsub.s32 0, %v2206
        %v2209 = vsel %vm2207, %v2208, %v2206
        %v2210 = vclz %v2209
        %v2211 = vsub.s32 %v2210, 2
        %vm2212 = vcmp.gt.s32.totalorder 0, %v2211
        %v2213 = vsel %vm2212, 0, %v2211
        %v2214 = vsub.s32 32, %v2213
        %v2215 = vshll.u32 %v2206, %v2213
        %v2216 = vshrl.u32 %v2198, %v2214
        %v2217 = vor.u32 %v2215, %v2216
        %v2218 = vsub.s32 4294967266, %v2213
        %v2219 = vadd.s32 %v2218, 127
        %v2220 = vshll.u32 %v2219, 23
        %v2221 = vor.u32 4788187, %v2220
        %v2222 = vand.u32 2147483647, %v2221
        %v2224 = vcvt.s32.f32 %v2217
        %v2225 = vmul.f32 %v2224, %v2222
        %v2226 = vxor.u32 %v2225, 2147483648
        %v2227 = vsel %vm2144, %v2226, %v2225
        %v2228 = vsub.s32 4, %v2204
        %v2229 = vsel %vm2144, %v2228, %v2204
        %v2230 = vsel %vm2143, %v532, %v2227
        %v2231 = vsel %vm2143, 0, %v2229
        %v2232 = vcosq.f32.pop %v2230
        %v2233 = vsinq.f32.pop %v2230
        %vm2234 = vweird.f32 %v532
        %v2235 = vadd.s32 %v2231, 3
        %v2236 = vand.u32 %v2235, 3
        %vm2237 = vcmp.lt.s32.totalorder %v2236, 2
        %vm2238 = vcmp.eq.s32.totalorder %v2236, 0
        %v2239 = vxor.u32 %v2233, 2147483648
        %v2240 = vsel %vm2238, %v2232, %v2239
        %vm2241 = vcmp.eq.s32.totalorder %v2236, 2
        %v2242 = vxor.u32 %v2232, 2147483648
        %v2243 = vsel %vm2241, %v2242, %v2233
        %v2244 = vsel %vm2237, %v2240, %v2243
        %v2245 = vsel %vm2234, nan, %v2244
        %v2246 = vand.u32 2147483647, %v536
        %vm2247 = vcmp.le.f32.partialorder %v2246, 0.7853982
        %vm2248 = vcmp.lt.s32.totalorder %v536, 0
        %v2249 = vand.u32 %v536, 2139095040
        %v2250 = vshrl.u32 %v2249, 23
        %v2251 = vsub.s32 %v2250, 127
        %v2252 = vand.u32 2147483647, %v536
        %v2253 = vand.u32 %v2252, 8388607
        %v2254 = vor.u32 %v2253, 8388608
        %v2255 = vsub.s32 0, %v2254
        %v2256 = vadd.s32 %v2251, 1
        %vm2257 = vcmp.gt.s32.totalorder %v2256, 0
        %v2258 = vsel %vm2257, %v2256, 0
        %v2259 = vshrl.u32 %v2258, 5
        %v2260 = vand.u32 %v2258, 31
        %v2261 = vsub.s32 32, %v2260
        %v2262 = vshrl.u32 683565275, %v2261
        %v2263 = vshll.u32 683565275, %v2260
        %v2264 = vshrl.u32 2475754826, %v2261
        %v2265 = vor.u32 %v2263, %v2264
        %v2266 = vshll.u32 2475754826, %v2260
        %v2267 = vshrl.u32 2131351028, %v2261
        %v2268 = vor.u32 %v2266, %v2267
        %v2269 = vshll.u32 2131351028, %v2260
        %v2270 = vshrl.u32 2102212464, %v2261
        %v2271 = vor.u32 %v2269, %v2270
        %v2272 = vshll.u32 2102212464, %v2260
        %v2273 = vshrl.u32 920167782, %v2261
        %v2274 = vor.u32 %v2272, %v2273
        %v2275 = vshll.u32 920167782, %v2260
        %v2276 = vshrl.u32 1326507024, %v2261
        %v2277 = vor.u32 %v2275, %v2276
        %vm2278 = vcmp.lt.s32.totalorder %v2259, 1
        %vm2279 = vcmp.lt.s32.totalorder %v2259, 2
        %vm2280 = vcmp.lt.s32.totalorder %v2259, 3
        %vm2281 = vcmp.lt.s32.totalorder %v2259, 4
        %v2282 = vsel %vm2278, %v2262, %v2265
        %v2283 = vsel %vm2281, %v2271, 2102212464
        %v2284 = vsel %vm2280, %v2268, %v2283
        %v2285 = vsel %vm2279, %v2282, %v2284
        %v2286 = vsel %vm2278, %v2265, %v2268
        %v2287 = vsel %vm2281, %v2274, 920167782
        %v2288 = vsel %vm2280, %v2271, %v2287
        %v2289 = vsel %vm2279, %v2286, %v2288
        %v2290 = vsel %vm2278, %v2268, %v2271
        %v2291 = vsel %vm2281, %v2277, 1326507024
        %v2292 = vsel %vm2280, %v2274, %v2291
        %v2293 = vsel %vm2279, %v2290, %v2292
        %v2294 = vshll.u32 %v2254, 8
        %v2295 = vmul.u32.u64.compose %v2294, %v2293
        %v2296 = vextract.low.u32 %v2295
        %v2297 = vextract.high.u32 %v2295
        %v2298 = vmul.u32.u64.compose %v2294, %v2289
        %v2299 = vextract.low.u32 %v2298
        %v2300 = vextract.high.u32 %v2298
        %v2301 = vmul.u32 %v2294, %v2285
        %v2302 = vadd.s32 %v2297, %v2299
        %vm2303 = vc.u32 %v2297, %v2299
        %v2304 = vadd.s32 %v2300, 1
        %v2305 = vsel %vm2303, %v2304, %v2300
        %v2306 = vadd.s32 %v2301, %v2305
        %v2307 = vadd.s32 %v2306, 536870912
        %v2308 = vshrl.u32 %v2307, 30
        %v2309 = vshll.u32 %v2308, 30
        %v2310 = vsub.s32 %v2306, %v2309
        %vm2311 = vcmp.lt.s32.totalorder %v2310, 0
        %v2312 = vsub.s32 0, %v2310
        %v2313 = vsel %vm2311, %v2312, %v2310
        %v2314 = vclz %v2313
        %v2315 = vsub.s32 %v2314, 2
        %vm2316 = vcmp.gt.s32.totalorder 0, %v2315
        %v2317 = vsel %vm2316, 0, %v2315
        %v2318 = vsub.s32 32, %v2317
        %v2319 = vshll.u32 %v2310, %v2317
        %v2320 = vshrl.u32 %v2302, %v2318
        %v2321 = vor.u32 %v2319, %v2320
        %v2322 = vsub.s32 4294967266, %v2317
        %v2323 = vadd.s32 %v2322, 127
        %v2324 = vshll.u32 %v2323, 23
        %v2325 = vor.u32 4788187, %v2324
        %v2326 = vand.u32 2147483647, %v2325
        %v2328 = vcvt.s32.f32 %v2321
        %v2329 = vmul.f32 %v2328, %v2326
        %v2330 = vxor.u32 %v2329, 2147483648
        %v2331 = vsel %vm2248, %v2330, %v2329
        %v2332 = vsub.s32 4, %v2308
        %v2333 = vsel %vm2248, %v2332, %v2308
        %v2334 = vsel %vm2247, %v536, %v2331
        %v2335 = vsel %vm2247, 0, %v2333
        %v2336 = vcosq.f32.pop %v2334
        %v2337 = vsinq.f32.pop %v2334
        %vm2338 = vweird.f32 %v536
        %v2339 = vadd.s32 %v2335, 3
        %v2340 = vand.u32 %v2339, 3
        %vm2341 = vcmp.lt.s32.totalorder %v2340, 2
        %vm2342 = vcmp.eq.s32.totalorder %v2340, 0
        %v2343 = vxor.u32 %v2337, 2147483648
        %v2344 = vsel %vm2342, %v2336, %v2343
        %vm2345 = vcmp.eq.s32.totalorder %v2340, 2
        %v2346 = vxor.u32 %v2336, 2147483648
        %v2347 = vsel %vm2345, %v2346, %v2337
        %v2348 = vsel %vm2341, %v2344, %v2347
        %v2349 = vsel %vm2338, nan, %v2348
        %v2350 = vand.u32 2147483647, %v538
        %vm2351 = vcmp.le.f32.partialorder %v2350, 0.7853982
        %vm2352 = vcmp.lt.s32.totalorder %v538, 0
        %v2353 = vand.u32 %v538, 2139095040
        %v2354 = vshrl.u32 %v2353, 23
        %v2355 = vsub.s32 %v2354, 127
        %v2356 = vand.u32 2147483647, %v538
        %v2357 = vand.u32 %v2356, 8388607
        %v2358 = vor.u32 %v2357, 8388608
        %v2359 = vsub.s32 0, %v2358
        %v2360 = vadd.s32 %v2355, 1
        %vm2361 = vcmp.gt.s32.totalorder %v2360, 0
        %v2362 = vsel %vm2361, %v2360, 0
        %v2363 = vshrl.u32 %v2362, 5
        %v2364 = vand.u32 %v2362, 31
        %v2365 = vsub.s32 32, %v2364
        %v2366 = vshrl.u32 683565275, %v2365
        %v2367 = vshll.u32 683565275, %v2364
        %v2368 = vshrl.u32 2475754826, %v2365
        %v2369 = vor.u32 %v2367, %v2368
        %v2370 = vshll.u32 2475754826, %v2364
        %v2371 = vshrl.u32 2131351028, %v2365
        %v2372 = vor.u32 %v2370, %v2371
        %v2373 = vshll.u32 2131351028, %v2364
        %v2374 = vshrl.u32 2102212464, %v2365
        %v2375 = vor.u32 %v2373, %v2374
        %v2376 = vshll.u32 2102212464, %v2364
        %v2377 = vshrl.u32 920167782, %v2365
        %v2378 = vor.u32 %v2376, %v2377
        %v2379 = vshll.u32 920167782, %v2364
        %v2380 = vshrl.u32 1326507024, %v2365
        %v2381 = vor.u32 %v2379, %v2380
        %vm2382 = vcmp.lt.s32.totalorder %v2363, 1
        %vm2383 = vcmp.lt.s32.totalorder %v2363, 2
        %vm2384 = vcmp.lt.s32.totalorder %v2363, 3
        %vm2385 = vcmp.lt.s32.totalorder %v2363, 4
        %v2386 = vsel %vm2382, %v2366, %v2369
        %v2387 = vsel %vm2385, %v2375, 2102212464
        %v2388 = vsel %vm2384, %v2372, %v2387
        %v2389 = vsel %vm2383, %v2386, %v2388
        %v2390 = vsel %vm2382, %v2369, %v2372
        %v2391 = vsel %vm2385, %v2378, 920167782
        %v2392 = vsel %vm2384, %v2375, %v2391
        %v2393 = vsel %vm2383, %v2390, %v2392
        %v2394 = vsel %vm2382, %v2372, %v2375
        %v2395 = vsel %vm2385, %v2381, 1326507024
        %v2396 = vsel %vm2384, %v2378, %v2395
        %v2397 = vsel %vm2383, %v2394, %v2396
        %v2398 = vshll.u32 %v2358, 8
        %v2399 = vmul.u32.u64.compose %v2398, %v2397
        %v2400 = vextract.low.u32 %v2399
        %v2401 = vextract.high.u32 %v2399
        %v2402 = vmul.u32.u64.compose %v2398, %v2393
        %v2403 = vextract.low.u32 %v2402
        %v2404 = vextract.high.u32 %v2402
        %v2405 = vmul.u32 %v2398, %v2389
        %v2406 = vadd.s32 %v2401, %v2403
        %vm2407 = vc.u32 %v2401, %v2403
        %v2408 = vadd.s32 %v2404, 1
        %v2409 = vsel %vm2407, %v2408, %v2404
        %v2410 = vadd.s32 %v2405, %v2409
        %v2411 = vadd.s32 %v2410, 536870912
        %v2412 = vshrl.u32 %v2411, 30
        %v2413 = vshll.u32 %v2412, 30
        %v2414 = vsub.s32 %v2410, %v2413
        %vm2415 = vcmp.lt.s32.totalorder %v2414, 0
        %v2416 = vsub.s32 0, %v2414
        %v2417 = vsel %vm2415, %v2416, %v2414
        %v2418 = vclz %v2417
        %v2419 = vsub.s32 %v2418, 2
        %vm2420 = vcmp.gt.s32.totalorder 0, %v2419
        %v2421 = vsel %vm2420, 0, %v2419
        %v2422 = vsub.s32 32, %v2421
        %v2423 = vshll.u32 %v2414, %v2421
        %v2424 = vshrl.u32 %v2406, %v2422
        %v2425 = vor.u32 %v2423, %v2424
        %v2426 = vsub.s32 4294967266, %v2421
        %v2427 = vadd.s32 %v2426, 127
        %v2428 = vshll.u32 %v2427, 23
        %v2429 = vor.u32 4788187, %v2428
        %v2430 = vand.u32 2147483647, %v2429
        %v2432 = vcvt.s32.f32 %v2425
        %v2433 = vmul.f32 %v2432, %v2430
        %v2434 = vxor.u32 %v2433, 2147483648
        %v2435 = vsel %vm2352, %v2434, %v2433
        %v2436 = vsub.s32 4, %v2412
        %v2437 = vsel %vm2352, %v2436, %v2412
        %v2438 = vsel %vm2351, %v538, %v2435
        %v2439 = vsel %vm2351, 0, %v2437
        %v2440 = vcosq.f32.pop %v2438
        %v2441 = vsinq.f32.pop %v2438
        %vm2442 = vweird.f32 %v538
        %v2443 = vadd.s32 %v2439, 3
        %v2444 = vand.u32 %v2443, 3
        %vm2445 = vcmp.lt.s32.totalorder %v2444, 2
        %vm2446 = vcmp.eq.s32.totalorder %v2444, 0
        %v2447 = vxor.u32 %v2441, 2147483648
        %v2448 = vsel %vm2446, %v2440, %v2447
        %vm2449 = vcmp.eq.s32.totalorder %v2444, 2
        %v2450 = vxor.u32 %v2440, 2147483648
        %v2451 = vsel %vm2449, %v2450, %v2441
        %v2452 = vsel %vm2445, %v2448, %v2451
        %v2453 = vsel %vm2442, nan, %v2452
        %v2454 = vand.u32 2147483647, %v542
        %vm2455 = vcmp.le.f32.partialorder %v2454, 0.7853982
        %vm2456 = vcmp.lt.s32.totalorder %v542, 0
        %v2457 = vand.u32 %v542, 2139095040
        %v2458 = vshrl.u32 %v2457, 23
        %v2459 = vsub.s32 %v2458, 127
        %v2460 = vand.u32 2147483647, %v542
        %v2461 = vand.u32 %v2460, 8388607
        %v2462 = vor.u32 %v2461, 8388608
        %v2463 = vsub.s32 0, %v2462
        %v2464 = vadd.s32 %v2459, 1
        %vm2465 = vcmp.gt.s32.totalorder %v2464, 0
        %v2466 = vsel %vm2465, %v2464, 0
        %v2467 = vshrl.u32 %v2466, 5
        %v2468 = vand.u32 %v2466, 31
        %v2469 = vsub.s32 32, %v2468
        %v2470 = vshrl.u32 683565275, %v2469
        %v2471 = vshll.u32 683565275, %v2468
        %v2472 = vshrl.u32 2475754826, %v2469
        %v2473 = vor.u32 %v2471, %v2472
        %v2474 = vshll.u32 2475754826, %v2468
        %v2475 = vshrl.u32 2131351028, %v2469
        %v2476 = vor.u32 %v2474, %v2475
        %v2477 = vshll.u32 2131351028, %v2468
        %v2478 = vshrl.u32 2102212464, %v2469
        %v2479 = vor.u32 %v2477, %v2478
        %v2480 = vshll.u32 2102212464, %v2468
        %v2481 = vshrl.u32 920167782, %v2469
        %v2482 = vor.u32 %v2480, %v2481
        %v2483 = vshll.u32 920167782, %v2468
        %v2484 = vshrl.u32 1326507024, %v2469
        %v2485 = vor.u32 %v2483, %v2484
        %vm2486 = vcmp.lt.s32.totalorder %v2467, 1
        %vm2487 = vcmp.lt.s32.totalorder %v2467, 2
        %vm2488 = vcmp.lt.s32.totalorder %v2467, 3
        %vm2489 = vcmp.lt.s32.totalorder %v2467, 4
        %v2490 = vsel %vm2486, %v2470, %v2473
        %v2491 = vsel %vm2489, %v2479, 2102212464
        %v2492 = vsel %vm2488, %v2476, %v2491
        %v2493 = vsel %vm2487, %v2490, %v2492
        %v2494 = vsel %vm2486, %v2473, %v2476
        %v2495 = vsel %vm2489, %v2482, 920167782
        %v2496 = vsel %vm2488, %v2479, %v2495
        %v2497 = vsel %vm2487, %v2494, %v2496
        %v2498 = vsel %vm2486, %v2476, %v2479
        %v2499 = vsel %vm2489, %v2485, 1326507024
        %v2500 = vsel %vm2488, %v2482, %v2499
        %v2501 = vsel %vm2487, %v2498, %v2500
        %v2502 = vshll.u32 %v2462, 8
        %v2503 = vmul.u32.u64.compose %v2502, %v2501
        %v2504 = vextract.low.u32 %v2503
        %v2505 = vextract.high.u32 %v2503
        %v2506 = vmul.u32.u64.compose %v2502, %v2497
        %v2507 = vextract.low.u32 %v2506
        %v2508 = vextract.high.u32 %v2506
        %v2509 = vmul.u32 %v2502, %v2493
        %v2510 = vadd.s32 %v2505, %v2507
        %vm2511 = vc.u32 %v2505, %v2507
        %v2512 = vadd.s32 %v2508, 1
        %v2513 = vsel %vm2511, %v2512, %v2508
        %v2514 = vadd.s32 %v2509, %v2513
        %v2515 = vadd.s32 %v2514, 536870912
        %v2516 = vshrl.u32 %v2515, 30
        %v2517 = vshll.u32 %v2516, 30
        %v2518 = vsub.s32 %v2514, %v2517
        %vm2519 = vcmp.lt.s32.totalorder %v2518, 0
        %v2520 = vsub.s32 0, %v2518
        %v2521 = vsel %vm2519, %v2520, %v2518
        %v2522 = vclz %v2521
        %v2523 = vsub.s32 %v2522, 2
        %vm2524 = vcmp.gt.s32.totalorder 0, %v2523
        %v2525 = vsel %vm2524, 0, %v2523
        %v2526 = vsub.s32 32, %v2525
        %v2527 = vshll.u32 %v2518, %v2525
        %v2528 = vshrl.u32 %v2510, %v2526
        %v2529 = vor.u32 %v2527, %v2528
        %v2530 = vsub.s32 4294967266, %v2525
        %v2531 = vadd.s32 %v2530, 127
        %v2532 = vshll.u32 %v2531, 23
        %v2533 = vor.u32 4788187, %v2532
        %v2534 = vand.u32 2147483647, %v2533
        %v2536 = vcvt.s32.f32 %v2529
        %v2537 = vmul.f32 %v2536, %v2534
        %v2538 = vxor.u32 %v2537, 2147483648
        %v2539 = vsel %vm2456, %v2538, %v2537
        %v2540 = vsub.s32 4, %v2516
        %v2541 = vsel %vm2456, %v2540, %v2516
        %v2542 = vsel %vm2455, %v542, %v2539
        %v2543 = vsel %vm2455, 0, %v2541
        %v2544 = vcosq.f32.pop %v2542
        %v2545 = vsinq.f32.pop %v2542
        %vm2546 = vweird.f32 %v542
        %v2547 = vadd.s32 %v2543, 3
        %v2548 = vand.u32 %v2547, 3
        %vm2549 = vcmp.lt.s32.totalorder %v2548, 2
        %vm2550 = vcmp.eq.s32.totalorder %v2548, 0
        %v2551 = vxor.u32 %v2545, 2147483648
        %v2552 = vsel %vm2550, %v2544, %v2551
        %vm2553 = vcmp.eq.s32.totalorder %v2548, 2
        %v2554 = vxor.u32 %v2544, 2147483648
        %v2555 = vsel %vm2553, %v2554, %v2545
        %v2556 = vsel %vm2549, %v2552, %v2555
        %v2557 = vsel %vm2546, nan, %v2556
        %v2558 = vand.u32 2147483647, %v544
        %vm2559 = vcmp.le.f32.partialorder %v2558, 0.7853982
        %vm2560 = vcmp.lt.s32.totalorder %v544, 0
        %v2561 = vand.u32 %v544, 2139095040
        %v2562 = vshrl.u32 %v2561, 23
        %v2563 = vsub.s32 %v2562, 127
        %v2564 = vand.u32 2147483647, %v544
        %v2565 = vand.u32 %v2564, 8388607
        %v2566 = vor.u32 %v2565, 8388608
        %v2567 = vsub.s32 0, %v2566
        %v2568 = vadd.s32 %v2563, 1
        %vm2569 = vcmp.gt.s32.totalorder %v2568, 0
        %v2570 = vsel %vm2569, %v2568, 0
        %v2571 = vshrl.u32 %v2570, 5
        %v2572 = vand.u32 %v2570, 31
        %v2573 = vsub.s32 32, %v2572
        %v2574 = vshrl.u32 683565275, %v2573
        %v2575 = vshll.u32 683565275, %v2572
        %v2576 = vshrl.u32 2475754826, %v2573
        %v2577 = vor.u32 %v2575, %v2576
        %v2578 = vshll.u32 2475754826, %v2572
        %v2579 = vshrl.u32 2131351028, %v2573
        %v2580 = vor.u32 %v2578, %v2579
        %v2581 = vshll.u32 2131351028, %v2572
        %v2582 = vshrl.u32 2102212464, %v2573
        %v2583 = vor.u32 %v2581, %v2582
        %v2584 = vshll.u32 2102212464, %v2572
        %v2585 = vshrl.u32 920167782, %v2573
        %v2586 = vor.u32 %v2584, %v2585
        %v2587 = vshll.u32 920167782, %v2572
        %v2588 = vshrl.u32 1326507024, %v2573
        %v2589 = vor.u32 %v2587, %v2588
        %vm2590 = vcmp.lt.s32.totalorder %v2571, 1
        %vm2591 = vcmp.lt.s32.totalorder %v2571, 2
        %vm2592 = vcmp.lt.s32.totalorder %v2571, 3
        %vm2593 = vcmp.lt.s32.totalorder %v2571, 4
        %v2594 = vsel %vm2590, %v2574, %v2577
        %v2595 = vsel %vm2593, %v2583, 2102212464
        %v2596 = vsel %vm2592, %v2580, %v2595
        %v2597 = vsel %vm2591, %v2594, %v2596
        %v2598 = vsel %vm2590, %v2577, %v2580
        %v2599 = vsel %vm2593, %v2586, 920167782
        %v2600 = vsel %vm2592, %v2583, %v2599
        %v2601 = vsel %vm2591, %v2598, %v2600
        %v2602 = vsel %vm2590, %v2580, %v2583
        %v2603 = vsel %vm2593, %v2589, 1326507024
        %v2604 = vsel %vm2592, %v2586, %v2603
        %v2605 = vsel %vm2591, %v2602, %v2604
        %v2606 = vshll.u32 %v2566, 8
        %v2607 = vmul.u32.u64.compose %v2606, %v2605
        %v2608 = vextract.low.u32 %v2607
        %v2609 = vextract.high.u32 %v2607
        %v2610 = vmul.u32.u64.compose %v2606, %v2601
        %v2611 = vextract.low.u32 %v2610
        %v2612 = vextract.high.u32 %v2610
        %v2613 = vmul.u32 %v2606, %v2597
        %v2614 = vadd.s32 %v2609, %v2611
        %vm2615 = vc.u32 %v2609, %v2611
        %v2616 = vadd.s32 %v2612, 1
        %v2617 = vsel %vm2615, %v2616, %v2612
        %v2618 = vadd.s32 %v2613, %v2617
        %v2619 = vadd.s32 %v2618, 536870912
        %v2620 = vshrl.u32 %v2619, 30
        %v2621 = vshll.u32 %v2620, 30
        %v2622 = vsub.s32 %v2618, %v2621
        %vm2623 = vcmp.lt.s32.totalorder %v2622, 0
        %v2624 = vsub.s32 0, %v2622
        %v2625 = vsel %vm2623, %v2624, %v2622
        %v2626 = vclz %v2625
        %v2627 = vsub.s32 %v2626, 2
        %vm2628 = vcmp.gt.s32.totalorder 0, %v2627
        %v2629 = vsel %vm2628, 0, %v2627
        %v2630 = vsub.s32 32, %v2629
        %v2631 = vshll.u32 %v2622, %v2629
        %v2632 = vshrl.u32 %v2614, %v2630
        %v2633 = vor.u32 %v2631, %v2632
        %v2634 = vsub.s32 4294967266, %v2629
        %v2635 = vadd.s32 %v2634, 127
        %v2636 = vshll.u32 %v2635, 23
        %v2637 = vor.u32 4788187, %v2636
        %v2638 = vand.u32 2147483647, %v2637
        %v2640 = vcvt.s32.f32 %v2633
        %v2641 = vmul.f32 %v2640, %v2638
        %v2642 = vxor.u32 %v2641, 2147483648
        %v2643 = vsel %vm2560, %v2642, %v2641
        %v2644 = vsub.s32 4, %v2620
        %v2645 = vsel %vm2560, %v2644, %v2620
        %v2646 = vsel %vm2559, %v544, %v2643
        %v2647 = vsel %vm2559, 0, %v2645
        %v2648 = vcosq.f32.pop %v2646
        %v2649 = vsinq.f32.pop %v2646
        %vm2650 = vweird.f32 %v544
        %v2651 = vadd.s32 %v2647, 3
        %v2652 = vand.u32 %v2651, 3
        %vm2653 = vcmp.lt.s32.totalorder %v2652, 2
        %vm2654 = vcmp.eq.s32.totalorder %v2652, 0
        %v2655 = vxor.u32 %v2649, 2147483648
        %v2656 = vsel %vm2654, %v2648, %v2655
        %vm2657 = vcmp.eq.s32.totalorder %v2652, 2
        %v2658 = vxor.u32 %v2648, 2147483648
        %v2659 = vsel %vm2657, %v2658, %v2649
        %v2660 = vsel %vm2653, %v2656, %v2659
        %v2661 = vsel %vm2650, nan, %v2660
        %v2662 = vand.u32 2147483647, %v548
        %vm2663 = vcmp.le.f32.partialorder %v2662, 0.7853982
        %vm2664 = vcmp.lt.s32.totalorder %v548, 0
        %v2665 = vand.u32 %v548, 2139095040
        %v2666 = vshrl.u32 %v2665, 23
        %v2667 = vsub.s32 %v2666, 127
        %v2668 = vand.u32 2147483647, %v548
        %v2669 = vand.u32 %v2668, 8388607
        %v2670 = vor.u32 %v2669, 8388608
        %v2671 = vsub.s32 0, %v2670
        %v2672 = vadd.s32 %v2667, 1
        %vm2673 = vcmp.gt.s32.totalorder %v2672, 0
        %v2674 = vsel %vm2673, %v2672, 0
        %v2675 = vshrl.u32 %v2674, 5
        %v2676 = vand.u32 %v2674, 31
        %v2677 = vsub.s32 32, %v2676
        %v2678 = vshrl.u32 683565275, %v2677
        %v2679 = vshll.u32 683565275, %v2676
        %v2680 = vshrl.u32 2475754826, %v2677
        %v2681 = vor.u32 %v2679, %v2680
        %v2682 = vshll.u32 2475754826, %v2676
        %v2683 = vshrl.u32 2131351028, %v2677
        %v2684 = vor.u32 %v2682, %v2683
        %v2685 = vshll.u32 2131351028, %v2676
        %v2686 = vshrl.u32 2102212464, %v2677
        %v2687 = vor.u32 %v2685, %v2686
        %v2688 = vshll.u32 2102212464, %v2676
        %v2689 = vshrl.u32 920167782, %v2677
        %v2690 = vor.u32 %v2688, %v2689
        %v2691 = vshll.u32 920167782, %v2676
        %v2692 = vshrl.u32 1326507024, %v2677
        %v2693 = vor.u32 %v2691, %v2692
        %vm2694 = vcmp.lt.s32.totalorder %v2675, 1
        %vm2695 = vcmp.lt.s32.totalorder %v2675, 2
        %vm2696 = vcmp.lt.s32.totalorder %v2675, 3
        %vm2697 = vcmp.lt.s32.totalorder %v2675, 4
        %v2698 = vsel %vm2694, %v2678, %v2681
        %v2699 = vsel %vm2697, %v2687, 2102212464
        %v2700 = vsel %vm2696, %v2684, %v2699
        %v2701 = vsel %vm2695, %v2698, %v2700
        %v2702 = vsel %vm2694, %v2681, %v2684
        %v2703 = vsel %vm2697, %v2690, 920167782
        %v2704 = vsel %vm2696, %v2687, %v2703
        %v2705 = vsel %vm2695, %v2702, %v2704
        %v2706 = vsel %vm2694, %v2684, %v2687
        %v2707 = vsel %vm2697, %v2693, 1326507024
        %v2708 = vsel %vm2696, %v2690, %v2707
        %v2709 = vsel %vm2695, %v2706, %v2708
        %v2710 = vshll.u32 %v2670, 8
        %v2711 = vmul.u32.u64.compose %v2710, %v2709
        %v2712 = vextract.low.u32 %v2711
        %v2713 = vextract.high.u32 %v2711
        %v2714 = vmul.u32.u64.compose %v2710, %v2705
        %v2715 = vextract.low.u32 %v2714
        %v2716 = vextract.high.u32 %v2714
        %v2717 = vmul.u32 %v2710, %v2701
        %v2718 = vadd.s32 %v2713, %v2715
        %vm2719 = vc.u32 %v2713, %v2715
        %v2720 = vadd.s32 %v2716, 1
        %v2721 = vsel %vm2719, %v2720, %v2716
        %v2722 = vadd.s32 %v2717, %v2721
        %v2723 = vadd.s32 %v2722, 536870912
        %v2724 = vshrl.u32 %v2723, 30
        %v2725 = vshll.u32 %v2724, 30
        %v2726 = vsub.s32 %v2722, %v2725
        %vm2727 = vcmp.lt.s32.totalorder %v2726, 0
        %v2728 = vsub.s32 0, %v2726
        %v2729 = vsel %vm2727, %v2728, %v2726
        %v2730 = vclz %v2729
        %v2731 = vsub.s32 %v2730, 2
        %vm2732 = vcmp.gt.s32.totalorder 0, %v2731
        %v2733 = vsel %vm2732, 0, %v2731
        %v2734 = vsub.s32 32, %v2733
        %v2735 = vshll.u32 %v2726, %v2733
        %v2736 = vshrl.u32 %v2718, %v2734
        %v2737 = vor.u32 %v2735, %v2736
        %v2738 = vsub.s32 4294967266, %v2733
        %v2739 = vadd.s32 %v2738, 127
        %v2740 = vshll.u32 %v2739, 23
        %v2741 = vor.u32 4788187, %v2740
        %v2742 = vand.u32 2147483647, %v2741
        %v2744 = vcvt.s32.f32 %v2737
        %v2745 = vmul.f32 %v2744, %v2742
        %v2746 = vxor.u32 %v2745, 2147483648
        %v2747 = vsel %vm2664, %v2746, %v2745
        %v2748 = vsub.s32 4, %v2724
        %v2749 = vsel %vm2664, %v2748, %v2724
        %v2750 = vsel %vm2663, %v548, %v2747
        %v2751 = vsel %vm2663, 0, %v2749
        %v2752 = vcosq.f32.pop %v2750
        %v2753 = vsinq.f32.pop %v2750
        %vm2754 = vweird.f32 %v548
        %v2755 = vadd.s32 %v2751, 3
        %v2756 = vand.u32 %v2755, 3
        %vm2757 = vcmp.lt.s32.totalorder %v2756, 2
        %vm2758 = vcmp.eq.s32.totalorder %v2756, 0
        %v2759 = vxor.u32 %v2753, 2147483648
        %v2760 = vsel %vm2758, %v2752, %v2759
        %vm2761 = vcmp.eq.s32.totalorder %v2756, 2
        %v2762 = vxor.u32 %v2752, 2147483648
        %v2763 = vsel %vm2761, %v2762, %v2753
        %v2764 = vsel %vm2757, %v2760, %v2763
        %v2765 = vsel %vm2754, nan, %v2764
        %v2766 = vand.u32 2147483647, %v550
        %vm2767 = vcmp.le.f32.partialorder %v2766, 0.7853982
        %vm2768 = vcmp.lt.s32.totalorder %v550, 0
        %v2769 = vand.u32 %v550, 2139095040
        %v2770 = vshrl.u32 %v2769, 23
        %v2771 = vsub.s32 %v2770, 127
        %v2772 = vand.u32 2147483647, %v550
        %v2773 = vand.u32 %v2772, 8388607
        %v2774 = vor.u32 %v2773, 8388608
        %v2775 = vsub.s32 0, %v2774
        %v2776 = vadd.s32 %v2771, 1
        %vm2777 = vcmp.gt.s32.totalorder %v2776, 0
        %v2778 = vsel %vm2777, %v2776, 0
        %v2779 = vshrl.u32 %v2778, 5
        %v2780 = vand.u32 %v2778, 31
        %v2781 = vsub.s32 32, %v2780
        %v2782 = vshrl.u32 683565275, %v2781
        %v2783 = vshll.u32 683565275, %v2780
        %v2784 = vshrl.u32 2475754826, %v2781
        %v2785 = vor.u32 %v2783, %v2784
        %v2786 = vshll.u32 2475754826, %v2780
        %v2787 = vshrl.u32 2131351028, %v2781
        %v2788 = vor.u32 %v2786, %v2787
        %v2789 = vshll.u32 2131351028, %v2780
        %v2790 = vshrl.u32 2102212464, %v2781
        %v2791 = vor.u32 %v2789, %v2790
        %v2792 = vshll.u32 2102212464, %v2780
        %v2793 = vshrl.u32 920167782, %v2781
        %v2794 = vor.u32 %v2792, %v2793
        %v2795 = vshll.u32 920167782, %v2780
        %v2796 = vshrl.u32 1326507024, %v2781
        %v2797 = vor.u32 %v2795, %v2796
        %vm2798 = vcmp.lt.s32.totalorder %v2779, 1
        %vm2799 = vcmp.lt.s32.totalorder %v2779, 2
        %vm2800 = vcmp.lt.s32.totalorder %v2779, 3
        %vm2801 = vcmp.lt.s32.totalorder %v2779, 4
        %v2802 = vsel %vm2798, %v2782, %v2785
        %v2803 = vsel %vm2801, %v2791, 2102212464
        %v2804 = vsel %vm2800, %v2788, %v2803
        %v2805 = vsel %vm2799, %v2802, %v2804
        %v2806 = vsel %vm2798, %v2785, %v2788
        %v2807 = vsel %vm2801, %v2794, 920167782
        %v2808 = vsel %vm2800, %v2791, %v2807
        %v2809 = vsel %vm2799, %v2806, %v2808
        %v2810 = vsel %vm2798, %v2788, %v2791
        %v2811 = vsel %vm2801, %v2797, 1326507024
        %v2812 = vsel %vm2800, %v2794, %v2811
        %v2813 = vsel %vm2799, %v2810, %v2812
        %v2814 = vshll.u32 %v2774, 8
        %v2815 = vmul.u32.u64.compose %v2814, %v2813
        %v2816 = vextract.low.u32 %v2815
        %v2817 = vextract.high.u32 %v2815
        %v2818 = vmul.u32.u64.compose %v2814, %v2809
        %v2819 = vextract.low.u32 %v2818
        %v2820 = vextract.high.u32 %v2818
        %v2821 = vmul.u32 %v2814, %v2805
        %v2822 = vadd.s32 %v2817, %v2819
        %vm2823 = vc.u32 %v2817, %v2819
        %v2824 = vadd.s32 %v2820, 1
        %v2825 = vsel %vm2823, %v2824, %v2820
        %v2826 = vadd.s32 %v2821, %v2825
        %v2827 = vadd.s32 %v2826, 536870912
        %v2828 = vshrl.u32 %v2827, 30
        %v2829 = vshll.u32 %v2828, 30
        %v2830 = vsub.s32 %v2826, %v2829
        %vm2831 = vcmp.lt.s32.totalorder %v2830, 0
        %v2832 = vsub.s32 0, %v2830
        %v2833 = vsel %vm2831, %v2832, %v2830
        %v2834 = vclz %v2833
        %v2835 = vsub.s32 %v2834, 2
        %vm2836 = vcmp.gt.s32.totalorder 0, %v2835
        %v2837 = vsel %vm2836, 0, %v2835
        %v2838 = vsub.s32 32, %v2837
        %v2839 = vshll.u32 %v2830, %v2837
        %v2840 = vshrl.u32 %v2822, %v2838
        %v2841 = vor.u32 %v2839, %v2840
        %v2842 = vsub.s32 4294967266, %v2837
        %v2843 = vadd.s32 %v2842, 127
        %v2844 = vshll.u32 %v2843, 23
        %v2845 = vor.u32 4788187, %v2844
        %v2846 = vand.u32 2147483647, %v2845
        %v2848 = vcvt.s32.f32 %v2841
        %v2849 = vmul.f32 %v2848, %v2846
        %v2850 = vxor.u32 %v2849, 2147483648
        %v2851 = vsel %vm2768, %v2850, %v2849
        %v2852 = vsub.s32 4, %v2828
        %v2853 = vsel %vm2768, %v2852, %v2828
        %v2854 = vsel %vm2767, %v550, %v2851
        %v2855 = vsel %vm2767, 0, %v2853
        %v2856 = vcosq.f32.pop %v2854
        %v2857 = vsinq.f32.pop %v2854
        %vm2858 = vweird.f32 %v550
        %v2859 = vadd.s32 %v2855, 3
        %v2860 = vand.u32 %v2859, 3
        %vm2861 = vcmp.lt.s32.totalorder %v2860, 2
        %vm2862 = vcmp.eq.s32.totalorder %v2860, 0
        %v2863 = vxor.u32 %v2857, 2147483648
        %v2864 = vsel %vm2862, %v2856, %v2863
        %vm2865 = vcmp.eq.s32.totalorder %v2860, 2
        %v2866 = vxor.u32 %v2856, 2147483648
        %v2867 = vsel %vm2865, %v2866, %v2857
        %v2868 = vsel %vm2861, %v2864, %v2867
        %v2869 = vsel %vm2858, nan, %v2868
        %v2870 = vand.u32 2147483647, %v554
        %vm2871 = vcmp.le.f32.partialorder %v2870, 0.7853982
        %vm2872 = vcmp.lt.s32.totalorder %v554, 0
        %v2873 = vand.u32 %v554, 2139095040
        %v2874 = vshrl.u32 %v2873, 23
        %v2875 = vsub.s32 %v2874, 127
        %v2876 = vand.u32 2147483647, %v554
        %v2877 = vand.u32 %v2876, 8388607
        %v2878 = vor.u32 %v2877, 8388608
        %v2879 = vsub.s32 0, %v2878
        %v2880 = vadd.s32 %v2875, 1
        %vm2881 = vcmp.gt.s32.totalorder %v2880, 0
        %v2882 = vsel %vm2881, %v2880, 0
        %v2883 = vshrl.u32 %v2882, 5
        %v2884 = vand.u32 %v2882, 31
        %v2885 = vsub.s32 32, %v2884
        %v2886 = vshrl.u32 683565275, %v2885
        %v2887 = vshll.u32 683565275, %v2884
        %v2888 = vshrl.u32 2475754826, %v2885
        %v2889 = vor.u32 %v2887, %v2888
        %v2890 = vshll.u32 2475754826, %v2884
        %v2891 = vshrl.u32 2131351028, %v2885
        %v2892 = vor.u32 %v2890, %v2891
        %v2893 = vshll.u32 2131351028, %v2884
        %v2894 = vshrl.u32 2102212464, %v2885
        %v2895 = vor.u32 %v2893, %v2894
        %v2896 = vshll.u32 2102212464, %v2884
        %v2897 = vshrl.u32 920167782, %v2885
        %v2898 = vor.u32 %v2896, %v2897
        %v2899 = vshll.u32 920167782, %v2884
        %v2900 = vshrl.u32 1326507024, %v2885
        %v2901 = vor.u32 %v2899, %v2900
        %vm2902 = vcmp.lt.s32.totalorder %v2883, 1
        %vm2903 = vcmp.lt.s32.totalorder %v2883, 2
        %vm2904 = vcmp.lt.s32.totalorder %v2883, 3
        %vm2905 = vcmp.lt.s32.totalorder %v2883, 4
        %v2906 = vsel %vm2902, %v2886, %v2889
        %v2907 = vsel %vm2905, %v2895, 2102212464
        %v2908 = vsel %vm2904, %v2892, %v2907
        %v2909 = vsel %vm2903, %v2906, %v2908
        %v2910 = vsel %vm2902, %v2889, %v2892
        %v2911 = vsel %vm2905, %v2898, 920167782
        %v2912 = vsel %vm2904, %v2895, %v2911
        %v2913 = vsel %vm2903, %v2910, %v2912
        %v2914 = vsel %vm2902, %v2892, %v2895
        %v2915 = vsel %vm2905, %v2901, 1326507024
        %v2916 = vsel %vm2904, %v2898, %v2915
        %v2917 = vsel %vm2903, %v2914, %v2916
        %v2918 = vshll.u32 %v2878, 8
        %v2919 = vmul.u32.u64.compose %v2918, %v2917
        %v2920 = vextract.low.u32 %v2919
        %v2921 = vextract.high.u32 %v2919
        %v2922 = vmul.u32.u64.compose %v2918, %v2913
        %v2923 = vextract.low.u32 %v2922
        %v2924 = vextract.high.u32 %v2922
        %v2925 = vmul.u32 %v2918, %v2909
        %v2926 = vadd.s32 %v2921, %v2923
        %vm2927 = vc.u32 %v2921, %v2923
        %v2928 = vadd.s32 %v2924, 1
        %v2929 = vsel %vm2927, %v2928, %v2924
        %v2930 = vadd.s32 %v2925, %v2929
        %v2931 = vadd.s32 %v2930, 536870912
        %v2932 = vshrl.u32 %v2931, 30
        %v2933 = vshll.u32 %v2932, 30
        %v2934 = vsub.s32 %v2930, %v2933
        %vm2935 = vcmp.lt.s32.totalorder %v2934, 0
        %v2936 = vsub.s32 0, %v2934
        %v2937 = vsel %vm2935, %v2936, %v2934
        %v2938 = vclz %v2937
        %v2939 = vsub.s32 %v2938, 2
        %vm2940 = vcmp.gt.s32.totalorder 0, %v2939
        %v2941 = vsel %vm2940, 0, %v2939
        %v2942 = vsub.s32 32, %v2941
        %v2943 = vshll.u32 %v2934, %v2941
        %v2944 = vshrl.u32 %v2926, %v2942
        %v2945 = vor.u32 %v2943, %v2944
        %v2946 = vsub.s32 4294967266, %v2941
        %v2947 = vadd.s32 %v2946, 127
        %v2948 = vshll.u32 %v2947, 23
        %v2949 = vor.u32 4788187, %v2948
        %v2950 = vand.u32 2147483647, %v2949
        %v2952 = vcvt.s32.f32 %v2945
        %v2953 = vmul.f32 %v2952, %v2950
        %v2954 = vxor.u32 %v2953, 2147483648
        %v2955 = vsel %vm2872, %v2954, %v2953
        %v2956 = vsub.s32 4, %v2932
        %v2957 = vsel %vm2872, %v2956, %v2932
        %v2958 = vsel %vm2871, %v554, %v2955
        %v2959 = vsel %vm2871, 0, %v2957
        %v2960 = vcosq.f32.pop %v2958
        %v2961 = vsinq.f32.pop %v2958
        %vm2962 = vweird.f32 %v554
        %v2963 = vadd.s32 %v2959, 3
        %v2964 = vand.u32 %v2963, 3
        %vm2965 = vcmp.lt.s32.totalorder %v2964, 2
        %vm2966 = vcmp.eq.s32.totalorder %v2964, 0
        %v2967 = vxor.u32 %v2961, 2147483648
        %v2968 = vsel %vm2966, %v2960, %v2967
        %vm2969 = vcmp.eq.s32.totalorder %v2964, 2
        %v2970 = vxor.u32 %v2960, 2147483648
        %v2971 = vsel %vm2969, %v2970, %v2961
        %v2972 = vsel %vm2965, %v2968, %v2971
        %v2973 = vsel %vm2962, nan, %v2972
        %v2974 = vand.u32 2147483647, %v556
        %vm2975 = vcmp.le.f32.partialorder %v2974, 0.7853982
        %vm2976 = vcmp.lt.s32.totalorder %v556, 0
        %v2977 = vand.u32 %v556, 2139095040
        %v2978 = vshrl.u32 %v2977, 23
        %v2979 = vsub.s32 %v2978, 127
        %v2980 = vand.u32 2147483647, %v556
        %v2981 = vand.u32 %v2980, 8388607
        %v2982 = vor.u32 %v2981, 8388608
        %v2983 = vsub.s32 0, %v2982
        %v2984 = vadd.s32 %v2979, 1
        %vm2985 = vcmp.gt.s32.totalorder %v2984, 0
        %v2986 = vsel %vm2985, %v2984, 0
        %v2987 = vshrl.u32 %v2986, 5
        %v2988 = vand.u32 %v2986, 31
        %v2989 = vsub.s32 32, %v2988
        %v2990 = vshrl.u32 683565275, %v2989
        %v2991 = vshll.u32 683565275, %v2988
        %v2992 = vshrl.u32 2475754826, %v2989
        %v2993 = vor.u32 %v2991, %v2992
        %v2994 = vshll.u32 2475754826, %v2988
        %v2995 = vshrl.u32 2131351028, %v2989
        %v2996 = vor.u32 %v2994, %v2995
        %v2997 = vshll.u32 2131351028, %v2988
        %v2998 = vshrl.u32 2102212464, %v2989
        %v2999 = vor.u32 %v2997, %v2998
        %v3000 = vshll.u32 2102212464, %v2988
        %v3001 = vshrl.u32 920167782, %v2989
        %v3002 = vor.u32 %v3000, %v3001
        %v3003 = vshll.u32 920167782, %v2988
        %v3004 = vshrl.u32 1326507024, %v2989
        %v3005 = vor.u32 %v3003, %v3004
        %vm3006 = vcmp.lt.s32.totalorder %v2987, 1
        %vm3007 = vcmp.lt.s32.totalorder %v2987, 2
        %vm3008 = vcmp.lt.s32.totalorder %v2987, 3
        %vm3009 = vcmp.lt.s32.totalorder %v2987, 4
        %v3010 = vsel %vm3006, %v2990, %v2993
        %v3011 = vsel %vm3009, %v2999, 2102212464
        %v3012 = vsel %vm3008, %v2996, %v3011
        %v3013 = vsel %vm3007, %v3010, %v3012
        %v3014 = vsel %vm3006, %v2993, %v2996
        %v3015 = vsel %vm3009, %v3002, 920167782
        %v3016 = vsel %vm3008, %v2999, %v3015
        %v3017 = vsel %vm3007, %v3014, %v3016
        %v3018 = vsel %vm3006, %v2996, %v2999
        %v3019 = vsel %vm3009, %v3005, 1326507024
        %v3020 = vsel %vm3008, %v3002, %v3019
        %v3021 = vsel %vm3007, %v3018, %v3020
        %v3022 = vshll.u32 %v2982, 8
        %v3023 = vmul.u32.u64.compose %v3022, %v3021
        %v3024 = vextract.low.u32 %v3023
        %v3025 = vextract.high.u32 %v3023
        %v3026 = vmul.u32.u64.compose %v3022, %v3017
        %v3027 = vextract.low.u32 %v3026
        %v3028 = vextract.high.u32 %v3026
        %v3029 = vmul.u32 %v3022, %v3013
        %v3030 = vadd.s32 %v3025, %v3027
        %vm3031 = vc.u32 %v3025, %v3027
        %v3032 = vadd.s32 %v3028, 1
        %v3033 = vsel %vm3031, %v3032, %v3028
        %v3034 = vadd.s32 %v3029, %v3033
        %v3035 = vadd.s32 %v3034, 536870912
        %v3036 = vshrl.u32 %v3035, 30
        %v3037 = vshll.u32 %v3036, 30
        %v3038 = vsub.s32 %v3034, %v3037
        %vm3039 = vcmp.lt.s32.totalorder %v3038, 0
        %v3040 = vsub.s32 0, %v3038
        %v3041 = vsel %vm3039, %v3040, %v3038
        %v3042 = vclz %v3041
        %v3043 = vsub.s32 %v3042, 2
        %vm3044 = vcmp.gt.s32.totalorder 0, %v3043
        %v3045 = vsel %vm3044, 0, %v3043
        %v3046 = vsub.s32 32, %v3045
        %v3047 = vshll.u32 %v3038, %v3045
        %v3048 = vshrl.u32 %v3030, %v3046
        %v3049 = vor.u32 %v3047, %v3048
        %v3050 = vsub.s32 4294967266, %v3045
        %v3051 = vadd.s32 %v3050, 127
        %v3052 = vshll.u32 %v3051, 23
        %v3053 = vor.u32 4788187, %v3052
        %v3054 = vand.u32 2147483647, %v3053
        %v3056 = vcvt.s32.f32 %v3049
        %v3057 = vmul.f32 %v3056, %v3054
        %v3058 = vxor.u32 %v3057, 2147483648
        %v3059 = vsel %vm2976, %v3058, %v3057
        %v3060 = vsub.s32 4, %v3036
        %v3061 = vsel %vm2976, %v3060, %v3036
        %v3062 = vsel %vm2975, %v556, %v3059
        %v3063 = vsel %vm2975, 0, %v3061
        %v3064 = vcosq.f32.pop %v3062
        %v3065 = vsinq.f32.pop %v3062
        %vm3066 = vweird.f32 %v556
        %v3067 = vadd.s32 %v3063, 3
        %v3068 = vand.u32 %v3067, 3
        %vm3069 = vcmp.lt.s32.totalorder %v3068, 2
        %vm3070 = vcmp.eq.s32.totalorder %v3068, 0
        %v3071 = vxor.u32 %v3065, 2147483648
        %v3072 = vsel %vm3070, %v3064, %v3071
        %vm3073 = vcmp.eq.s32.totalorder %v3068, 2
        %v3074 = vxor.u32 %v3064, 2147483648
        %v3075 = vsel %vm3073, %v3074, %v3065
        %v3076 = vsel %vm3069, %v3072, %v3075
        %v3077 = vsel %vm3066, nan, %v3076
        %v3078 = vand.u32 2147483647, %v560
        %vm3079 = vcmp.le.f32.partialorder %v3078, 0.7853982
        %vm3080 = vcmp.lt.s32.totalorder %v560, 0
        %v3081 = vand.u32 %v560, 2139095040
        %v3082 = vshrl.u32 %v3081, 23
        %v3083 = vsub.s32 %v3082, 127
        %v3084 = vand.u32 2147483647, %v560
        %v3085 = vand.u32 %v3084, 8388607
        %v3086 = vor.u32 %v3085, 8388608
        %v3087 = vsub.s32 0, %v3086
        %v3088 = vadd.s32 %v3083, 1
        %vm3089 = vcmp.gt.s32.totalorder %v3088, 0
        %v3090 = vsel %vm3089, %v3088, 0
        %v3091 = vshrl.u32 %v3090, 5
        %v3092 = vand.u32 %v3090, 31
        %v3093 = vsub.s32 32, %v3092
        %v3094 = vshrl.u32 683565275, %v3093
        %v3095 = vshll.u32 683565275, %v3092
        %v3096 = vshrl.u32 2475754826, %v3093
        %v3097 = vor.u32 %v3095, %v3096
        %v3098 = vshll.u32 2475754826, %v3092
        %v3099 = vshrl.u32 2131351028, %v3093
        %v3100 = vor.u32 %v3098, %v3099
        %v3101 = vshll.u32 2131351028, %v3092
        %v3102 = vshrl.u32 2102212464, %v3093
        %v3103 = vor.u32 %v3101, %v3102
        %v3104 = vshll.u32 2102212464, %v3092
        %v3105 = vshrl.u32 920167782, %v3093
        %v3106 = vor.u32 %v3104, %v3105
        %v3107 = vshll.u32 920167782, %v3092
        %v3108 = vshrl.u32 1326507024, %v3093
        %v3109 = vor.u32 %v3107, %v3108
        %vm3110 = vcmp.lt.s32.totalorder %v3091, 1
        %vm3111 = vcmp.lt.s32.totalorder %v3091, 2
        %vm3112 = vcmp.lt.s32.totalorder %v3091, 3
        %vm3113 = vcmp.lt.s32.totalorder %v3091, 4
        %v3114 = vsel %vm3110, %v3094, %v3097
        %v3115 = vsel %vm3113, %v3103, 2102212464
        %v3116 = vsel %vm3112, %v3100, %v3115
        %v3117 = vsel %vm3111, %v3114, %v3116
        %v3118 = vsel %vm3110, %v3097, %v3100
        %v3119 = vsel %vm3113, %v3106, 920167782
        %v3120 = vsel %vm3112, %v3103, %v3119
        %v3121 = vsel %vm3111, %v3118, %v3120
        %v3122 = vsel %vm3110, %v3100, %v3103
        %v3123 = vsel %vm3113, %v3109, 1326507024
        %v3124 = vsel %vm3112, %v3106, %v3123
        %v3125 = vsel %vm3111, %v3122, %v3124
        %v3126 = vshll.u32 %v3086, 8
        %v3127 = vmul.u32.u64.compose %v3126, %v3125
        %v3128 = vextract.low.u32 %v3127
        %v3129 = vextract.high.u32 %v3127
        %v3130 = vmul.u32.u64.compose %v3126, %v3121
        %v3131 = vextract.low.u32 %v3130
        %v3132 = vextract.high.u32 %v3130
        %v3133 = vmul.u32 %v3126, %v3117
        %v3134 = vadd.s32 %v3129, %v3131
        %vm3135 = vc.u32 %v3129, %v3131
        %v3136 = vadd.s32 %v3132, 1
        %v3137 = vsel %vm3135, %v3136, %v3132
        %v3138 = vadd.s32 %v3133, %v3137
        %v3139 = vadd.s32 %v3138, 536870912
        %v3140 = vshrl.u32 %v3139, 30
        %v3141 = vshll.u32 %v3140, 30
        %v3142 = vsub.s32 %v3138, %v3141
        %vm3143 = vcmp.lt.s32.totalorder %v3142, 0
        %v3144 = vsub.s32 0, %v3142
        %v3145 = vsel %vm3143, %v3144, %v3142
        %v3146 = vclz %v3145
        %v3147 = vsub.s32 %v3146, 2
        %vm3148 = vcmp.gt.s32.totalorder 0, %v3147
        %v3149 = vsel %vm3148, 0, %v3147
        %v3150 = vsub.s32 32, %v3149
        %v3151 = vshll.u32 %v3142, %v3149
        %v3152 = vshrl.u32 %v3134, %v3150
        %v3153 = vor.u32 %v3151, %v3152
        %v3154 = vsub.s32 4294967266, %v3149
        %v3155 = vadd.s32 %v3154, 127
        %v3156 = vshll.u32 %v3155, 23
        %v3157 = vor.u32 4788187, %v3156
        %v3158 = vand.u32 2147483647, %v3157
        %v3160 = vcvt.s32.f32 %v3153
        %v3161 = vmul.f32 %v3160, %v3158
        %v3162 = vxor.u32 %v3161, 2147483648
        %v3163 = vsel %vm3080, %v3162, %v3161
        %v3164 = vsub.s32 4, %v3140
        %v3165 = vsel %vm3080, %v3164, %v3140
        %v3166 = vsel %vm3079, %v560, %v3163
        %v3167 = vsel %vm3079, 0, %v3165
        %v3168 = vcosq.f32.pop %v3166
        %v3169 = vsinq.f32.pop %v3166
        %vm3170 = vweird.f32 %v560
        %v3171 = vadd.s32 %v3167, 3
        %v3172 = vand.u32 %v3171, 3
        %vm3173 = vcmp.lt.s32.totalorder %v3172, 2
        %vm3174 = vcmp.eq.s32.totalorder %v3172, 0
        %v3175 = vxor.u32 %v3169, 2147483648
        %v3176 = vsel %vm3174, %v3168, %v3175
        %vm3177 = vcmp.eq.s32.totalorder %v3172, 2
        %v3178 = vxor.u32 %v3168, 2147483648
        %v3179 = vsel %vm3177, %v3178, %v3169
        %v3180 = vsel %vm3173, %v3176, %v3179
        %v3181 = vsel %vm3170, nan, %v3180
        %v3182 = vand.u32 2147483647, %v562
        %vm3183 = vcmp.le.f32.partialorder %v3182, 0.7853982
        %vm3184 = vcmp.lt.s32.totalorder %v562, 0
        %v3185 = vand.u32 %v562, 2139095040
        %v3186 = vshrl.u32 %v3185, 23
        %v3187 = vsub.s32 %v3186, 127
        %v3188 = vand.u32 2147483647, %v562
        %v3189 = vand.u32 %v3188, 8388607
        %v3190 = vor.u32 %v3189, 8388608
        %v3191 = vsub.s32 0, %v3190
        %v3192 = vadd.s32 %v3187, 1
        %vm3193 = vcmp.gt.s32.totalorder %v3192, 0
        %v3194 = vsel %vm3193, %v3192, 0
        %v3195 = vshrl.u32 %v3194, 5
        %v3196 = vand.u32 %v3194, 31
        %v3197 = vsub.s32 32, %v3196
        %v3198 = vshrl.u32 683565275, %v3197
        %v3199 = vshll.u32 683565275, %v3196
        %v3200 = vshrl.u32 2475754826, %v3197
        %v3201 = vor.u32 %v3199, %v3200
        %v3202 = vshll.u32 2475754826, %v3196
        %v3203 = vshrl.u32 2131351028, %v3197
        %v3204 = vor.u32 %v3202, %v3203
        %v3205 = vshll.u32 2131351028, %v3196
        %v3206 = vshrl.u32 2102212464, %v3197
        %v3207 = vor.u32 %v3205, %v3206
        %v3208 = vshll.u32 2102212464, %v3196
        %v3209 = vshrl.u32 920167782, %v3197
        %v3210 = vor.u32 %v3208, %v3209
        %v3211 = vshll.u32 920167782, %v3196
        %v3212 = vshrl.u32 1326507024, %v3197
        %v3213 = vor.u32 %v3211, %v3212
        %vm3214 = vcmp.lt.s32.totalorder %v3195, 1
        %vm3215 = vcmp.lt.s32.totalorder %v3195, 2
        %vm3216 = vcmp.lt.s32.totalorder %v3195, 3
        %vm3217 = vcmp.lt.s32.totalorder %v3195, 4
        %v3218 = vsel %vm3214, %v3198, %v3201
        %v3219 = vsel %vm3217, %v3207, 2102212464
        %v3220 = vsel %vm3216, %v3204, %v3219
        %v3221 = vsel %vm3215, %v3218, %v3220
        %v3222 = vsel %vm3214, %v3201, %v3204
        %v3223 = vsel %vm3217, %v3210, 920167782
        %v3224 = vsel %vm3216, %v3207, %v3223
        %v3225 = vsel %vm3215, %v3222, %v3224
        %v3226 = vsel %vm3214, %v3204, %v3207
        %v3227 = vsel %vm3217, %v3213, 1326507024
        %v3228 = vsel %vm3216, %v3210, %v3227
        %v3229 = vsel %vm3215, %v3226, %v3228
        %v3230 = vshll.u32 %v3190, 8
        %v3231 = vmul.u32.u64.compose %v3230, %v3229
        %v3232 = vextract.low.u32 %v3231
        %v3233 = vextract.high.u32 %v3231
        %v3234 = vmul.u32.u64.compose %v3230, %v3225
        %v3235 = vextract.low.u32 %v3234
        %v3236 = vextract.high.u32 %v3234
        %v3237 = vmul.u32 %v3230, %v3221
        %v3238 = vadd.s32 %v3233, %v3235
        %vm3239 = vc.u32 %v3233, %v3235
        %v3240 = vadd.s32 %v3236, 1
        %v3241 = vsel %vm3239, %v3240, %v3236
        %v3242 = vadd.s32 %v3237, %v3241
        %v3243 = vadd.s32 %v3242, 536870912
        %v3244 = vshrl.u32 %v3243, 30
        %v3245 = vshll.u32 %v3244, 30
        %v3246 = vsub.s32 %v3242, %v3245
        %vm3247 = vcmp.lt.s32.totalorder %v3246, 0
        %v3248 = vsub.s32 0, %v3246
        %v3249 = vsel %vm3247, %v3248, %v3246
        %v3250 = vclz %v3249
        %v3251 = vsub.s32 %v3250, 2
        %vm3252 = vcmp.gt.s32.totalorder 0, %v3251
        %v3253 = vsel %vm3252, 0, %v3251
        %v3254 = vsub.s32 32, %v3253
        %v3255 = vshll.u32 %v3246, %v3253
        %v3256 = vshrl.u32 %v3238, %v3254
        %v3257 = vor.u32 %v3255, %v3256
        %v3258 = vsub.s32 4294967266, %v3253
        %v3259 = vadd.s32 %v3258, 127
        %v3260 = vshll.u32 %v3259, 23
        %v3261 = vor.u32 4788187, %v3260
        %v3262 = vand.u32 2147483647, %v3261
        %v3264 = vcvt.s32.f32 %v3257
        %v3265 = vmul.f32 %v3264, %v3262
        %v3266 = vxor.u32 %v3265, 2147483648
        %v3267 = vsel %vm3184, %v3266, %v3265
        %v3268 = vsub.s32 4, %v3244
        %v3269 = vsel %vm3184, %v3268, %v3244
        %v3270 = vsel %vm3183, %v562, %v3267
        %v3271 = vsel %vm3183, 0, %v3269
        %v3272 = vcosq.f32.pop %v3270
        %v3273 = vsinq.f32.pop %v3270
        %vm3274 = vweird.f32 %v562
        %v3275 = vadd.s32 %v3271, 3
        %v3276 = vand.u32 %v3275, 3
        %vm3277 = vcmp.lt.s32.totalorder %v3276, 2
        %vm3278 = vcmp.eq.s32.totalorder %v3276, 0
        %v3279 = vxor.u32 %v3273, 2147483648
        %v3280 = vsel %vm3278, %v3272, %v3279
        %vm3281 = vcmp.eq.s32.totalorder %v3276, 2
        %v3282 = vxor.u32 %v3272, 2147483648
        %v3283 = vsel %vm3281, %v3282, %v3273
        %v3284 = vsel %vm3277, %v3280, %v3283
        %v3285 = vsel %vm3274, nan, %v3284
        %v3286 = vand.u32 2147483647, %v566
        %vm3287 = vcmp.le.f32.partialorder %v3286, 0.7853982
        %vm3288 = vcmp.lt.s32.totalorder %v566, 0
        %v3289 = vand.u32 %v566, 2139095040
        %v3290 = vshrl.u32 %v3289, 23
        %v3291 = vsub.s32 %v3290, 127
        %v3292 = vand.u32 2147483647, %v566
        %v3293 = vand.u32 %v3292, 8388607
        %v3294 = vor.u32 %v3293, 8388608
        %v3295 = vsub.s32 0, %v3294
        %v3296 = vadd.s32 %v3291, 1
        %vm3297 = vcmp.gt.s32.totalorder %v3296, 0
        %v3298 = vsel %vm3297, %v3296, 0
        %v3299 = vshrl.u32 %v3298, 5
        %v3300 = vand.u32 %v3298, 31
        %v3301 = vsub.s32 32, %v3300
        %v3302 = vshrl.u32 683565275, %v3301
        %v3303 = vshll.u32 683565275, %v3300
        %v3304 = vshrl.u32 2475754826, %v3301
        %v3305 = vor.u32 %v3303, %v3304
        %v3306 = vshll.u32 2475754826, %v3300
        %v3307 = vshrl.u32 2131351028, %v3301
        %v3308 = vor.u32 %v3306, %v3307
        %v3309 = vshll.u32 2131351028, %v3300
        %v3310 = vshrl.u32 2102212464, %v3301
        %v3311 = vor.u32 %v3309, %v3310
        %v3312 = vshll.u32 2102212464, %v3300
        %v3313 = vshrl.u32 920167782, %v3301
        %v3314 = vor.u32 %v3312, %v3313
        %v3315 = vshll.u32 920167782, %v3300
        %v3316 = vshrl.u32 1326507024, %v3301
        %v3317 = vor.u32 %v3315, %v3316
        %vm3318 = vcmp.lt.s32.totalorder %v3299, 1
        %vm3319 = vcmp.lt.s32.totalorder %v3299, 2
        %vm3320 = vcmp.lt.s32.totalorder %v3299, 3
        %vm3321 = vcmp.lt.s32.totalorder %v3299, 4
        %v3322 = vsel %vm3318, %v3302, %v3305
        %v3323 = vsel %vm3321, %v3311, 2102212464
        %v3324 = vsel %vm3320, %v3308, %v3323
        %v3325 = vsel %vm3319, %v3322, %v3324
        %v3326 = vsel %vm3318, %v3305, %v3308
        %v3327 = vsel %vm3321, %v3314, 920167782
        %v3328 = vsel %vm3320, %v3311, %v3327
        %v3329 = vsel %vm3319, %v3326, %v3328
        %v3330 = vsel %vm3318, %v3308, %v3311
        %v3331 = vsel %vm3321, %v3317, 1326507024
        %v3332 = vsel %vm3320, %v3314, %v3331
        %v3333 = vsel %vm3319, %v3330, %v3332
        %v3334 = vshll.u32 %v3294, 8
        %v3335 = vmul.u32.u64.compose %v3334, %v3333
        %v3336 = vextract.low.u32 %v3335
        %v3337 = vextract.high.u32 %v3335
        %v3338 = vmul.u32.u64.compose %v3334, %v3329
        %v3339 = vextract.low.u32 %v3338
        %v3340 = vextract.high.u32 %v3338
        %v3341 = vmul.u32 %v3334, %v3325
        %v3342 = vadd.s32 %v3337, %v3339
        %vm3343 = vc.u32 %v3337, %v3339
        %v3344 = vadd.s32 %v3340, 1
        %v3345 = vsel %vm3343, %v3344, %v3340
        %v3346 = vadd.s32 %v3341, %v3345
        %v3347 = vadd.s32 %v3346, 536870912
        %v3348 = vshrl.u32 %v3347, 30
        %v3349 = vshll.u32 %v3348, 30
        %v3350 = vsub.s32 %v3346, %v3349
        %vm3351 = vcmp.lt.s32.totalorder %v3350, 0
        %v3352 = vsub.s32 0, %v3350
        %v3353 = vsel %vm3351, %v3352, %v3350
        %v3354 = vclz %v3353
        %v3355 = vsub.s32 %v3354, 2
        %vm3356 = vcmp.gt.s32.totalorder 0, %v3355
        %v3357 = vsel %vm3356, 0, %v3355
        %v3358 = vsub.s32 32, %v3357
        %v3359 = vshll.u32 %v3350, %v3357
        %v3360 = vshrl.u32 %v3342, %v3358
        %v3361 = vor.u32 %v3359, %v3360
        %v3362 = vsub.s32 4294967266, %v3357
        %v3363 = vadd.s32 %v3362, 127
        %v3364 = vshll.u32 %v3363, 23
        %v3365 = vor.u32 4788187, %v3364
        %v3366 = vand.u32 2147483647, %v3365
        %v3368 = vcvt.s32.f32 %v3361
        %v3369 = vmul.f32 %v3368, %v3366
        %v3370 = vxor.u32 %v3369, 2147483648
        %v3371 = vsel %vm3288, %v3370, %v3369
        %v3372 = vsub.s32 4, %v3348
        %v3373 = vsel %vm3288, %v3372, %v3348
        %v3374 = vsel %vm3287, %v566, %v3371
        %v3375 = vsel %vm3287, 0, %v3373
        %v3376 = vcosq.f32.pop %v3374
        %v3377 = vsinq.f32.pop %v3374
        %vm3378 = vweird.f32 %v566
        %v3379 = vadd.s32 %v3375, 3
        %v3380 = vand.u32 %v3379, 3
        %vm3381 = vcmp.lt.s32.totalorder %v3380, 2
        %vm3382 = vcmp.eq.s32.totalorder %v3380, 0
        %v3383 = vxor.u32 %v3377, 2147483648
        %v3384 = vsel %vm3382, %v3376, %v3383
        %vm3385 = vcmp.eq.s32.totalorder %v3380, 2
        %v3386 = vxor.u32 %v3376, 2147483648
        %v3387 = vsel %vm3385, %v3386, %v3377
        %v3388 = vsel %vm3381, %v3384, %v3387
        %v3389 = vsel %vm3378, nan, %v3388
        %v3390 = vand.u32 2147483647, %v568
        %vm3391 = vcmp.le.f32.partialorder %v3390, 0.7853982
        %vm3392 = vcmp.lt.s32.totalorder %v568, 0
        %v3393 = vand.u32 %v568, 2139095040
        %v3394 = vshrl.u32 %v3393, 23
        %v3395 = vsub.s32 %v3394, 127
        %v3396 = vand.u32 2147483647, %v568
        %v3397 = vand.u32 %v3396, 8388607
        %v3398 = vor.u32 %v3397, 8388608
        %v3399 = vsub.s32 0, %v3398
        %v3400 = vadd.s32 %v3395, 1
        %vm3401 = vcmp.gt.s32.totalorder %v3400, 0
        %v3402 = vsel %vm3401, %v3400, 0
        %v3403 = vshrl.u32 %v3402, 5
        %v3404 = vand.u32 %v3402, 31
        %v3405 = vsub.s32 32, %v3404
        %v3406 = vshrl.u32 683565275, %v3405
        %v3407 = vshll.u32 683565275, %v3404
        %v3408 = vshrl.u32 2475754826, %v3405
        %v3409 = vor.u32 %v3407, %v3408
        %v3410 = vshll.u32 2475754826, %v3404
        %v3411 = vshrl.u32 2131351028, %v3405
        %v3412 = vor.u32 %v3410, %v3411
        %v3413 = vshll.u32 2131351028, %v3404
        %v3414 = vshrl.u32 2102212464, %v3405
        %v3415 = vor.u32 %v3413, %v3414
        %v3416 = vshll.u32 2102212464, %v3404
        %v3417 = vshrl.u32 920167782, %v3405
        %v3418 = vor.u32 %v3416, %v3417
        %v3419 = vshll.u32 920167782, %v3404
        %v3420 = vshrl.u32 1326507024, %v3405
        %v3421 = vor.u32 %v3419, %v3420
        %vm3422 = vcmp.lt.s32.totalorder %v3403, 1
        %vm3423 = vcmp.lt.s32.totalorder %v3403, 2
        %vm3424 = vcmp.lt.s32.totalorder %v3403, 3
        %vm3425 = vcmp.lt.s32.totalorder %v3403, 4
        %v3426 = vsel %vm3422, %v3406, %v3409
        %v3427 = vsel %vm3425, %v3415, 2102212464
        %v3428 = vsel %vm3424, %v3412, %v3427
        %v3429 = vsel %vm3423, %v3426, %v3428
        %v3430 = vsel %vm3422, %v3409, %v3412
        %v3431 = vsel %vm3425, %v3418, 920167782
        %v3432 = vsel %vm3424, %v3415, %v3431
        %v3433 = vsel %vm3423, %v3430, %v3432
        %v3434 = vsel %vm3422, %v3412, %v3415
        %v3435 = vsel %vm3425, %v3421, 1326507024
        %v3436 = vsel %vm3424, %v3418, %v3435
        %v3437 = vsel %vm3423, %v3434, %v3436
        %v3438 = vshll.u32 %v3398, 8
        %v3439 = vmul.u32.u64.compose %v3438, %v3437
        %v3440 = vextract.low.u32 %v3439
        %v3441 = vextract.high.u32 %v3439
        %v3442 = vmul.u32.u64.compose %v3438, %v3433
        %v3443 = vextract.low.u32 %v3442
        %v3444 = vextract.high.u32 %v3442
        %v3445 = vmul.u32 %v3438, %v3429
        %v3446 = vadd.s32 %v3441, %v3443
        %vm3447 = vc.u32 %v3441, %v3443
        %v3448 = vadd.s32 %v3444, 1
        %v3449 = vsel %vm3447, %v3448, %v3444
        %v3450 = vadd.s32 %v3445, %v3449
        %v3451 = vadd.s32 %v3450, 536870912
        %v3452 = vshrl.u32 %v3451, 30
        %v3453 = vshll.u32 %v3452, 30
        %v3454 = vsub.s32 %v3450, %v3453
        %vm3455 = vcmp.lt.s32.totalorder %v3454, 0
        %v3456 = vsub.s32 0, %v3454
        %v3457 = vsel %vm3455, %v3456, %v3454
        %v3458 = vclz %v3457
        %v3459 = vsub.s32 %v3458, 2
        %vm3460 = vcmp.gt.s32.totalorder 0, %v3459
        %v3461 = vsel %vm3460, 0, %v3459
        %v3462 = vsub.s32 32, %v3461
        %v3463 = vshll.u32 %v3454, %v3461
        %v3464 = vshrl.u32 %v3446, %v3462
        %v3465 = vor.u32 %v3463, %v3464
        %v3466 = vsub.s32 4294967266, %v3461
        %v3467 = vadd.s32 %v3466, 127
        %v3468 = vshll.u32 %v3467, 23
        %v3469 = vor.u32 4788187, %v3468
        %v3470 = vand.u32 2147483647, %v3469
        %v3472 = vcvt.s32.f32 %v3465
        %v3473 = vmul.f32 %v3472, %v3470
        %v3474 = vxor.u32 %v3473, 2147483648
        %v3475 = vsel %vm3392, %v3474, %v3473
        %v3476 = vsub.s32 4, %v3452
        %v3477 = vsel %vm3392, %v3476, %v3452
        %v3478 = vsel %vm3391, %v568, %v3475
        %v3479 = vsel %vm3391, 0, %v3477
        %v3480 = vcosq.f32.pop %v3478
        %v3481 = vsinq.f32.pop %v3478
        %vm3482 = vweird.f32 %v568
        %v3483 = vadd.s32 %v3479, 3
        %v3484 = vand.u32 %v3483, 3
        %vm3485 = vcmp.lt.s32.totalorder %v3484, 2
        %vm3486 = vcmp.eq.s32.totalorder %v3484, 0
        %v3487 = vxor.u32 %v3481, 2147483648
        %v3488 = vsel %vm3486, %v3480, %v3487
        %vm3489 = vcmp.eq.s32.totalorder %v3484, 2
        %v3490 = vxor.u32 %v3480, 2147483648
        %v3491 = vsel %vm3489, %v3490, %v3481
        %v3492 = vsel %vm3485, %v3488, %v3491
        %v3493 = vsel %vm3482, nan, %v3492
        %v3494 = vand.u32 2147483647, %v572
        %vm3495 = vcmp.le.f32.partialorder %v3494, 0.7853982
        %vm3496 = vcmp.lt.s32.totalorder %v572, 0
        %v3497 = vand.u32 %v572, 2139095040
        %v3498 = vshrl.u32 %v3497, 23
        %v3499 = vsub.s32 %v3498, 127
        %v3500 = vand.u32 2147483647, %v572
        %v3501 = vand.u32 %v3500, 8388607
        %v3502 = vor.u32 %v3501, 8388608
        %v3503 = vsub.s32 0, %v3502
        %v3504 = vadd.s32 %v3499, 1
        %vm3505 = vcmp.gt.s32.totalorder %v3504, 0
        %v3506 = vsel %vm3505, %v3504, 0
        %v3507 = vshrl.u32 %v3506, 5
        %v3508 = vand.u32 %v3506, 31
        %v3509 = vsub.s32 32, %v3508
        %v3510 = vshrl.u32 683565275, %v3509
        %v3511 = vshll.u32 683565275, %v3508
        %v3512 = vshrl.u32 2475754826, %v3509
        %v3513 = vor.u32 %v3511, %v3512
        %v3514 = vshll.u32 2475754826, %v3508
        %v3515 = vshrl.u32 2131351028, %v3509
        %v3516 = vor.u32 %v3514, %v3515
        %v3517 = vshll.u32 2131351028, %v3508
        %v3518 = vshrl.u32 2102212464, %v3509
        %v3519 = vor.u32 %v3517, %v3518
        %v3520 = vshll.u32 2102212464, %v3508
        %v3521 = vshrl.u32 920167782, %v3509
        %v3522 = vor.u32 %v3520, %v3521
        %v3523 = vshll.u32 920167782, %v3508
        %v3524 = vshrl.u32 1326507024, %v3509
        %v3525 = vor.u32 %v3523, %v3524
        %vm3526 = vcmp.lt.s32.totalorder %v3507, 1
        %vm3527 = vcmp.lt.s32.totalorder %v3507, 2
        %vm3528 = vcmp.lt.s32.totalorder %v3507, 3
        %vm3529 = vcmp.lt.s32.totalorder %v3507, 4
        %v3530 = vsel %vm3526, %v3510, %v3513
        %v3531 = vsel %vm3529, %v3519, 2102212464
        %v3532 = vsel %vm3528, %v3516, %v3531
        %v3533 = vsel %vm3527, %v3530, %v3532
        %v3534 = vsel %vm3526, %v3513, %v3516
        %v3535 = vsel %vm3529, %v3522, 920167782
        %v3536 = vsel %vm3528, %v3519, %v3535
        %v3537 = vsel %vm3527, %v3534, %v3536
        %v3538 = vsel %vm3526, %v3516, %v3519
        %v3539 = vsel %vm3529, %v3525, 1326507024
        %v3540 = vsel %vm3528, %v3522, %v3539
        %v3541 = vsel %vm3527, %v3538, %v3540
        %v3542 = vshll.u32 %v3502, 8
        %v3543 = vmul.u32.u64.compose %v3542, %v3541
        %v3544 = vextract.low.u32 %v3543
        %v3545 = vextract.high.u32 %v3543
        %v3546 = vmul.u32.u64.compose %v3542, %v3537
        %v3547 = vextract.low.u32 %v3546
        %v3548 = vextract.high.u32 %v3546
        %v3549 = vmul.u32 %v3542, %v3533
        %v3550 = vadd.s32 %v3545, %v3547
        %vm3551 = vc.u32 %v3545, %v3547
        %v3552 = vadd.s32 %v3548, 1
        %v3553 = vsel %vm3551, %v3552, %v3548
        %v3554 = vadd.s32 %v3549, %v3553
        %v3555 = vadd.s32 %v3554, 536870912
        %v3556 = vshrl.u32 %v3555, 30
        %v3557 = vshll.u32 %v3556, 30
        %v3558 = vsub.s32 %v3554, %v3557
        %vm3559 = vcmp.lt.s32.totalorder %v3558, 0
        %v3560 = vsub.s32 0, %v3558
        %v3561 = vsel %vm3559, %v3560, %v3558
        %v3562 = vclz %v3561
        %v3563 = vsub.s32 %v3562, 2
        %vm3564 = vcmp.gt.s32.totalorder 0, %v3563
        %v3565 = vsel %vm3564, 0, %v3563
        %v3566 = vsub.s32 32, %v3565
        %v3567 = vshll.u32 %v3558, %v3565
        %v3568 = vshrl.u32 %v3550, %v3566
        %v3569 = vor.u32 %v3567, %v3568
        %v3570 = vsub.s32 4294967266, %v3565
        %v3571 = vadd.s32 %v3570, 127
        %v3572 = vshll.u32 %v3571, 23
        %v3573 = vor.u32 4788187, %v3572
        %v3574 = vand.u32 2147483647, %v3573
        %v3576 = vcvt.s32.f32 %v3569
        %v3577 = vmul.f32 %v3576, %v3574
        %v3578 = vxor.u32 %v3577, 2147483648
        %v3579 = vsel %vm3496, %v3578, %v3577
        %v3580 = vsub.s32 4, %v3556
        %v3581 = vsel %vm3496, %v3580, %v3556
        %v3582 = vsel %vm3495, %v572, %v3579
        %v3583 = vsel %vm3495, 0, %v3581
        %v3584 = vcosq.f32.pop %v3582
        %v3585 = vsinq.f32.pop %v3582
        %vm3586 = vweird.f32 %v572
        %v3587 = vadd.s32 %v3583, 3
        %v3588 = vand.u32 %v3587, 3
        %vm3589 = vcmp.lt.s32.totalorder %v3588, 2
        %vm3590 = vcmp.eq.s32.totalorder %v3588, 0
        %v3591 = vxor.u32 %v3585, 2147483648
        %v3592 = vsel %vm3590, %v3584, %v3591
        %vm3593 = vcmp.eq.s32.totalorder %v3588, 2
        %v3594 = vxor.u32 %v3584, 2147483648
        %v3595 = vsel %vm3593, %v3594, %v3585
        %v3596 = vsel %vm3589, %v3592, %v3595
        %v3597 = vsel %vm3586, nan, %v3596
        %v3598 = vand.u32 2147483647, %v574
        %vm3599 = vcmp.le.f32.partialorder %v3598, 0.7853982
        %vm3600 = vcmp.lt.s32.totalorder %v574, 0
        %v3601 = vand.u32 %v574, 2139095040
        %v3602 = vshrl.u32 %v3601, 23
        %v3603 = vsub.s32 %v3602, 127
        %v3604 = vand.u32 2147483647, %v574
        %v3605 = vand.u32 %v3604, 8388607
        %v3606 = vor.u32 %v3605, 8388608
        %v3607 = vsub.s32 0, %v3606
        %v3608 = vadd.s32 %v3603, 1
        %vm3609 = vcmp.gt.s32.totalorder %v3608, 0
        %v3610 = vsel %vm3609, %v3608, 0
        %v3611 = vshrl.u32 %v3610, 5
        %v3612 = vand.u32 %v3610, 31
        %v3613 = vsub.s32 32, %v3612
        %v3614 = vshrl.u32 683565275, %v3613
        %v3615 = vshll.u32 683565275, %v3612
        %v3616 = vshrl.u32 2475754826, %v3613
        %v3617 = vor.u32 %v3615, %v3616
        %v3618 = vshll.u32 2475754826, %v3612
        %v3619 = vshrl.u32 2131351028, %v3613
        %v3620 = vor.u32 %v3618, %v3619
        %v3621 = vshll.u32 2131351028, %v3612
        %v3622 = vshrl.u32 2102212464, %v3613
        %v3623 = vor.u32 %v3621, %v3622
        %v3624 = vshll.u32 2102212464, %v3612
        %v3625 = vshrl.u32 920167782, %v3613
        %v3626 = vor.u32 %v3624, %v3625
        %v3627 = vshll.u32 920167782, %v3612
        %v3628 = vshrl.u32 1326507024, %v3613
        %v3629 = vor.u32 %v3627, %v3628
        %vm3630 = vcmp.lt.s32.totalorder %v3611, 1
        %vm3631 = vcmp.lt.s32.totalorder %v3611, 2
        %vm3632 = vcmp.lt.s32.totalorder %v3611, 3
        %vm3633 = vcmp.lt.s32.totalorder %v3611, 4
        %v3634 = vsel %vm3630, %v3614, %v3617
        %v3635 = vsel %vm3633, %v3623, 2102212464
        %v3636 = vsel %vm3632, %v3620, %v3635
        %v3637 = vsel %vm3631, %v3634, %v3636
        %v3638 = vsel %vm3630, %v3617, %v3620
        %v3639 = vsel %vm3633, %v3626, 920167782
        %v3640 = vsel %vm3632, %v3623, %v3639
        %v3641 = vsel %vm3631, %v3638, %v3640
        %v3642 = vsel %vm3630, %v3620, %v3623
        %v3643 = vsel %vm3633, %v3629, 1326507024
        %v3644 = vsel %vm3632, %v3626, %v3643
        %v3645 = vsel %vm3631, %v3642, %v3644
        %v3646 = vshll.u32 %v3606, 8
        %v3647 = vmul.u32.u64.compose %v3646, %v3645
        %v3648 = vextract.low.u32 %v3647
        %v3649 = vextract.high.u32 %v3647
        %v3650 = vmul.u32.u64.compose %v3646, %v3641
        %v3651 = vextract.low.u32 %v3650
        %v3652 = vextract.high.u32 %v3650
        %v3653 = vmul.u32 %v3646, %v3637
        %v3654 = vadd.s32 %v3649, %v3651
        %vm3655 = vc.u32 %v3649, %v3651
        %v3656 = vadd.s32 %v3652, 1
        %v3657 = vsel %vm3655, %v3656, %v3652
        %v3658 = vadd.s32 %v3653, %v3657
        %v3659 = vadd.s32 %v3658, 536870912
        %v3660 = vshrl.u32 %v3659, 30
        %v3661 = vshll.u32 %v3660, 30
        %v3662 = vsub.s32 %v3658, %v3661
        %vm3663 = vcmp.lt.s32.totalorder %v3662, 0
        %v3664 = vsub.s32 0, %v3662
        %v3665 = vsel %vm3663, %v3664, %v3662
        %v3666 = vclz %v3665
        %v3667 = vsub.s32 %v3666, 2
        %vm3668 = vcmp.gt.s32.totalorder 0, %v3667
        %v3669 = vsel %vm3668, 0, %v3667
        %v3670 = vsub.s32 32, %v3669
        %v3671 = vshll.u32 %v3662, %v3669
        %v3672 = vshrl.u32 %v3654, %v3670
        %v3673 = vor.u32 %v3671, %v3672
        %v3674 = vsub.s32 4294967266, %v3669
        %v3675 = vadd.s32 %v3674, 127
        %v3676 = vshll.u32 %v3675, 23
        %v3677 = vor.u32 4788187, %v3676
        %v3678 = vand.u32 2147483647, %v3677
        %v3680 = vcvt.s32.f32 %v3673
        %v3681 = vmul.f32 %v3680, %v3678
        %v3682 = vxor.u32 %v3681, 2147483648
        %v3683 = vsel %vm3600, %v3682, %v3681
        %v3684 = vsub.s32 4, %v3660
        %v3685 = vsel %vm3600, %v3684, %v3660
        %v3686 = vsel %vm3599, %v574, %v3683
        %v3687 = vsel %vm3599, 0, %v3685
        %v3688 = vcosq.f32.pop %v3686
        %v3689 = vsinq.f32.pop %v3686
        %vm3690 = vweird.f32 %v574
        %v3691 = vadd.s32 %v3687, 3
        %v3692 = vand.u32 %v3691, 3
        %vm3693 = vcmp.lt.s32.totalorder %v3692, 2
        %vm3694 = vcmp.eq.s32.totalorder %v3692, 0
        %v3695 = vxor.u32 %v3689, 2147483648
        %v3696 = vsel %vm3694, %v3688, %v3695
        %vm3697 = vcmp.eq.s32.totalorder %v3692, 2
        %v3698 = vxor.u32 %v3688, 2147483648
        %v3699 = vsel %vm3697, %v3698, %v3689
        %v3700 = vsel %vm3693, %v3696, %v3699
        %v3701 = vsel %vm3690, nan, %v3700
        %v3702 = vand.u32 2147483647, %v578
        %vm3703 = vcmp.le.f32.partialorder %v3702, 0.7853982
        %vm3704 = vcmp.lt.s32.totalorder %v578, 0
        %v3705 = vand.u32 %v578, 2139095040
        %v3706 = vshrl.u32 %v3705, 23
        %v3707 = vsub.s32 %v3706, 127
        %v3708 = vand.u32 2147483647, %v578
        %v3709 = vand.u32 %v3708, 8388607
        %v3710 = vor.u32 %v3709, 8388608
        %v3711 = vsub.s32 0, %v3710
        %v3712 = vadd.s32 %v3707, 1
        %vm3713 = vcmp.gt.s32.totalorder %v3712, 0
        %v3714 = vsel %vm3713, %v3712, 0
        %v3715 = vshrl.u32 %v3714, 5
        %v3716 = vand.u32 %v3714, 31
        %v3717 = vsub.s32 32, %v3716
        %v3718 = vshrl.u32 683565275, %v3717
        %v3719 = vshll.u32 683565275, %v3716
        %v3720 = vshrl.u32 2475754826, %v3717
        %v3721 = vor.u32 %v3719, %v3720
        %v3722 = vshll.u32 2475754826, %v3716
        %v3723 = vshrl.u32 2131351028, %v3717
        %v3724 = vor.u32 %v3722, %v3723
        %v3725 = vshll.u32 2131351028, %v3716
        %v3726 = vshrl.u32 2102212464, %v3717
        %v3727 = vor.u32 %v3725, %v3726
        %v3728 = vshll.u32 2102212464, %v3716
        %v3729 = vshrl.u32 920167782, %v3717
        %v3730 = vor.u32 %v3728, %v3729
        %v3731 = vshll.u32 920167782, %v3716
        %v3732 = vshrl.u32 1326507024, %v3717
        %v3733 = vor.u32 %v3731, %v3732
        %vm3734 = vcmp.lt.s32.totalorder %v3715, 1
        %vm3735 = vcmp.lt.s32.totalorder %v3715, 2
        %vm3736 = vcmp.lt.s32.totalorder %v3715, 3
        %vm3737 = vcmp.lt.s32.totalorder %v3715, 4
        %v3738 = vsel %vm3734, %v3718, %v3721
        %v3739 = vsel %vm3737, %v3727, 2102212464
        %v3740 = vsel %vm3736, %v3724, %v3739
        %v3741 = vsel %vm3735, %v3738, %v3740
        %v3742 = vsel %vm3734, %v3721, %v3724
        %v3743 = vsel %vm3737, %v3730, 920167782
        %v3744 = vsel %vm3736, %v3727, %v3743
        %v3745 = vsel %vm3735, %v3742, %v3744
        %v3746 = vsel %vm3734, %v3724, %v3727
        %v3747 = vsel %vm3737, %v3733, 1326507024
        %v3748 = vsel %vm3736, %v3730, %v3747
        %v3749 = vsel %vm3735, %v3746, %v3748
        %v3750 = vshll.u32 %v3710, 8
        %v3751 = vmul.u32.u64.compose %v3750, %v3749
        %v3752 = vextract.low.u32 %v3751
        %v3753 = vextract.high.u32 %v3751
        %v3754 = vmul.u32.u64.compose %v3750, %v3745
        %v3755 = vextract.low.u32 %v3754
        %v3756 = vextract.high.u32 %v3754
        %v3757 = vmul.u32 %v3750, %v3741
        %v3758 = vadd.s32 %v3753, %v3755
        %vm3759 = vc.u32 %v3753, %v3755
        %v3760 = vadd.s32 %v3756, 1
        %v3761 = vsel %vm3759, %v3760, %v3756
        %v3762 = vadd.s32 %v3757, %v3761
        %v3763 = vadd.s32 %v3762, 536870912
        %v3764 = vshrl.u32 %v3763, 30
        %v3765 = vshll.u32 %v3764, 30
        %v3766 = vsub.s32 %v3762, %v3765
        %vm3767 = vcmp.lt.s32.totalorder %v3766, 0
        %v3768 = vsub.s32 0, %v3766
        %v3769 = vsel %vm3767, %v3768, %v3766
        %v3770 = vclz %v3769
        %v3771 = vsub.s32 %v3770, 2
        %vm3772 = vcmp.gt.s32.totalorder 0, %v3771
        %v3773 = vsel %vm3772, 0, %v3771
        %v3774 = vsub.s32 32, %v3773
        %v3775 = vshll.u32 %v3766, %v3773
        %v3776 = vshrl.u32 %v3758, %v3774
        %v3777 = vor.u32 %v3775, %v3776
        %v3778 = vsub.s32 4294967266, %v3773
        %v3779 = vadd.s32 %v3778, 127
        %v3780 = vshll.u32 %v3779, 23
        %v3781 = vor.u32 4788187, %v3780
        %v3782 = vand.u32 2147483647, %v3781
        %v3784 = vcvt.s32.f32 %v3777
        %v3785 = vmul.f32 %v3784, %v3782
        %v3786 = vxor.u32 %v3785, 2147483648
        %v3787 = vsel %vm3704, %v3786, %v3785
        %v3788 = vsub.s32 4, %v3764
        %v3789 = vsel %vm3704, %v3788, %v3764
        %v3790 = vsel %vm3703, %v578, %v3787
        %v3791 = vsel %vm3703, 0, %v3789
        %v3792 = vcosq.f32.pop %v3790
        %v3793 = vsinq.f32.pop %v3790
        %vm3794 = vweird.f32 %v578
        %v3795 = vadd.s32 %v3791, 3
        %v3796 = vand.u32 %v3795, 3
        %vm3797 = vcmp.lt.s32.totalorder %v3796, 2
        %vm3798 = vcmp.eq.s32.totalorder %v3796, 0
        %v3799 = vxor.u32 %v3793, 2147483648
        %v3800 = vsel %vm3798, %v3792, %v3799
        %vm3801 = vcmp.eq.s32.totalorder %v3796, 2
        %v3802 = vxor.u32 %v3792, 2147483648
        %v3803 = vsel %vm3801, %v3802, %v3793
        %v3804 = vsel %vm3797, %v3800, %v3803
        %v3805 = vsel %vm3794, nan, %v3804
        %v3806 = vand.u32 2147483647, %v580
        %vm3807 = vcmp.le.f32.partialorder %v3806, 0.7853982
        %vm3808 = vcmp.lt.s32.totalorder %v580, 0
        %v3809 = vand.u32 %v580, 2139095040
        %v3810 = vshrl.u32 %v3809, 23
        %v3811 = vsub.s32 %v3810, 127
        %v3812 = vand.u32 2147483647, %v580
        %v3813 = vand.u32 %v3812, 8388607
        %v3814 = vor.u32 %v3813, 8388608
        %v3815 = vsub.s32 0, %v3814
        %v3816 = vadd.s32 %v3811, 1
        %vm3817 = vcmp.gt.s32.totalorder %v3816, 0
        %v3818 = vsel %vm3817, %v3816, 0
        %v3819 = vshrl.u32 %v3818, 5
        %v3820 = vand.u32 %v3818, 31
        %v3821 = vsub.s32 32, %v3820
        %v3822 = vshrl.u32 683565275, %v3821
        %v3823 = vshll.u32 683565275, %v3820
        %v3824 = vshrl.u32 2475754826, %v3821
        %v3825 = vor.u32 %v3823, %v3824
        %v3826 = vshll.u32 2475754826, %v3820
        %v3827 = vshrl.u32 2131351028, %v3821
        %v3828 = vor.u32 %v3826, %v3827
        %v3829 = vshll.u32 2131351028, %v3820
        %v3830 = vshrl.u32 2102212464, %v3821
        %v3831 = vor.u32 %v3829, %v3830
        %v3832 = vshll.u32 2102212464, %v3820
        %v3833 = vshrl.u32 920167782, %v3821
        %v3834 = vor.u32 %v3832, %v3833
        %v3835 = vshll.u32 920167782, %v3820
        %v3836 = vshrl.u32 1326507024, %v3821
        %v3837 = vor.u32 %v3835, %v3836
        %vm3838 = vcmp.lt.s32.totalorder %v3819, 1
        %vm3839 = vcmp.lt.s32.totalorder %v3819, 2
        %vm3840 = vcmp.lt.s32.totalorder %v3819, 3
        %vm3841 = vcmp.lt.s32.totalorder %v3819, 4
        %v3842 = vsel %vm3838, %v3822, %v3825
        %v3843 = vsel %vm3841, %v3831, 2102212464
        %v3844 = vsel %vm3840, %v3828, %v3843
        %v3845 = vsel %vm3839, %v3842, %v3844
        %v3846 = vsel %vm3838, %v3825, %v3828
        %v3847 = vsel %vm3841, %v3834, 920167782
        %v3848 = vsel %vm3840, %v3831, %v3847
        %v3849 = vsel %vm3839, %v3846, %v3848
        %v3850 = vsel %vm3838, %v3828, %v3831
        %v3851 = vsel %vm3841, %v3837, 1326507024
        %v3852 = vsel %vm3840, %v3834, %v3851
        %v3853 = vsel %vm3839, %v3850, %v3852
        %v3854 = vshll.u32 %v3814, 8
        %v3855 = vmul.u32.u64.compose %v3854, %v3853
        %v3856 = vextract.low.u32 %v3855
        %v3857 = vextract.high.u32 %v3855
        %v3858 = vmul.u32.u64.compose %v3854, %v3849
        %v3859 = vextract.low.u32 %v3858
        %v3860 = vextract.high.u32 %v3858
        %v3861 = vmul.u32 %v3854, %v3845
        %v3862 = vadd.s32 %v3857, %v3859
        %vm3863 = vc.u32 %v3857, %v3859
        %v3864 = vadd.s32 %v3860, 1
        %v3865 = vsel %vm3863, %v3864, %v3860
        %v3866 = vadd.s32 %v3861, %v3865
        %v3867 = vadd.s32 %v3866, 536870912
        %v3868 = vshrl.u32 %v3867, 30
        %v3869 = vshll.u32 %v3868, 30
        %v3870 = vsub.s32 %v3866, %v3869
        %vm3871 = vcmp.lt.s32.totalorder %v3870, 0
        %v3872 = vsub.s32 0, %v3870
        %v3873 = vsel %vm3871, %v3872, %v3870
        %v3874 = vclz %v3873
        %v3875 = vsub.s32 %v3874, 2
        %vm3876 = vcmp.gt.s32.totalorder 0, %v3875
        %v3877 = vsel %vm3876, 0, %v3875
        %v3878 = vsub.s32 32, %v3877
        %v3879 = vshll.u32 %v3870, %v3877
        %v3880 = vshrl.u32 %v3862, %v3878
        %v3881 = vor.u32 %v3879, %v3880
        %v3882 = vsub.s32 4294967266, %v3877
        %v3883 = vadd.s32 %v3882, 127
        %v3884 = vshll.u32 %v3883, 23
        %v3885 = vor.u32 4788187, %v3884
        %v3886 = vand.u32 2147483647, %v3885
        %v3888 = vcvt.s32.f32 %v3881
        %v3889 = vmul.f32 %v3888, %v3886
        %v3890 = vxor.u32 %v3889, 2147483648
        %v3891 = vsel %vm3808, %v3890, %v3889
        %v3892 = vsub.s32 4, %v3868
        %v3893 = vsel %vm3808, %v3892, %v3868
        %v3894 = vsel %vm3807, %v580, %v3891
        %v3895 = vsel %vm3807, 0, %v3893
        %v3896 = vcosq.f32.pop %v3894
        %v3897 = vsinq.f32.pop %v3894
        %vm3898 = vweird.f32 %v580
        %v3899 = vadd.s32 %v3895, 3
        %v3900 = vand.u32 %v3899, 3
        %vm3901 = vcmp.lt.s32.totalorder %v3900, 2
        %vm3902 = vcmp.eq.s32.totalorder %v3900, 0
        %v3903 = vxor.u32 %v3897, 2147483648
        %v3904 = vsel %vm3902, %v3896, %v3903
        %vm3905 = vcmp.eq.s32.totalorder %v3900, 2
        %v3906 = vxor.u32 %v3896, 2147483648
        %v3907 = vsel %vm3905, %v3906, %v3897
        %v3908 = vsel %vm3901, %v3904, %v3907
        %v3909 = vsel %vm3898, nan, %v3908
        %v3910 = vpack.c.bf16 %v339, %v338
        %v3911 = vpack.c.bf16 %v341, %v340
        %v3912 = vpack.c.bf16 %v343, %v342
        %v3913 = vpack.c.bf16 %v345, %v344
        %v3914 = vpack.c.bf16 %v347, %v346
        %v3915 = vpack.c.bf16 %v349, %v348
        %v3916 = vpack.c.bf16 %v351, %v350
        %v3917 = vpack.c.bf16 %v353, %v352
        %v3918 = vld [vmem:[%s1] sm:$0xff]
        %v3919 = vld [vmem:[%s1 + $0x8] sm:$0xff]
        %v3920 = vld [vmem:[%s1 + $0x10] sm:$0xff]
        %v3921 = vld [vmem:[%s1 + $0x18] sm:$0xff]
        %v3922 = vld [vmem:[%s1 + $0x20] sm:$0xff]
        %v3923 = vld [vmem:[%s1 + $0x28] sm:$0xff]
        %v3924 = vpack.c.bf16 %v893, %v685
        %v3925 = vpack.c.bf16 %v997, %v789
        %v3926 = vpack.c.bf16 %v1309, %v1101
        %v3927 = vpack.c.bf16 %v1413, %v1205
        %v3928 = vpack.c.bf16 %v1725, %v1517
        %v3929 = vpack.c.bf16 %v1829, %v1621
        %v3930 = vpack.c.bf16 %v2141, %v1933
        %v3931 = vpack.c.bf16 %v2245, %v2037
        %v3932 = vpack.c.bf16 %v2557, %v2349
        %v3933 = vpack.c.bf16 %v2661, %v2453
        %v3934 = vpack.c.bf16 %v2973, %v2765
        %v3935 = vpack.c.bf16 %v3077, %v2869
        %v3936 = vpack.c.bf16 %v3389, %v3181
        %v3937 = vpack.c.bf16 %v3493, %v3285
        %v3938 = vpack.c.bf16 %v3805, %v3597
        %v3939 = vpack.c.bf16 %v3909, %v3701
        %v3940 = vld [vmem:[#allocation5] sm:$0xff]
        %v3941 = vld [vmem:[#allocation5 + $0x8] sm:$0xff]
        %v3942 = vld [vmem:[#allocation5 + $0x10] sm:$0xff]
        %v3943 = vld [vmem:[#allocation5 + $0x18] sm:$0xff]
        %v3944 = vld [vmem:[#allocation5 + $0x20] sm:$0xff]
        %v3945 = vld [vmem:[#allocation5 + $0x28] sm:$0xff]
        %v3946 = vld [vmem:[#allocation5 + $0x30] sm:$0xff]
        %v3947 = vld [vmem:[#allocation5 + $0x38] sm:$0xff]
        %v3948 = vld [vmem:[#allocation5 + $0x40] sm:$0xff]
        %v3949 = vld [vmem:[#allocation5 + $0x48] sm:$0xff]
        %v3950 = vld [vmem:[#allocation5 + $0x50] sm:$0xff]
        %v3951 = vld [vmem:[#allocation5 + $0x58] sm:$0xff]
        %v3952 = vld [vmem:[#allocation5 + $0x60] sm:$0xff]
        %v3953 = vld [vmem:[#allocation5 + $0x68] sm:$0xff]
        %v3954 = vld [vmem:[#allocation5 + $0x70] sm:$0xff]
        %v3955 = vld [vmem:[#allocation5 + $0x78] sm:$0xff]
        %v3956 = vld [vmem:[#allocation5 + $0x80] sm:$0xff]
        %v3957 = vld [vmem:[#allocation5 + $0x88] sm:$0xff]
        %v3958 = vld [vmem:[#allocation5 + $0x90] sm:$0xff]
        %v3959 = vld [vmem:[#allocation5 + $0x98] sm:$0xff]
        %v3960 = vld [vmem:[#allocation5 + $0xa0] sm:$0xff]
        %v3961 = vld [vmem:[#allocation5 + $0xa8] sm:$0xff]
        %v3962 = vld [vmem:[#allocation5 + $0xb0] sm:$0xff]
        %v3963 = vld [vmem:[#allocation5 + $0xb8] sm:$0xff]
        %v3964 = vld [vmem:[#allocation5 + $0xc0] sm:$0xff]
        %v3965 = vld [vmem:[#allocation5 + $0xc8] sm:$0xff]
        %v3966 = vld [vmem:[#allocation5 + $0xd0] sm:$0xff]
        %v3967 = vld [vmem:[#allocation5 + $0xd8] sm:$0xff]
        %v3968 = vld [vmem:[#allocation5 + $0xe0] sm:$0xff]
        %v3969 = vld [vmem:[#allocation5 + $0xe8] sm:$0xff]
        %v3970 = vld [vmem:[#allocation5 + $0xf0] sm:$0xff]
        %v3971 = vld [vmem:[#allocation5 + $0xf8] sm:$0xff]
        %v3972 = vld [vmem:[#allocation5 + $0x100] sm:$0xff]
        %v3973 = vld [vmem:[#allocation5 + $0x108] sm:$0xff]
        %v3974 = vld [vmem:[#allocation5 + $0x110] sm:$0xff]
        %v3975 = vld [vmem:[#allocation5 + $0x118] sm:$0xff]
        %v3976 = vld [vmem:[#allocation5 + $0x120] sm:$0xff]
        %v3977 = vld [vmem:[#allocation5 + $0x128] sm:$0xff]
        %v3978 = vld [vmem:[#allocation5 + $0x130] sm:$0xff]
        %v3979 = vld [vmem:[#allocation5 + $0x138] sm:$0xff]
        %v3980 = vld [vmem:[#allocation5 + $0x140] sm:$0xff]
        %v3981 = vld [vmem:[#allocation5 + $0x148] sm:$0xff]
        %v3982 = vld [vmem:[#allocation5 + $0x150] sm:$0xff]
        %v3983 = vld [vmem:[#allocation5 + $0x158] sm:$0xff]
        %v3984 = vld [vmem:[#allocation5 + $0x160] sm:$0xff]
        %v3985 = vld [vmem:[#allocation5 + $0x168] sm:$0xff]
        %v3986 = vld [vmem:[#allocation5 + $0x170] sm:$0xff]
        %v3987 = vld [vmem:[#allocation5 + $0x178] sm:$0xff]
        %v4036 = vunpack.c.l.b16 %v3940
        %v4037 = vunpack.c.h.b16 %v3940
        %v4038 = vunpack.c.l.b16 %v3941
        %v4039 = vunpack.c.h.b16 %v3941
        %v4040 = vunpack.c.l.b16 %v3942
        %v4041 = vunpack.c.h.b16 %v3942
        %v4042 = vunpack.c.l.b16 %v3943
        %v4043 = vunpack.c.h.b16 %v3943
        %v4044 = vunpack.c.l.b16 %v3944
        %v4045 = vunpack.c.h.b16 %v3944
        %v4046 = vunpack.c.l.b16 %v3945
        %v4047 = vunpack.c.h.b16 %v3945
        %v4048 = vunpack.c.l.b16 %v3946
        %v4049 = vunpack.c.h.b16 %v3946
        %v4050 = vunpack.c.l.b16 %v3947
        %v4051 = vunpack.c.h.b16 %v3947
        %v4052 = vunpack.c.l.b16 %v3948
        %v4053 = vunpack.c.h.b16 %v3948
        %v4054 = vunpack.c.l.b16 %v3949
        %v4055 = vunpack.c.h.b16 %v3949
        %v4056 = vunpack.c.l.b16 %v3950
        %v4057 = vunpack.c.h.b16 %v3950
        %v4058 = vunpack.c.l.b16 %v3951
        %v4059 = vunpack.c.h.b16 %v3951
        %v4060 = vunpack.c.l.b16 %v3952
        %v4061 = vunpack.c.h.b16 %v3952
        %v4062 = vunpack.c.l.b16 %v3953
        %v4063 = vunpack.c.h.b16 %v3953
        %v4064 = vunpack.c.l.b16 %v3954
        %v4065 = vunpack.c.h.b16 %v3954
        %v4066 = vunpack.c.l.b16 %v3955
        %v4067 = vunpack.c.h.b16 %v3955
        %v4068 = vunpack.c.l.b16 %v3956
        %v4069 = vunpack.c.h.b16 %v3956
        %v4070 = vunpack.c.l.b16 %v3957
        %v4071 = vunpack.c.h.b16 %v3957
        %v4072 = vunpack.c.l.b16 %v3958
        %v4073 = vunpack.c.h.b16 %v3958
        %v4074 = vunpack.c.l.b16 %v3959
        %v4075 = vunpack.c.h.b16 %v3959
        %v4076 = vunpack.c.l.b16 %v3960
        %v4077 = vunpack.c.h.b16 %v3960
        %v4078 = vunpack.c.l.b16 %v3961
        %v4079 = vunpack.c.h.b16 %v3961
        %v4080 = vunpack.c.l.b16 %v3962
        %v4081 = vunpack.c.h.b16 %v3962
        %v4082 = vunpack.c.l.b16 %v3963
        %v4083 = vunpack.c.h.b16 %v3963
        %v4084 = vunpack.c.l.b16 %v3964
        %v4085 = vunpack.c.h.b16 %v3964
        %v4086 = vunpack.c.l.b16 %v3965
        %v4087 = vunpack.c.h.b16 %v3965
        %v4088 = vunpack.c.l.b16 %v3966
        %v4089 = vunpack.c.h.b16 %v3966
        %v4090 = vunpack.c.l.b16 %v3967
        %v4091 = vunpack.c.h.b16 %v3967
        %v4092 = vunpack.c.l.b16 %v3968
        %v4093 = vunpack.c.h.b16 %v3968
        %v4094 = vunpack.c.l.b16 %v3969
        %v4095 = vunpack.c.h.b16 %v3969
        %v4096 = vunpack.c.l.b16 %v3970
        %v4097 = vunpack.c.h.b16 %v3970
        %v4098 = vunpack.c.l.b16 %v3971
        %v4099 = vunpack.c.h.b16 %v3971
        %v4100 = vunpack.c.l.b16 %v3972
        %v4101 = vunpack.c.h.b16 %v3972
        %v4102 = vunpack.c.l.b16 %v3973
        %v4103 = vunpack.c.h.b16 %v3973
        %v4104 = vunpack.c.l.b16 %v3974
        %v4105 = vunpack.c.h.b16 %v3974
        %v4106 = vunpack.c.l.b16 %v3975
        %v4107 = vunpack.c.h.b16 %v3975
        %v4108 = vunpack.c.l.b16 %v3976
        %v4109 = vunpack.c.h.b16 %v3976
        %v4110 = vunpack.c.l.b16 %v3977
        %v4111 = vunpack.c.h.b16 %v3977
        %v4112 = vunpack.c.l.b16 %v3978
        %v4113 = vunpack.c.h.b16 %v3978
        %v4114 = vunpack.c.l.b16 %v3979
        %v4115 = vunpack.c.h.b16 %v3979
        %v4116 = vunpack.c.l.b16 %v3980
        %v4117 = vunpack.c.h.b16 %v3980
        %v4118 = vunpack.c.l.b16 %v3981
        %v4119 = vunpack.c.h.b16 %v3981
        %v4120 = vunpack.c.l.b16 %v3982
        %v4121 = vunpack.c.h.b16 %v3982
        %v4122 = vunpack.c.l.b16 %v3983
        %v4123 = vunpack.c.h.b16 %v3983
        %v4124 = vunpack.c.l.b16 %v3984
        %v4125 = vunpack.c.h.b16 %v3984
        %v4126 = vunpack.c.l.b16 %v3985
        %v4127 = vunpack.c.h.b16 %v3985
        %v4128 = vunpack.c.l.b16 %v3986
        %v4129 = vunpack.c.h.b16 %v3986
        %v4130 = vunpack.c.l.b16 %v3987
        %v4131 = vunpack.c.h.b16 %v3987
        %v4132 = vpack.c.b16 %v4040, %v4036
        %v4133 = vpack.c.b16 %v4041, %v4037
        %v4134 = vpack.c.b16 %v4042, %v4038
        %v4135 = vpack.c.b16 %v4043, %v4039
        %v4136 = vpack.c.b16 %v4048, %v4044
        %v4137 = vpack.c.b16 %v4049, %v4045
        %v4138 = vpack.c.b16 %v4050, %v4046
        %v4139 = vpack.c.b16 %v4051, %v4047
        %v4140 = vpack.c.b16 %v4056, %v4052
        %v4141 = vpack.c.b16 %v4057, %v4053
        %v4142 = vpack.c.b16 %v4058, %v4054
        %v4143 = vpack.c.b16 %v4059, %v4055
        %v4144 = vpack.c.b16 %v4064, %v4060
        %v4145 = vpack.c.b16 %v4065, %v4061
        %v4146 = vpack.c.b16 %v4066, %v4062
        %v4147 = vpack.c.b16 %v4067, %v4063
        %v4148 = vpack.c.b16 %v4072, %v4068
        %v4149 = vpack.c.b16 %v4073, %v4069
        %v4150 = vpack.c.b16 %v4074, %v4070
        %v4151 = vpack.c.b16 %v4075, %v4071
        %v4152 = vpack.c.b16 %v4080, %v4076
        %v4153 = vpack.c.b16 %v4081, %v4077
        %v4154 = vpack.c.b16 %v4082, %v4078
        %v4155 = vpack.c.b16 %v4083, %v4079
        %v4156 = vpack.c.b16 %v4088, %v4084
        %v4157 = vpack.c.b16 %v4089, %v4085
        %v4158 = vpack.c.b16 %v4090, %v4086
        %v4159 = vpack.c.b16 %v4091, %v4087
        %v4160 = vpack.c.b16 %v4096, %v4092
        %v4161 = vpack.c.b16 %v4097, %v4093
        %v4162 = vpack.c.b16 %v4098, %v4094
        %v4163 = vpack.c.b16 %v4099, %v4095
        %v4164 = vpack.c.b16 %v4104, %v4100
        %v4165 = vpack.c.b16 %v4105, %v4101
        %v4166 = vpack.c.b16 %v4106, %v4102
        %v4167 = vpack.c.b16 %v4107, %v4103
        %v4168 = vpack.c.b16 %v4112, %v4108
        %v4169 = vpack.c.b16 %v4113, %v4109
        %v4170 = vpack.c.b16 %v4114, %v4110
        %v4171 = vpack.c.b16 %v4115, %v4111
        %v4172 = vpack.c.b16 %v4120, %v4116
        %v4173 = vpack.c.b16 %v4121, %v4117
        %v4174 = vpack.c.b16 %v4122, %v4118
        %v4175 = vpack.c.b16 %v4123, %v4119
        %v4176 = vpack.c.b16 %v4128, %v4124
        %v4177 = vpack.c.b16 %v4129, %v4125
        %v4178 = vpack.c.b16 %v4130, %v4126
        %v4179 = vpack.c.b16 %v4131, %v4127
        %vm4228 = vcmask 523264
        %v4230 = vsel %vm4228, %v3925, 0
        %v4233 = vsel %vm4228, %v3927, 0
        %v4236 = vsel %vm4228, %v3929, 0
        %v4239 = vsel %vm4228, %v3931, 0
        %v4242 = vsel %vm4228, %v3933, 0
        %v4245 = vsel %vm4228, %v3935, 0
        %v4248 = vsel %vm4228, %v3937, 0
        %v4251 = vsel %vm4228, %v3939, 0
        %4253 = vmatprep.subr.bf16.mxu0 %v4161
        %4254 = vmatpush1.bf16.msra.mxu0 %v4160
        %4255 = vmatprep.subr.bf16.mxu0 %v4157
        %4256 = vmatpush1.bf16.msra.mxu0 %v4156
        %4257 = vmatprep.subr.bf16.mxu0 %v4153
        %4258 = vmatpush1.bf16.msra.mxu0 %v4152
        %4259 = vmatprep.subr.bf16.mxu0 %v4149
        %4260 = vmatpush1.bf16.msra.mxu0 %v4148
        %4261 = vmatprep.subr.bf16.mxu0 %v4145
        %4262 = vmatpush1.bf16.msra.mxu0 %v4144
        %4263 = vmatprep.subr.bf16.mxu0 %v4141
        %4264 = vmatpush1.bf16.msra.mxu0 %v4140
        %4265 = vmatprep.subr.bf16.mxu0 %v4137
        %4266 = vmatpush1.bf16.msra.mxu0 %v4136
        %4267 = vmatprep.subr.bf16.mxu0 %v4133
        %4268 = vmatpush1.bf16.msra.mxu0 %v4132
        %4269 = vmatprep.subr.bf16.mxu0 0
        %4270 = vmatpush2.bf16.msra.mxu0 0
        %4271 = vmatprep.subr.bf16.mxu0 0
        %4272 = vmatpush2.bf16.msra.mxu0 0
        %4273 = vmatprep.subr.bf16.mxu0 0
        %4274 = vmatpush2.bf16.msra.mxu0 0
        %4275 = vmatprep.subr.bf16.mxu0 0
        %4276 = vmatpush2.bf16.msra.mxu0 0
        %4277 = vmatprep.subr.bf16.mxu0 %v4177
        %4278 = vmatpush2.bf16.msra.mxu0 %v4176
        %4279 = vmatprep.subr.bf16.mxu0 %v4173
        %4280 = vmatpush2.bf16.msra.mxu0 %v4172
        %4281 = vmatprep.subr.bf16.mxu0 %v4169
        %4282 = vmatpush2.bf16.msra.mxu0 %v4168
        %4283 = vmatprep.subr.bf16.mxu0 %v4165
        %4284 = vmatpush2.bf16.msra.mxu0 %v4164
        %4285 = vmatprep.mubr.bf16.mxu0 %v4230
        %4286 = vmatmul.mubr.bf16.gmra.mxu0 %v3924
        %v4287 = vpop.f32.mrf.mxu0
        %v4288 = vadd.f32 0.0, %v4287
        %v4289 = vpop.f32.mrf.mxu0
        %v4290 = vadd.f32 0.0, %v4289
        %v4291 = vpop.f32.mrf.mxu0
        %v4292 = vadd.f32 0.0, %v4291
        %v4293 = vpop.f32.mrf.mxu0
        %v4294 = vadd.f32 0.0, %v4293
        %4295 = vmatprep.mubr.bf16.mxu0 %v4233
        %4296 = vmatmul.mubr.bf16.gmra.mxu0 %v3926
        %v4297 = vpop.f32.mrf.mxu0
        %v4298 = vadd.f32 0.0, %v4297
        %v4299 = vpop.f32.mrf.mxu0
        %v4300 = vadd.f32 0.0, %v4299
        %v4301 = vpop.f32.mrf.mxu0
        %v4302 = vadd.f32 0.0, %v4301
        %v4303 = vpop.f32.mrf.mxu0
        %v4304 = vadd.f32 0.0, %v4303
        %4305 = vmatprep.mubr.bf16.mxu0 %v4236
        %4306 = vmatmul.mubr.bf16.gmra.mxu0 %v3928
        %v4307 = vpop.f32.mrf.mxu0
        %v4308 = vadd.f32 0.0, %v4307
        %v4309 = vpop.f32.mrf.mxu0
        %v4310 = vadd.f32 0.0, %v4309
        %v4311 = vpop.f32.mrf.mxu0
        %v4312 = vadd.f32 0.0, %v4311
        %v4313 = vpop.f32.mrf.mxu0
        %v4314 = vadd.f32 0.0, %v4313
        %4315 = vmatprep.mubr.bf16.mxu0 %v4239
        %4316 = vmatmul.mubr.bf16.gmra.mxu0 %v3930
        %v4317 = vpop.f32.mrf.mxu0
        %v4318 = vadd.f32 0.0, %v4317
        %v4319 = vpop.f32.mrf.mxu0
        %v4320 = vadd.f32 0.0, %v4319
        %v4321 = vpop.f32.mrf.mxu0
        %v4322 = vadd.f32 0.0, %v4321
        %v4323 = vpop.f32.mrf.mxu0
        %v4324 = vadd.f32 0.0, %v4323
        %4325 = vmatprep.mubr.bf16.mxu0 %v4242
        %4326 = vmatmul.mubr.bf16.gmra.mxu0 %v3932
        %v4327 = vpop.f32.mrf.mxu0
        %v4328 = vadd.f32 0.0, %v4327
        %v4329 = vpop.f32.mrf.mxu0
        %v4330 = vadd.f32 0.0, %v4329
        %v4331 = vpop.f32.mrf.mxu0
        %v4332 = vadd.f32 0.0, %v4331
        %v4333 = vpop.f32.mrf.mxu0
        %v4334 = vadd.f32 0.0, %v4333
        %4335 = vmatprep.mubr.bf16.mxu0 %v4245
        %4336 = vmatmul.mubr.bf16.gmra.mxu0 %v3934
        %v4337 = vpop.f32.mrf.mxu0
        %v4338 = vadd.f32 0.0, %v4337
        %v4339 = vpop.f32.mrf.mxu0
        %v4340 = vadd.f32 0.0, %v4339
        %v4341 = vpop.f32.mrf.mxu0
        %v4342 = vadd.f32 0.0, %v4341
        %v4343 = vpop.f32.mrf.mxu0
        %v4344 = vadd.f32 0.0, %v4343
        %4345 = vmatprep.mubr.bf16.mxu0 %v4248
        %4346 = vmatmul.mubr.bf16.gmra.mxu0 %v3936
        %v4347 = vpop.f32.mrf.mxu0
        %v4348 = vadd.f32 0.0, %v4347
        %v4349 = vpop.f32.mrf.mxu0
        %v4350 = vadd.f32 0.0, %v4349
        %v4351 = vpop.f32.mrf.mxu0
        %v4352 = vadd.f32 0.0, %v4351
        %v4353 = vpop.f32.mrf.mxu0
        %v4354 = vadd.f32 0.0, %v4353
        %4355 = vmatprep.mubr.bf16.mxu0 %v4251
        %4356 = vmatmul.mubr.bf16.gmra.mxu0 %v3938
        %v4357 = vpop.f32.mrf.mxu0
        %v4358 = vadd.f32 0.0, %v4357
        %v4359 = vpop.f32.mrf.mxu0
        %v4360 = vadd.f32 0.0, %v4359
        %v4361 = vpop.f32.mrf.mxu0
        %v4362 = vadd.f32 0.0, %v4361
        %v4363 = vpop.f32.mrf.mxu0
        %v4364 = vadd.f32 0.0, %v4363
        %4365 = vdwg.mxu0
        %4366 = vmatprep.subr.bf16.mxu0 %v4163
        %4367 = vmatpush1.bf16.msra.mxu0 %v4162
        %4368 = vmatprep.subr.bf16.mxu0 %v4159
        %4369 = vmatpush1.bf16.msra.mxu0 %v4158
        %4370 = vmatprep.subr.bf16.mxu0 %v4155
        %4371 = vmatpush1.bf16.msra.mxu0 %v4154
        %4372 = vmatprep.subr.bf16.mxu0 %v4151
        %4373 = vmatpush1.bf16.msra.mxu0 %v4150
        %4374 = vmatprep.subr.bf16.mxu0 %v4147
        %4375 = vmatpush1.bf16.msra.mxu0 %v4146
        %4376 = vmatprep.subr.bf16.mxu0 %v4143
        %4377 = vmatpush1.bf16.msra.mxu0 %v4142
        %4378 = vmatprep.subr.bf16.mxu0 %v4139
        %4379 = vmatpush1.bf16.msra.mxu0 %v4138
        %4380 = vmatprep.subr.bf16.mxu0 %v4135
        %4381 = vmatpush1.bf16.msra.mxu0 %v4134
        %4382 = vmatprep.subr.bf16.mxu0 0
        %4383 = vmatpush2.bf16.msra.mxu0 0
        %4384 = vmatprep.subr.bf16.mxu0 0
        %4385 = vmatpush2.bf16.msra.mxu0 0
        %4386 = vmatprep.subr.bf16.mxu0 0
        %4387 = vmatpush2.bf16.msra.mxu0 0
        %4388 = vmatprep.subr.bf16.mxu0 0
        %4389 = vmatpush2.bf16.msra.mxu0 0
        %4390 = vmatprep.subr.bf16.mxu0 %v4179
        %4391 = vmatpush2.bf16.msra.mxu0 %v4178
        %4392 = vmatprep.subr.bf16.mxu0 %v4175
        %4393 = vmatpush2.bf16.msra.mxu0 %v4174
        %4394 = vmatprep.subr.bf16.mxu0 %v4171
        %4395 = vmatpush2.bf16.msra.mxu0 %v4170
        %4396 = vmatprep.subr.bf16.mxu0 %v4167
        %4397 = vmatpush2.bf16.msra.mxu0 %v4166
        %4398 = vmatprep.mubr.bf16.mxu0 %v4230
        %4399 = vmatmul.mubr.bf16.gmra.mxu0 %v3924
        %v4400 = vpop.f32.mrf.mxu0
        %v4401 = vadd.f32 0.0, %v4400
        %v4402 = vpop.f32.mrf.mxu0
        %v4403 = vadd.f32 0.0, %v4402
        %v4404 = vpop.f32.mrf.mxu0
        %v4405 = vadd.f32 0.0, %v4404
        %v4406 = vpop.f32.mrf.mxu0
        %v4407 = vadd.f32 0.0, %v4406
        %4408 = vmatprep.mubr.bf16.mxu0 %v4233
        %4409 = vmatmul.mubr.bf16.gmra.mxu0 %v3926
        %v4410 = vpop.f32.mrf.mxu0
        %v4411 = vadd.f32 0.0, %v4410
        %v4412 = vpop.f32.mrf.mxu0
        %v4413 = vadd.f32 0.0, %v4412
        %v4414 = vpop.f32.mrf.mxu0
        %v4415 = vadd.f32 0.0, %v4414
        %v4416 = vpop.f32.mrf.mxu0
        %v4417 = vadd.f32 0.0, %v4416
        %4418 = vmatprep.mubr.bf16.mxu0 %v4236
        %4419 = vmatmul.mubr.bf16.gmra.mxu0 %v3928
        %v4420 = vpop.f32.mrf.mxu0
        %v4421 = vadd.f32 0.0, %v4420
        %v4422 = vpop.f32.mrf.mxu0
        %v4423 = vadd.f32 0.0, %v4422
        %v4424 = vpop.f32.mrf.mxu0
        %v4425 = vadd.f32 0.0, %v4424
        %v4426 = vpop.f32.mrf.mxu0
        %v4427 = vadd.f32 0.0, %v4426
        %4428 = vmatprep.mubr.bf16.mxu0 %v4239
        %4429 = vmatmul.mubr.bf16.gmra.mxu0 %v3930
        %v4430 = vpop.f32.mrf.mxu0
        %v4431 = vadd.f32 0.0, %v4430
        %v4432 = vpop.f32.mrf.mxu0
        %v4433 = vadd.f32 0.0, %v4432
        %v4434 = vpop.f32.mrf.mxu0
        %v4435 = vadd.f32 0.0, %v4434
        %v4436 = vpop.f32.mrf.mxu0
        %v4437 = vadd.f32 0.0, %v4436
        %4438 = vmatprep.mubr.bf16.mxu0 %v4242
        %4439 = vmatmul.mubr.bf16.gmra.mxu0 %v3932
        %v4440 = vpop.f32.mrf.mxu0
        %v4441 = vadd.f32 0.0, %v4440
        %v4442 = vpop.f32.mrf.mxu0
        %v4443 = vadd.f32 0.0, %v4442
        %v4444 = vpop.f32.mrf.mxu0
        %v4445 = vadd.f32 0.0, %v4444
        %v4446 = vpop.f32.mrf.mxu0
        %v4447 = vadd.f32 0.0, %v4446
        %4448 = vmatprep.mubr.bf16.mxu0 %v4245
        %4449 = vmatmul.mubr.bf16.gmra.mxu0 %v3934
        %v4450 = vpop.f32.mrf.mxu0
        %v4451 = vadd.f32 0.0, %v4450
        %v4452 = vpop.f32.mrf.mxu0
        %v4453 = vadd.f32 0.0, %v4452
        %v4454 = vpop.f32.mrf.mxu0
        %v4455 = vadd.f32 0.0, %v4454
        %v4456 = vpop.f32.mrf.mxu0
        %v4457 = vadd.f32 0.0, %v4456
        %4458 = vmatprep.mubr.bf16.mxu0 %v4248
        %4459 = vmatmul.mubr.bf16.gmra.mxu0 %v3936
        %v4460 = vpop.f32.mrf.mxu0
        %v4461 = vadd.f32 0.0, %v4460
        %v4462 = vpop.f32.mrf.mxu0
        %v4463 = vadd.f32 0.0, %v4462
        %v4464 = vpop.f32.mrf.mxu0
        %v4465 = vadd.f32 0.0, %v4464
        %v4466 = vpop.f32.mrf.mxu0
        %v4467 = vadd.f32 0.0, %v4466
        %4468 = vmatprep.mubr.bf16.mxu0 %v4251
        %4469 = vmatmul.mubr.bf16.gmra.mxu0 %v3938
        %v4470 = vpop.f32.mrf.mxu0
        %v4471 = vadd.f32 0.0, %v4470
        %v4472 = vpop.f32.mrf.mxu0
        %v4473 = vadd.f32 0.0, %v4472
        %v4474 = vpop.f32.mrf.mxu0
        %v4475 = vadd.f32 0.0, %v4474
        %v4476 = vpop.f32.mrf.mxu0
        %v4477 = vadd.f32 0.0, %v4476
        %4478 = vdwg.mxu0
        %v4485 = vunpack.c.l.b16 %v3918
        %v4486 = vunpack.c.h.b16 %v3918
        %v4487 = vunpack.c.l.b16 %v3919
        %v4488 = vunpack.c.h.b16 %v3919
        %v4489 = vunpack.c.l.b16 %v3920
        %v4490 = vunpack.c.h.b16 %v3920
        %v4491 = vunpack.c.l.b16 %v3921
        %v4492 = vunpack.c.h.b16 %v3921
        %v4493 = vunpack.c.l.b16 %v3922
        %v4494 = vunpack.c.h.b16 %v3922
        %v4495 = vunpack.c.l.b16 %v3923
        %v4496 = vunpack.c.h.b16 %v3923
        %v4497 = vpack.c.b16 %v4489, %v4485
        %v4498 = vpack.c.b16 %v4490, %v4486
        %v4499 = vpack.c.b16 %v4491, %v4487
        %v4500 = vpack.c.b16 %v4492, %v4488
        %v4501 = vpack.c.b16 %v4493, %v4493
        %v4502 = vpack.c.b16 %v4494, %v4494
        %v4503 = vpack.c.b16 %v4495, %v4495
        %v4504 = vpack.c.b16 %v4496, %v4496
        %v4510 = vsel %vm372, %v3910, 0
        %v4513 = vsel %vm372, %v3911, 0
        %v4516 = vsel %vm372, %v3912, 0
        %v4519 = vsel %vm372, %v3913, 0
        %v4522 = vsel %vm372, %v3914, 0
        %v4525 = vsel %vm372, %v3915, 0
        %v4528 = vsel %vm372, %v3916, 0
        %v4531 = vsel %vm372, %v3917, 0
        %vm4533 = vcmask 1043456
        %v4535 = vsel %vm4533, %v4501, 0
        %v4538 = vsel %vm4533, %v4502, 0
        %v4541 = vsel %vm4533, %v4503, 0
        %v4544 = vsel %vm4533, %v4504, 0
        %4546 = vmatprep.subr.bf16.mxu0 0
        %4547 = vmatpush1.bf16.msra.mxu0 0
        %4548 = vmatprep.subr.bf16.mxu0 0
        %4549 = vmatpush1.bf16.msra.mxu0 0
        %4550 = vmatprep.subr.bf16.mxu0 0
        %4551 = vmatpush1.bf16.msra.mxu0 0
        %4552 = vmatprep.subr.bf16.mxu0 0
        %4553 = vmatpush1.bf16.msra.mxu0 0
        %4554 = vmatprep.subr.bf16.mxu0 0
        %4555 = vmatpush1.bf16.msra.mxu0 0
        %4556 = vmatprep.subr.bf16.mxu0 0
        %4557 = vmatpush1.bf16.msra.mxu0 0
        %4558 = vmatprep.subr.bf16.mxu0 %v4538
        %4559 = vmatpush1.bf16.msra.mxu0 %v4535
        %4560 = vmatprep.subr.bf16.mxu0 %v4498
        %4561 = vmatpush1.bf16.msra.mxu0 %v4497
        %4562 = vmatprep.subr.bf16.mxu0 0
        %4563 = vmatpush2.bf16.msra.mxu0 0
        %4564 = vmatprep.subr.bf16.mxu0 0
        %4565 = vmatpush2.bf16.msra.mxu0 0
        %4566 = vmatprep.subr.bf16.mxu0 0
        %4567 = vmatpush2.bf16.msra.mxu0 0
        %4568 = vmatprep.subr.bf16.mxu0 0
        %4569 = vmatpush2.bf16.msra.mxu0 0
        %4570 = vmatprep.subr.bf16.mxu0 0
        %4571 = vmatpush2.bf16.msra.mxu0 0
        %4572 = vmatprep.subr.bf16.mxu0 0
        %4573 = vmatpush2.bf16.msra.mxu0 0
        %4574 = vmatprep.subr.bf16.mxu0 0
        %4575 = vmatpush2.bf16.msra.mxu0 0
        %4576 = vmatprep.subr.bf16.mxu0 0
        %4577 = vmatpush2.bf16.msra.mxu0 0
        %4578 = vmatprep.mubr.bf16.mxu0 0
        %4579 = vmatmul.mubr.bf16.gmra.mxu0 %v4510
        %v4580 = vpop.f32.mrf.mxu0
        %v4581 = vadd.f32 %v4288, %v4580
        %v4582 = vpop.f32.mrf.mxu0
        %v4583 = vadd.f32 %v4290, %v4582
        %v4584 = vpop.f32.mrf.mxu0
        %v4585 = vadd.f32 %v4292, %v4584
        %v4586 = vpop.f32.mrf.mxu0
        %v4587 = vadd.f32 %v4294, %v4586
        %4588 = vmatprep.mubr.bf16.mxu0 0
        %4589 = vmatmul.mubr.bf16.gmra.mxu0 %v4513
        %v4590 = vpop.f32.mrf.mxu0
        %v4591 = vadd.f32 %v4298, %v4590
        %v4592 = vpop.f32.mrf.mxu0
        %v4593 = vadd.f32 %v4300, %v4592
        %v4594 = vpop.f32.mrf.mxu0
        %v4595 = vadd.f32 %v4302, %v4594
        %v4596 = vpop.f32.mrf.mxu0
        %v4597 = vadd.f32 %v4304, %v4596
        %4598 = vmatprep.mubr.bf16.mxu0 0
        %4599 = vmatmul.mubr.bf16.gmra.mxu0 %v4516
        %v4600 = vpop.f32.mrf.mxu0
        %v4601 = vadd.f32 %v4308, %v4600
        %v4602 = vpop.f32.mrf.mxu0
        %v4603 = vadd.f32 %v4310, %v4602
        %v4604 = vpop.f32.mrf.mxu0
        %v4605 = vadd.f32 %v4312, %v4604
        %v4606 = vpop.f32.mrf.mxu0
        %v4607 = vadd.f32 %v4314, %v4606
        %4608 = vmatprep.mubr.bf16.mxu0 0
        %4609 = vmatmul.mubr.bf16.gmra.mxu0 %v4519
        %v4610 = vpop.f32.mrf.mxu0
        %v4611 = vadd.f32 %v4318, %v4610
        %v4612 = vpop.f32.mrf.mxu0
        %v4613 = vadd.f32 %v4320, %v4612
        %v4614 = vpop.f32.mrf.mxu0
        %v4615 = vadd.f32 %v4322, %v4614
        %v4616 = vpop.f32.mrf.mxu0
        %v4617 = vadd.f32 %v4324, %v4616
        %4618 = vmatprep.mubr.bf16.mxu0 0
        %4619 = vmatmul.mubr.bf16.gmra.mxu0 %v4522
        %v4620 = vpop.f32.mrf.mxu0
        %v4621 = vadd.f32 %v4328, %v4620
        %v4622 = vpop.f32.mrf.mxu0
        %v4623 = vadd.f32 %v4330, %v4622
        %v4624 = vpop.f32.mrf.mxu0
        %v4625 = vadd.f32 %v4332, %v4624
        %v4626 = vpop.f32.mrf.mxu0
        %v4627 = vadd.f32 %v4334, %v4626
        %4628 = vmatprep.mubr.bf16.mxu0 0
        %4629 = vmatmul.mubr.bf16.gmra.mxu0 %v4525
        %v4630 = vpop.f32.mrf.mxu0
        %v4631 = vadd.f32 %v4338, %v4630
        %v4632 = vpop.f32.mrf.mxu0
        %v4633 = vadd.f32 %v4340, %v4632
        %v4634 = vpop.f32.mrf.mxu0
        %v4635 = vadd.f32 %v4342, %v4634
        %v4636 = vpop.f32.mrf.mxu0
        %v4637 = vadd.f32 %v4344, %v4636
        %4638 = vmatprep.mubr.bf16.mxu0 0
        %4639 = vmatmul.mubr.bf16.gmra.mxu0 %v4528
        %v4640 = vpop.f32.mrf.mxu0
        %v4641 = vadd.f32 %v4348, %v4640
        %v4642 = vpop.f32.mrf.mxu0
        %v4643 = vadd.f32 %v4350, %v4642
        %v4644 = vpop.f32.mrf.mxu0
        %v4645 = vadd.f32 %v4352, %v4644
        %v4646 = vpop.f32.mrf.mxu0
        %v4647 = vadd.f32 %v4354, %v4646
        %4648 = vmatprep.mubr.bf16.mxu0 0
        %4649 = vmatmul.mubr.bf16.gmra.mxu0 %v4531
        %v4650 = vpop.f32.mrf.mxu0
        %v4651 = vadd.f32 %v4358, %v4650
        %v4652 = vpop.f32.mrf.mxu0
        %v4653 = vadd.f32 %v4360, %v4652
        %v4654 = vpop.f32.mrf.mxu0
        %v4655 = vadd.f32 %v4362, %v4654
        %v4656 = vpop.f32.mrf.mxu0
        %v4657 = vadd.f32 %v4364, %v4656
        %4658 = vdwg.mxu0
        %4659 = vmatprep.subr.bf16.mxu0 0
        %4660 = vmatpush1.bf16.msra.mxu0 0
        %4661 = vmatprep.subr.bf16.mxu0 0
        %4662 = vmatpush1.bf16.msra.mxu0 0
        %4663 = vmatprep.subr.bf16.mxu0 0
        %4664 = vmatpush1.bf16.msra.mxu0 0
        %4665 = vmatprep.subr.bf16.mxu0 0
        %4666 = vmatpush1.bf16.msra.mxu0 0
        %4667 = vmatprep.subr.bf16.mxu0 0
        %4668 = vmatpush1.bf16.msra.mxu0 0
        %4669 = vmatprep.subr.bf16.mxu0 0
        %4670 = vmatpush1.bf16.msra.mxu0 0
        %4671 = vmatprep.subr.bf16.mxu0 %v4544
        %4672 = vmatpush1.bf16.msra.mxu0 %v4541
        %4673 = vmatprep.subr.bf16.mxu0 %v4500
        %4674 = vmatpush1.bf16.msra.mxu0 %v4499
        %4675 = vmatprep.subr.bf16.mxu0 0
        %4676 = vmatpush2.bf16.msra.mxu0 0
        %4677 = vmatprep.subr.bf16.mxu0 0
        %4678 = vmatpush2.bf16.msra.mxu0 0
        %4679 = vmatprep.subr.bf16.mxu0 0
        %4680 = vmatpush2.bf16.msra.mxu0 0
        %4681 = vmatprep.subr.bf16.mxu0 0
        %4682 = vmatpush2.bf16.msra.mxu0 0
        %4683 = vmatprep.subr.bf16.mxu0 0
        %4684 = vmatpush2.bf16.msra.mxu0 0
        %4685 = vmatprep.subr.bf16.mxu0 0
        %4686 = vmatpush2.bf16.msra.mxu0 0
        %4687 = vmatprep.subr.bf16.mxu0 0
        %4688 = vmatpush2.bf16.msra.mxu0 0
        %4689 = vmatprep.subr.bf16.mxu0 0
        %4690 = vmatpush2.bf16.msra.mxu0 0
        %4691 = vmatprep.mubr.bf16.mxu0 0
        %4692 = vmatmul.mubr.bf16.gmra.mxu0 %v4510
        %v4693 = vpop.f32.mrf.mxu0
        %v4694 = vadd.f32 %v4401, %v4693
        %v4695 = vpop.f32.mrf.mxu0
        %v4696 = vadd.f32 %v4403, %v4695
        %v4697 = vpop.f32.mrf.mxu0
        %v4698 = vadd.f32 %v4405, %v4697
        %v4699 = vpop.f32.mrf.mxu0
        %v4700 = vadd.f32 %v4407, %v4699
        %4701 = vmatprep.mubr.bf16.mxu0 0
        %4702 = vmatmul.mubr.bf16.gmra.mxu0 %v4513
        %v4703 = vpop.f32.mrf.mxu0
        %v4704 = vadd.f32 %v4411, %v4703
        %v4705 = vpop.f32.mrf.mxu0
        %v4706 = vadd.f32 %v4413, %v4705
        %v4707 = vpop.f32.mrf.mxu0
        %v4708 = vadd.f32 %v4415, %v4707
        %v4709 = vpop.f32.mrf.mxu0
        %v4710 = vadd.f32 %v4417, %v4709
        %4711 = vmatprep.mubr.bf16.mxu0 0
        %4712 = vmatmul.mubr.bf16.gmra.mxu0 %v4516
        %v4713 = vpop.f32.mrf.mxu0
        %v4714 = vadd.f32 %v4421, %v4713
        %v4715 = vpop.f32.mrf.mxu0
        %v4716 = vadd.f32 %v4423, %v4715
        %v4717 = vpop.f32.mrf.mxu0
        %v4718 = vadd.f32 %v4425, %v4717
        %v4719 = vpop.f32.mrf.mxu0
        %v4720 = vadd.f32 %v4427, %v4719
        %4721 = vmatprep.mubr.bf16.mxu0 0
        %4722 = vmatmul.mubr.bf16.gmra.mxu0 %v4519
        %v4723 = vpop.f32.mrf.mxu0
        %v4724 = vadd.f32 %v4431, %v4723
        %v4725 = vpop.f32.mrf.mxu0
        %v4726 = vadd.f32 %v4433, %v4725
        %v4727 = vpop.f32.mrf.mxu0
        %v4728 = vadd.f32 %v4435, %v4727
        %v4729 = vpop.f32.mrf.mxu0
        %v4730 = vadd.f32 %v4437, %v4729
        %4731 = vmatprep.mubr.bf16.mxu0 0
        %4732 = vmatmul.mubr.bf16.gmra.mxu0 %v4522
        %v4733 = vpop.f32.mrf.mxu0
        %v4734 = vadd.f32 %v4441, %v4733
        %v4735 = vpop.f32.mrf.mxu0
        %v4736 = vadd.f32 %v4443, %v4735
        %v4737 = vpop.f32.mrf.mxu0
        %v4738 = vadd.f32 %v4445, %v4737
        %v4739 = vpop.f32.mrf.mxu0
        %v4740 = vadd.f32 %v4447, %v4739
        %4741 = vmatprep.mubr.bf16.mxu0 0
        %4742 = vmatmul.mubr.bf16.gmra.mxu0 %v4525
        %v4743 = vpop.f32.mrf.mxu0
        %v4744 = vadd.f32 %v4451, %v4743
        %v4745 = vpop.f32.mrf.mxu0
        %v4746 = vadd.f32 %v4453, %v4745
        %v4747 = vpop.f32.mrf.mxu0
        %v4748 = vadd.f32 %v4455, %v4747
        %v4749 = vpop.f32.mrf.mxu0
        %v4750 = vadd.f32 %v4457, %v4749
        %4751 = vmatprep.mubr.bf16.mxu0 0
        %4752 = vmatmul.mubr.bf16.gmra.mxu0 %v4528
        %v4753 = vpop.f32.mrf.mxu0
        %v4754 = vadd.f32 %v4461, %v4753
        %v4755 = vpop.f32.mrf.mxu0
        %v4756 = vadd.f32 %v4463, %v4755
        %v4757 = vpop.f32.mrf.mxu0
        %v4758 = vadd.f32 %v4465, %v4757
        %v4759 = vpop.f32.mrf.mxu0
        %v4760 = vadd.f32 %v4467, %v4759
        %4761 = vmatprep.mubr.bf16.mxu0 0
        %4762 = vmatmul.mubr.bf16.gmra.mxu0 %v4531
        %v4763 = vpop.f32.mrf.mxu0
        %v4764 = vadd.f32 %v4471, %v4763
        %v4765 = vpop.f32.mrf.mxu0
        %v4766 = vadd.f32 %v4473, %v4765
        %v4767 = vpop.f32.mrf.mxu0
        %v4768 = vadd.f32 %v4475, %v4767
        %v4769 = vpop.f32.mrf.mxu0
        %v4770 = vadd.f32 %v4477, %v4769
        %4771 = vdwg.mxu0
        %v4772 = vld [vmem:[%s5] sm:$0xf]
        %v4774 = vlaneseq
        %v4775 = vshrl.u32 %v4774, 7
        %v4776 = vsub.s32 0, %v4775
        %v4777 = vrot.slane %v4772, %v4776
        %v4778 = vlaneseq
        %v4779 = vshrl.u32 %v4778, 7
        %v4780 = vsub.s32 1, %v4779
        %v4781 = vrot.slane %v4772, %v4780
        %v4782 = vlaneseq
        %v4783 = vshrl.u32 %v4782, 7
        %v4784 = vsub.s32 2, %v4783
        %v4785 = vrot.slane %v4772, %v4784
        %v4786 = vlaneseq
        %v4787 = vshrl.u32 %v4786, 7
        %v4788 = vsub.s32 3, %v4787
        %v4789 = vrot.slane %v4772, %v4788
        %v4794 = vadd.f32 %v4581, %v4777
        %v4795 = vadd.f32 %v4583, %v4781
        %v4796 = vadd.f32 %v4694, %v4785
        %v4797 = vadd.f32 %v4696, %v4789
        %v4798 = vadd.f32 %v4585, %v4777
        %v4799 = vadd.f32 %v4587, %v4781
        %v4800 = vadd.f32 %v4698, %v4785
        %v4801 = vadd.f32 %v4700, %v4789
        %v4802 = vadd.f32 %v4591, %v4777
        %v4803 = vadd.f32 %v4593, %v4781
        %v4804 = vadd.f32 %v4704, %v4785
        %v4805 = vadd.f32 %v4706, %v4789
        %v4806 = vadd.f32 %v4595, %v4777
        %v4807 = vadd.f32 %v4597, %v4781
        %v4808 = vadd.f32 %v4708, %v4785
        %v4809 = vadd.f32 %v4710, %v4789
        %v4810 = vadd.f32 %v4601, %v4777
        %v4811 = vadd.f32 %v4603, %v4781
        %v4812 = vadd.f32 %v4714, %v4785
        %v4813 = vadd.f32 %v4716, %v4789
        %v4814 = vadd.f32 %v4605, %v4777
        %v4815 = vadd.f32 %v4607, %v4781
        %v4816 = vadd.f32 %v4718, %v4785
        %v4817 = vadd.f32 %v4720, %v4789
        %v4818 = vadd.f32 %v4611, %v4777
        %v4819 = vadd.f32 %v4613, %v4781
        %v4820 = vadd.f32 %v4724, %v4785
        %v4821 = vadd.f32 %v4726, %v4789
        %v4822 = vadd.f32 %v4615, %v4777
        %v4823 = vadd.f32 %v4617, %v4781
        %v4824 = vadd.f32 %v4728, %v4785
        %v4825 = vadd.f32 %v4730, %v4789
        %v4826 = vadd.f32 %v4621, %v4777
        %v4827 = vadd.f32 %v4623, %v4781
        %v4828 = vadd.f32 %v4734, %v4785
        %v4829 = vadd.f32 %v4736, %v4789
        %v4830 = vadd.f32 %v4625, %v4777
        %v4831 = vadd.f32 %v4627, %v4781
        %v4832 = vadd.f32 %v4738, %v4785
        %v4833 = vadd.f32 %v4740, %v4789
        %v4834 = vadd.f32 %v4631, %v4777
        %v4835 = vadd.f32 %v4633, %v4781
        %v4836 = vadd.f32 %v4744, %v4785
        %v4837 = vadd.f32 %v4746, %v4789
        %v4838 = vadd.f32 %v4635, %v4777
        %v4839 = vadd.f32 %v4637, %v4781
        %v4840 = vadd.f32 %v4748, %v4785
        %v4841 = vadd.f32 %v4750, %v4789
        %v4842 = vadd.f32 %v4641, %v4777
        %v4843 = vadd.f32 %v4643, %v4781
        %v4844 = vadd.f32 %v4754, %v4785
        %v4845 = vadd.f32 %v4756, %v4789
        %v4846 = vadd.f32 %v4645, %v4777
        %v4847 = vadd.f32 %v4647, %v4781
        %v4848 = vadd.f32 %v4758, %v4785
        %v4849 = vadd.f32 %v4760, %v4789
        %v4850 = vadd.f32 %v4651, %v4777
        %v4851 = vadd.f32 %v4653, %v4781
        %v4852 = vadd.f32 %v4764, %v4785
        %v4853 = vadd.f32 %v4766, %v4789
        %v4854 = vadd.f32 %v4655, %v4777
        %v4855 = vadd.f32 %v4657, %v4781
        %v4856 = vadd.f32 %v4768, %v4785
        %v4857 = vadd.f32 %v4770, %v4789
        %v4858 = vmax.f32 %v4794, 0.0
        %v4859 = vmax.f32 %v4795, 0.0
        %v4860 = vmax.f32 %v4796, 0.0
        %v4861 = vmax.f32 %v4797, 0.0
        %v4862 = vmax.f32 %v4798, 0.0
        %v4863 = vmax.f32 %v4799, 0.0
        %v4864 = vmax.f32 %v4800, 0.0
        %v4865 = vmax.f32 %v4801, 0.0
        %v4866 = vmax.f32 %v4802, 0.0
        %v4867 = vmax.f32 %v4803, 0.0
        %v4868 = vmax.f32 %v4804, 0.0
        %v4869 = vmax.f32 %v4805, 0.0
        %v4870 = vmax.f32 %v4806, 0.0
        %v4871 = vmax.f32 %v4807, 0.0
        %v4872 = vmax.f32 %v4808, 0.0
        %v4873 = vmax.f32 %v4809, 0.0
        %v4874 = vmax.f32 %v4810, 0.0
        %v4875 = vmax.f32 %v4811, 0.0
        %v4876 = vmax.f32 %v4812, 0.0
        %v4877 = vmax.f32 %v4813, 0.0
        %v4878 = vmax.f32 %v4814, 0.0
        %v4879 = vmax.f32 %v4815, 0.0
        %v4880 = vmax.f32 %v4816, 0.0
        %v4881 = vmax.f32 %v4817, 0.0
        %v4882 = vmax.f32 %v4818, 0.0
        %v4883 = vmax.f32 %v4819, 0.0
        %v4884 = vmax.f32 %v4820, 0.0
        %v4885 = vmax.f32 %v4821, 0.0
        %v4886 = vmax.f32 %v4822, 0.0
        %v4887 = vmax.f32 %v4823, 0.0
        %v4888 = vmax.f32 %v4824, 0.0
        %v4889 = vmax.f32 %v4825, 0.0
        %v4890 = vmax.f32 %v4826, 0.0
        %v4891 = vmax.f32 %v4827, 0.0
        %v4892 = vmax.f32 %v4828, 0.0
        %v4893 = vmax.f32 %v4829, 0.0
        %v4894 = vmax.f32 %v4830, 0.0
        %v4895 = vmax.f32 %v4831, 0.0
        %v4896 = vmax.f32 %v4832, 0.0
        %v4897 = vmax.f32 %v4833, 0.0
        %v4898 = vmax.f32 %v4834, 0.0
        %v4899 = vmax.f32 %v4835, 0.0
        %v4900 = vmax.f32 %v4836, 0.0
        %v4901 = vmax.f32 %v4837, 0.0
        %v4902 = vmax.f32 %v4838, 0.0
        %v4903 = vmax.f32 %v4839, 0.0
        %v4904 = vmax.f32 %v4840, 0.0
        %v4905 = vmax.f32 %v4841, 0.0
        %v4906 = vmax.f32 %v4842, 0.0
        %v4907 = vmax.f32 %v4843, 0.0
        %v4908 = vmax.f32 %v4844, 0.0
        %v4909 = vmax.f32 %v4845, 0.0
        %v4910 = vmax.f32 %v4846, 0.0
        %v4911 = vmax.f32 %v4847, 0.0
        %v4912 = vmax.f32 %v4848, 0.0
        %v4913 = vmax.f32 %v4849, 0.0
        %v4914 = vmax.f32 %v4850, 0.0
        %v4915 = vmax.f32 %v4851, 0.0
        %v4916 = vmax.f32 %v4852, 0.0
        %v4917 = vmax.f32 %v4853, 0.0
        %v4918 = vmax.f32 %v4854, 0.0
        %v4919 = vmax.f32 %v4855, 0.0
        %v4920 = vmax.f32 %v4856, 0.0
        %v4921 = vmax.f32 %v4857, 0.0
        %v4922 = vpack.c.bf16 %v4862, %v4858
        %v4923 = vpack.c.bf16 %v4863, %v4859
        %v4924 = vpack.c.bf16 %v4864, %v4860
        %v4925 = vpack.c.bf16 %v4865, %v4861
        %v4926 = vpack.c.bf16 %v4870, %v4866
        %v4927 = vpack.c.bf16 %v4871, %v4867
        %v4928 = vpack.c.bf16 %v4872, %v4868
        %v4929 = vpack.c.bf16 %v4873, %v4869
        %v4930 = vpack.c.bf16 %v4878, %v4874
        %v4931 = vpack.c.bf16 %v4879, %v4875
        %v4932 = vpack.c.bf16 %v4880, %v4876
        %v4933 = vpack.c.bf16 %v4881, %v4877
        %v4934 = vpack.c.bf16 %v4886, %v4882
        %v4935 = vpack.c.bf16 %v4887, %v4883
        %v4936 = vpack.c.bf16 %v4888, %v4884
        %v4937 = vpack.c.bf16 %v4889, %v4885
        %v4938 = vpack.c.bf16 %v4894, %v4890
        %v4939 = vpack.c.bf16 %v4895, %v4891
        %v4940 = vpack.c.bf16 %v4896, %v4892
        %v4941 = vpack.c.bf16 %v4897, %v4893
        %v4942 = vpack.c.bf16 %v4902, %v4898
        %v4943 = vpack.c.bf16 %v4903, %v4899
        %v4944 = vpack.c.bf16 %v4904, %v4900
        %v4945 = vpack.c.bf16 %v4905, %v4901
        %v4946 = vpack.c.bf16 %v4910, %v4906
        %v4947 = vpack.c.bf16 %v4911, %v4907
        %v4948 = vpack.c.bf16 %v4912, %v4908
        %v4949 = vpack.c.bf16 %v4913, %v4909
        %v4950 = vpack.c.bf16 %v4918, %v4914
        %v4951 = vpack.c.bf16 %v4919, %v4915
        %v4952 = vpack.c.bf16 %v4920, %v4916
        %v4953 = vpack.c.bf16 %v4921, %v4917
        %v4954 = vld [vmem:[%s6] sm:$0xf]
        %v4955 = vld [vmem:[%s6 + $0x4] sm:$0xf]
        %v4956 = vld [vmem:[%s6 + $0x8] sm:$0xf]
        %v4957 = vld [vmem:[%s6 + $0xc] sm:$0xf]
        %v4958 = vld [vmem:[%s6 + $0x10] sm:$0xf]
        %v4959 = vld [vmem:[%s6 + $0x14] sm:$0xf]
        %v4960 = vld [vmem:[%s6 + $0x18] sm:$0xf]
        %v4961 = vld [vmem:[%s6 + $0x1c] sm:$0xf]
        %v4962 = vld [vmem:[%s6 + $0x20] sm:$0xf]
        %v4963 = vld [vmem:[%s6 + $0x24] sm:$0xf]
        %v4964 = vld [vmem:[%s6 + $0x28] sm:$0xf]
        %v4965 = vld [vmem:[%s6 + $0x2c] sm:$0xf]
        %v4966 = vld [vmem:[%s6 + $0x30] sm:$0xf]
        %v4967 = vld [vmem:[%s6 + $0x34] sm:$0xf]
        %v4968 = vld [vmem:[%s6 + $0x38] sm:$0xf]
        %v4969 = vld [vmem:[%s6 + $0x3c] sm:$0xf]
        %v4970 = vld [vmem:[%s6 + $0x40] sm:$0xf]
        %v4971 = vld [vmem:[%s6 + $0x44] sm:$0xf]
        %v4972 = vld [vmem:[%s6 + $0x48] sm:$0xf]
        %v4973 = vld [vmem:[%s6 + $0x4c] sm:$0xf]
        %v4974 = vld [vmem:[%s6 + $0x50] sm:$0xf]
        %v4975 = vld [vmem:[%s6 + $0x54] sm:$0xf]
        %v4976 = vld [vmem:[%s6 + $0x58] sm:$0xf]
        %v4977 = vld [vmem:[%s6 + $0x5c] sm:$0xf]
        %v4978 = vld [vmem:[%s6 + $0x60] sm:$0xf]
        %v4979 = vld [vmem:[%s6 + $0x64] sm:$0xf]
        %v4980 = vld [vmem:[%s6 + $0x68] sm:$0xf]
        %v4981 = vld [vmem:[%s6 + $0x6c] sm:$0xf]
        %v4982 = vld [vmem:[%s6 + $0x70] sm:$0xf]
        %v4983 = vld [vmem:[%s6 + $0x74] sm:$0xf]
        %v4984 = vld [vmem:[%s6 + $0x78] sm:$0xf]
        %v4985 = vld [vmem:[%s6 + $0x7c] sm:$0xf]
        %v4986 = vld [vmem:[%s6 + $0x80] sm:$0xf]
        %v4987 = vld [vmem:[%s6 + $0x84] sm:$0xf]
        %v4988 = vld [vmem:[%s6 + $0x88] sm:$0xf]
        %v4989 = vld [vmem:[%s6 + $0x8c] sm:$0xf]
        %v4990 = vld [vmem:[%s6 + $0x90] sm:$0xf]
        %v4991 = vld [vmem:[%s6 + $0x94] sm:$0xf]
        %v4992 = vld [vmem:[%s6 + $0x98] sm:$0xf]
        %v4993 = vld [vmem:[%s6 + $0x9c] sm:$0xf]
        %v4994 = vld [vmem:[%s6 + $0xa0] sm:$0xf]
        %v4995 = vld [vmem:[%s6 + $0xa4] sm:$0xf]
        %v4996 = vld [vmem:[%s6 + $0xa8] sm:$0xf]
        %v4997 = vld [vmem:[%s6 + $0xac] sm:$0xf]
        %v4998 = vld [vmem:[%s6 + $0xb0] sm:$0xf]
        %v4999 = vld [vmem:[%s6 + $0xb4] sm:$0xf]
        %v5000 = vld [vmem:[%s6 + $0xb8] sm:$0xf]
        %v5001 = vld [vmem:[%s6 + $0xbc] sm:$0xf]
        %v5002 = vld [vmem:[%s6 + $0xc0] sm:$0xf]
        %v5003 = vld [vmem:[%s6 + $0xc4] sm:$0xf]
        %v5004 = vld [vmem:[%s6 + $0xc8] sm:$0xf]
        %v5005 = vld [vmem:[%s6 + $0xcc] sm:$0xf]
        %v5006 = vld [vmem:[%s6 + $0xd0] sm:$0xf]
        %v5007 = vld [vmem:[%s6 + $0xd4] sm:$0xf]
        %v5008 = vld [vmem:[%s6 + $0xd8] sm:$0xf]
        %v5009 = vld [vmem:[%s6 + $0xdc] sm:$0xf]
        %v5010 = vld [vmem:[%s6 + $0xe0] sm:$0xf]
        %v5011 = vld [vmem:[%s6 + $0xe4] sm:$0xf]
        %v5012 = vld [vmem:[%s6 + $0xe8] sm:$0xf]
        %v5013 = vld [vmem:[%s6 + $0xec] sm:$0xf]
        %v5014 = vld [vmem:[%s6 + $0xf0] sm:$0xf]
        %v5015 = vld [vmem:[%s6 + $0xf4] sm:$0xf]
        %v5016 = vld [vmem:[%s6 + $0xf8] sm:$0xf]
        %v5017 = vld [vmem:[%s6 + $0xfc] sm:$0xf]
        %v5018 = vld [vmem:[%s7] sm:$0x1]
        %v5020 = vlaneseq
        %v5021 = vshrl.u32 %v5020, 7
        %v5022 = vsub.s32 0, %v5021
        %v5023 = vrot.slane %v5018, %v5022
        %v5089 = vunpack.c.l.b16 %v4954
        %v5090 = vunpack.c.l.b16 %v4955
        %v5091 = vunpack.c.l.b16 %v4956
        %v5092 = vunpack.c.l.b16 %v4957
        %v5093 = vunpack.c.l.b16 %v4958
        %v5094 = vunpack.c.l.b16 %v4959
        %v5095 = vunpack.c.l.b16 %v4960
        %v5096 = vunpack.c.l.b16 %v4961
        %v5097 = vunpack.c.l.b16 %v4962
        %v5098 = vunpack.c.l.b16 %v4963
        %v5099 = vunpack.c.l.b16 %v4964
        %v5100 = vunpack.c.l.b16 %v4965
        %v5101 = vunpack.c.l.b16 %v4966
        %v5102 = vunpack.c.l.b16 %v4967
        %v5103 = vunpack.c.l.b16 %v4968
        %v5104 = vunpack.c.l.b16 %v4969
        %v5105 = vunpack.c.l.b16 %v4970
        %v5106 = vunpack.c.l.b16 %v4971
        %v5107 = vunpack.c.l.b16 %v4972
        %v5108 = vunpack.c.l.b16 %v4973
        %v5109 = vunpack.c.l.b16 %v4974
        %v5110 = vunpack.c.l.b16 %v4975
        %v5111 = vunpack.c.l.b16 %v4976
        %v5112 = vunpack.c.l.b16 %v4977
        %v5113 = vunpack.c.l.b16 %v4978
        %v5114 = vunpack.c.l.b16 %v4979
        %v5115 = vunpack.c.l.b16 %v4980
        %v5116 = vunpack.c.l.b16 %v4981
        %v5117 = vunpack.c.l.b16 %v4982
        %v5118 = vunpack.c.l.b16 %v4983
        %v5119 = vunpack.c.l.b16 %v4984
        %v5120 = vunpack.c.l.b16 %v4985
        %v5121 = vunpack.c.l.b16 %v4986
        %v5122 = vunpack.c.l.b16 %v4987
        %v5123 = vunpack.c.l.b16 %v4988
        %v5124 = vunpack.c.l.b16 %v4989
        %v5125 = vunpack.c.l.b16 %v4990
        %v5126 = vunpack.c.l.b16 %v4991
        %v5127 = vunpack.c.l.b16 %v4992
        %v5128 = vunpack.c.l.b16 %v4993
        %v5129 = vunpack.c.l.b16 %v4994
        %v5130 = vunpack.c.l.b16 %v4995
        %v5131 = vunpack.c.l.b16 %v4996
        %v5132 = vunpack.c.l.b16 %v4997
        %v5133 = vunpack.c.l.b16 %v4998
        %v5134 = vunpack.c.l.b16 %v4999
        %v5135 = vunpack.c.l.b16 %v5000
        %v5136 = vunpack.c.l.b16 %v5001
        %v5137 = vunpack.c.l.b16 %v5002
        %v5138 = vunpack.c.l.b16 %v5003
        %v5139 = vunpack.c.l.b16 %v5004
        %v5140 = vunpack.c.l.b16 %v5005
        %v5141 = vunpack.c.l.b16 %v5006
        %v5142 = vunpack.c.l.b16 %v5007
        %v5143 = vunpack.c.l.b16 %v5008
        %v5144 = vunpack.c.l.b16 %v5009
        %v5145 = vunpack.c.l.b16 %v5010
        %v5146 = vunpack.c.l.b16 %v5011
        %v5147 = vunpack.c.l.b16 %v5012
        %v5148 = vunpack.c.l.b16 %v5013
        %v5149 = vunpack.c.l.b16 %v5014
        %v5150 = vunpack.c.l.b16 %v5015
        %v5151 = vunpack.c.l.b16 %v5016
        %v5152 = vunpack.c.l.b16 %v5017
        %v5153 = vpack.c.b16 %v5090, %v5089
        %v5154 = vpack.c.b16 %v5092, %v5091
        %v5155 = vpack.c.b16 %v5094, %v5093
        %v5156 = vpack.c.b16 %v5096, %v5095
        %v5157 = vpack.c.b16 %v5098, %v5097
        %v5158 = vpack.c.b16 %v5100, %v5099
        %v5159 = vpack.c.b16 %v5102, %v5101
        %v5160 = vpack.c.b16 %v5104, %v5103
        %v5161 = vpack.c.b16 %v5106, %v5105
        %v5162 = vpack.c.b16 %v5108, %v5107
        %v5163 = vpack.c.b16 %v5110, %v5109
        %v5164 = vpack.c.b16 %v5112, %v5111
        %v5165 = vpack.c.b16 %v5114, %v5113
        %v5166 = vpack.c.b16 %v5116, %v5115
        %v5167 = vpack.c.b16 %v5118, %v5117
        %v5168 = vpack.c.b16 %v5120, %v5119
        %v5169 = vpack.c.b16 %v5122, %v5121
        %v5170 = vpack.c.b16 %v5124, %v5123
        %v5171 = vpack.c.b16 %v5126, %v5125
        %v5172 = vpack.c.b16 %v5128, %v5127
        %v5173 = vpack.c.b16 %v5130, %v5129
        %v5174 = vpack.c.b16 %v5132, %v5131
        %v5175 = vpack.c.b16 %v5134, %v5133
        %v5176 = vpack.c.b16 %v5136, %v5135
        %v5177 = vpack.c.b16 %v5138, %v5137
        %v5178 = vpack.c.b16 %v5140, %v5139
        %v5179 = vpack.c.b16 %v5142, %v5141
        %v5180 = vpack.c.b16 %v5144, %v5143
        %v5181 = vpack.c.b16 %v5146, %v5145
        %v5182 = vpack.c.b16 %v5148, %v5147
        %v5183 = vpack.c.b16 %v5150, %v5149
        %v5184 = vpack.c.b16 %v5152, %v5151
        %5217 = vmatprep.subr.bf16.mxu0 0
        %5218 = vmatpush1.bf16.msra.mxu0 %v5160
        %5219 = vmatprep.subr.bf16.mxu0 0
        %5220 = vmatpush1.bf16.msra.mxu0 %v5159
        %5221 = vmatprep.subr.bf16.mxu0 0
        %5222 = vmatpush1.bf16.msra.mxu0 %v5158
        %5223 = vmatprep.subr.bf16.mxu0 0
        %5224 = vmatpush1.bf16.msra.mxu0 %v5157
        %5225 = vmatprep.subr.bf16.mxu0 0
        %5226 = vmatpush1.bf16.msra.mxu0 %v5156
        %5227 = vmatprep.subr.bf16.mxu0 0
        %5228 = vmatpush1.bf16.msra.mxu0 %v5155
        %5229 = vmatprep.subr.bf16.mxu0 0
        %5230 = vmatpush1.bf16.msra.mxu0 %v5154
        %5231 = vmatprep.subr.bf16.mxu0 0
        %5232 = vmatpush1.bf16.msra.mxu0 %v5153
        %5233 = vmatprep.subr.bf16.mxu0 0
        %5234 = vmatpush2.bf16.msra.mxu0 %v5168
        %5235 = vmatprep.subr.bf16.mxu0 0
        %5236 = vmatpush2.bf16.msra.mxu0 %v5167
        %5237 = vmatprep.subr.bf16.mxu0 0
        %5238 = vmatpush2.bf16.msra.mxu0 %v5166
        %5239 = vmatprep.subr.bf16.mxu0 0
        %5240 = vmatpush2.bf16.msra.mxu0 %v5165
        %5241 = vmatprep.subr.bf16.mxu0 0
        %5242 = vmatpush2.bf16.msra.mxu0 %v5164
        %5243 = vmatprep.subr.bf16.mxu0 0
        %5244 = vmatpush2.bf16.msra.mxu0 %v5163
        %5245 = vmatprep.subr.bf16.mxu0 0
        %5246 = vmatpush2.bf16.msra.mxu0 %v5162
        %5247 = vmatprep.subr.bf16.mxu0 0
        %5248 = vmatpush2.bf16.msra.mxu0 %v5161
        %5249 = vmatprep.mubr.bf16.mxu0 %v4923
        %5250 = vmatmul.mubr.bf16.gmra.mxu0 %v4922
        %v5251 = vpop.f32.mrf.mxu0
        %v5252 = vadd.f32 %v5023, %v5251
        %v5253 = vpop.f32.mrf.mxu0
        %v5254 = vpop.f32.mrf.mxu0
        %v5255 = vadd.f32 %v5023, %v5254
        %v5256 = vpop.f32.mrf.mxu0
        %5257 = vmatprep.mubr.bf16.mxu0 %v4927
        %5258 = vmatmul.mubr.bf16.gmra.mxu0 %v4926
        %v5259 = vpop.f32.mrf.mxu0
        %v5260 = vadd.f32 %v5023, %v5259
        %v5261 = vpop.f32.mrf.mxu0
        %v5262 = vpop.f32.mrf.mxu0
        %v5263 = vadd.f32 %v5023, %v5262
        %v5264 = vpop.f32.mrf.mxu0
        %5265 = vmatprep.mubr.bf16.mxu0 %v4931
        %5266 = vmatmul.mubr.bf16.gmra.mxu0 %v4930
        %v5267 = vpop.f32.mrf.mxu0
        %v5268 = vadd.f32 %v5023, %v5267
        %v5269 = vpop.f32.mrf.mxu0
        %v5270 = vpop.f32.mrf.mxu0
        %v5271 = vadd.f32 %v5023, %v5270
        %v5272 = vpop.f32.mrf.mxu0
        %5273 = vmatprep.mubr.bf16.mxu0 %v4935
        %5274 = vmatmul.mubr.bf16.gmra.mxu0 %v4934
        %v5275 = vpop.f32.mrf.mxu0
        %v5276 = vadd.f32 %v5023, %v5275
        %v5277 = vpop.f32.mrf.mxu0
        %v5278 = vpop.f32.mrf.mxu0
        %v5279 = vadd.f32 %v5023, %v5278
        %v5280 = vpop.f32.mrf.mxu0
        %5281 = vmatprep.mubr.bf16.mxu0 %v4939
        %5282 = vmatmul.mubr.bf16.gmra.mxu0 %v4938
        %v5283 = vpop.f32.mrf.mxu0
        %v5284 = vadd.f32 %v5023, %v5283
        %v5285 = vpop.f32.mrf.mxu0
        %v5286 = vpop.f32.mrf.mxu0
        %v5287 = vadd.f32 %v5023, %v5286
        %v5288 = vpop.f32.mrf.mxu0
        %5289 = vmatprep.mubr.bf16.mxu0 %v4943
        %5290 = vmatmul.mubr.bf16.gmra.mxu0 %v4942
        %v5291 = vpop.f32.mrf.mxu0
        %v5292 = vadd.f32 %v5023, %v5291
        %v5293 = vpop.f32.mrf.mxu0
        %v5294 = vpop.f32.mrf.mxu0
        %v5295 = vadd.f32 %v5023, %v5294
        %v5296 = vpop.f32.mrf.mxu0
        %5297 = vmatprep.mubr.bf16.mxu0 %v4947
        %5298 = vmatmul.mubr.bf16.gmra.mxu0 %v4946
        %v5299 = vpop.f32.mrf.mxu0
        %v5300 = vadd.f32 %v5023, %v5299
        %v5301 = vpop.f32.mrf.mxu0
        %v5302 = vpop.f32.mrf.mxu0
        %v5303 = vadd.f32 %v5023, %v5302
        %v5304 = vpop.f32.mrf.mxu0
        %5305 = vmatprep.mubr.bf16.mxu0 %v4951
        %5306 = vmatmul.mubr.bf16.gmra.mxu0 %v4950
        %v5307 = vpop.f32.mrf.mxu0
        %v5308 = vadd.f32 %v5023, %v5307
        %v5309 = vpop.f32.mrf.mxu0
        %v5310 = vpop.f32.mrf.mxu0
        %v5311 = vadd.f32 %v5023, %v5310
        %v5312 = vpop.f32.mrf.mxu0
        %5313 = vdwg.mxu0
        %5314 = vmatprep.subr.bf16.mxu0 0
        %5315 = vmatpush1.bf16.msra.mxu0 %v5176
        %5316 = vmatprep.subr.bf16.mxu0 0
        %5317 = vmatpush1.bf16.msra.mxu0 %v5175
        %5318 = vmatprep.subr.bf16.mxu0 0
        %5319 = vmatpush1.bf16.msra.mxu0 %v5174
        %5320 = vmatprep.subr.bf16.mxu0 0
        %5321 = vmatpush1.bf16.msra.mxu0 %v5173
        %5322 = vmatprep.subr.bf16.mxu0 0
        %5323 = vmatpush1.bf16.msra.mxu0 %v5172
        %5324 = vmatprep.subr.bf16.mxu0 0
        %5325 = vmatpush1.bf16.msra.mxu0 %v5171
        %5326 = vmatprep.subr.bf16.mxu0 0
        %5327 = vmatpush1.bf16.msra.mxu0 %v5170
        %5328 = vmatprep.subr.bf16.mxu0 0
        %5329 = vmatpush1.bf16.msra.mxu0 %v5169
        %5330 = vmatprep.subr.bf16.mxu0 0
        %5331 = vmatpush2.bf16.msra.mxu0 %v5184
        %5332 = vmatprep.subr.bf16.mxu0 0
        %5333 = vmatpush2.bf16.msra.mxu0 %v5183
        %5334 = vmatprep.subr.bf16.mxu0 0
        %5335 = vmatpush2.bf16.msra.mxu0 %v5182
        %5336 = vmatprep.subr.bf16.mxu0 0
        %5337 = vmatpush2.bf16.msra.mxu0 %v5181
        %5338 = vmatprep.subr.bf16.mxu0 0
        %5339 = vmatpush2.bf16.msra.mxu0 %v5180
        %5340 = vmatprep.subr.bf16.mxu0 0
        %5341 = vmatpush2.bf16.msra.mxu0 %v5179
        %5342 = vmatprep.subr.bf16.mxu0 0
        %5343 = vmatpush2.bf16.msra.mxu0 %v5178
        %5344 = vmatprep.subr.bf16.mxu0 0
        %5345 = vmatpush2.bf16.msra.mxu0 %v5177
        %5346 = vmatprep.mubr.bf16.mxu0 %v4925
        %5347 = vmatmul.mubr.bf16.gmra.mxu0 %v4924
        %v5348 = vpop.f32.mrf.mxu0
        %v5349 = vadd.f32 %v5252, %v5348
        %v5350 = vpop.f32.mrf.mxu0
        %v5351 = vpop.f32.mrf.mxu0
        %v5352 = vadd.f32 %v5255, %v5351
        %v5353 = vpop.f32.mrf.mxu0
        %5354 = vmatprep.mubr.bf16.mxu0 %v4929
        %5355 = vmatmul.mubr.bf16.gmra.mxu0 %v4928
        %v5356 = vpop.f32.mrf.mxu0
        %v5357 = vadd.f32 %v5260, %v5356
        %v5358 = vpop.f32.mrf.mxu0
        %v5359 = vpop.f32.mrf.mxu0
        %v5360 = vadd.f32 %v5263, %v5359
        %v5361 = vpop.f32.mrf.mxu0
        %5362 = vmatprep.mubr.bf16.mxu0 %v4933
        %5363 = vmatmul.mubr.bf16.gmra.mxu0 %v4932
        %v5364 = vpop.f32.mrf.mxu0
        %v5365 = vadd.f32 %v5268, %v5364
        %v5366 = vpop.f32.mrf.mxu0
        %v5367 = vpop.f32.mrf.mxu0
        %v5368 = vadd.f32 %v5271, %v5367
        %v5369 = vpop.f32.mrf.mxu0
        %5370 = vmatprep.mubr.bf16.mxu0 %v4937
        %5371 = vmatmul.mubr.bf16.gmra.mxu0 %v4936
        %v5372 = vpop.f32.mrf.mxu0
        %v5373 = vadd.f32 %v5276, %v5372
        %v5374 = vpop.f32.mrf.mxu0
        %v5375 = vpop.f32.mrf.mxu0
        %v5376 = vadd.f32 %v5279, %v5375
        %v5377 = vpop.f32.mrf.mxu0
        %5378 = vmatprep.mubr.bf16.mxu0 %v4941
        %5379 = vmatmul.mubr.bf16.gmra.mxu0 %v4940
        %v5380 = vpop.f32.mrf.mxu0
        %v5381 = vadd.f32 %v5284, %v5380
        %v5382 = vpop.f32.mrf.mxu0
        %v5383 = vpop.f32.mrf.mxu0
        %v5384 = vadd.f32 %v5287, %v5383
        %v5385 = vpop.f32.mrf.mxu0
        %5386 = vmatprep.mubr.bf16.mxu0 %v4945
        %5387 = vmatmul.mubr.bf16.gmra.mxu0 %v4944
        %v5388 = vpop.f32.mrf.mxu0
        %v5389 = vadd.f32 %v5292, %v5388
        %v5390 = vpop.f32.mrf.mxu0
        %v5391 = vpop.f32.mrf.mxu0
        %v5392 = vadd.f32 %v5295, %v5391
        %v5393 = vpop.f32.mrf.mxu0
        %5394 = vmatprep.mubr.bf16.mxu0 %v4949
        %5395 = vmatmul.mubr.bf16.gmra.mxu0 %v4948
        %v5396 = vpop.f32.mrf.mxu0
        %v5397 = vadd.f32 %v5300, %v5396
        %v5398 = vpop.f32.mrf.mxu0
        %v5399 = vpop.f32.mrf.mxu0
        %v5400 = vadd.f32 %v5303, %v5399
        %v5401 = vpop.f32.mrf.mxu0
        %5402 = vmatprep.mubr.bf16.mxu0 %v4953
        %5403 = vmatmul.mubr.bf16.gmra.mxu0 %v4952
        %v5404 = vpop.f32.mrf.mxu0
        %v5405 = vadd.f32 %v5308, %v5404
        %v5406 = vpop.f32.mrf.mxu0
        %v5407 = vpop.f32.mrf.mxu0
        %v5408 = vadd.f32 %v5311, %v5407
        %v5409 = vpop.f32.mrf.mxu0
        %5410 = vdwg.mxu0
        %5411 = vst [vmem:[%s329] sm:$0xff] %v5349
        %5412 = vst [vmem:[%s329 + $0x8] sm:$0xff] %v5352
        %5413 = vst [vmem:[%s329 + $0x10] sm:$0xff] %v5357
        %5414 = vst [vmem:[%s329 + $0x18] sm:$0xff] %v5360
        %5415 = vst [vmem:[%s329 + $0x20] sm:$0xff] %v5365
        %5416 = vst [vmem:[%s329 + $0x28] sm:$0xff] %v5368
        %5417 = vst [vmem:[%s329 + $0x30] sm:$0xff] %v5373
        %5418 = vst [vmem:[%s329 + $0x38] sm:$0xff] %v5376
        %5419 = vst [vmem:[%s329 + $0x40] sm:$0xff] %v5381
        %5420 = vst [vmem:[%s329 + $0x48] sm:$0xff] %v5384
        %5421 = vst [vmem:[%s329 + $0x50] sm:$0xff] %v5389
        %5422 = vst [vmem:[%s329 + $0x58] sm:$0xff] %v5392
        %5423 = vst [vmem:[%s329 + $0x60] sm:$0xff] %v5397
        %5424 = vst [vmem:[%s329 + $0x68] sm:$0xff] %v5400
        %5425 = vst [vmem:[%s329 + $0x70] sm:$0xff] %v5405
        %5426 = vst [vmem:[%s329 + $0x78] sm:$0xff] %v5408
        %s5427 = sand.u32 %s205, 1
        %s5428 = scalar_lea.sflag [#allocation4], %s5427
        %s5429 = sand.u32 %s205, 1
        %s5430 = smul.addr %s5429, 128
        %s5431 = scalar_lea.vmem [#allocation7], %s5430
        // Predicated region
        $region61: #{tpu_custom_call.1} parent=51 // pred_check
          %p5432 = pneg %p215
        $region62: #{tpu_custom_call.1} parent=51 // pred_check_branch
          %5434 = sbr.rel (%p5432) target = $region64
        $region63: #{tpu_custom_call.1} parent=51 // pred_region
          %s5435 = smul.u32 16, %s24
          %s5437 = ssub.s32 2048, 2048
          %5438 = vsyncadd %s5428, %s5437
          %s5439 = smul.addr %s5435, 128
          %s5440 = scalar_lea.hbm %s8, %s5439
          %s5441 = sshll.u32 %s5431, 4
          %s5442 = int_to_ptr.vmem [resolvable:$true] %s5441
          %5447 = dma.vmem_to_hbm [thread:$0]  %s5442, 2048, %s5440, %s5428, 128, 128, 8
        $region64: #{tpu_custom_call.1} parent=51 // pred_fallthru
          _
      $region52: #{tpu_custom_call.1} parent=5 // pred_fallthru
        _
      %p5448 = scmp.le.s32.totalorder 2, %s19
      // Predicated region
      $region65: #{tpu_custom_call.1} parent=5 // pred_check
        %p5449 = pneg %p5448
      $region66: #{tpu_custom_call.1} parent=5 // pred_check_branch
        %5451 = sbr.rel (%p5449) target = $region68
      $region67: #{tpu_custom_call.1} parent=5 // pred_region
        %s5452 = ssub.s32 %s19, 2
        // Predicated region
        $region69: #{tpu_custom_call.1} parent=67 // pred_check
          %p5453 = pneg %p221
        $region70: #{tpu_custom_call.1} parent=67 // pred_check_branch
          %5455 = sbr.rel (%p5453) target = $region72
        $region71: #{tpu_custom_call.1} parent=67 // pred_region
          %s5456 = sand.u32 %s206, 1
          %s5457 = scalar_lea.sflag [#allocation4], %s5456
          %s5458 = sand.u32 %s206, 1
          %s5459 = smul.addr %s5458, 128
          %s5460 = scalar_lea.vmem [#allocation7], %s5459
          %5461 = dma.done %s5457, 2048
        $region72: #{tpu_custom_call.1} parent=67 // pred_fallthru
          _
      $region68: #{tpu_custom_call.1} parent=5 // pred_fallthru
        _
    $region6: #{tpu_custom_call.1} parent=1 // loop_footer
      %s23 = sadd.s32 1, %s19
    $region7: #{tpu_custom_call.1} parent=1 // loop_footer_branch
      %18 = sbr.rel target = $region3
    $region8: #{tpu_custom_call.1} parent=1 // loop_exit
      _
    %5462 = vsyncpa [#allocation3], 1
    %s5463 = scalar_lea.sflag [#allocation3], 1
    %5464 = vsyncpa %s5463, 1
    %5465 = vsyncpa [#allocation6], 1
    %5466 = vsyncpa [#allocation4], 1
    %s5467 = scalar_lea.sflag [#allocation4], 1
    %5468 = vsyncpa %s5467, 1

</llo_original>
